<compile_context>
chip_gen: v6e
topology: v6e:2x2x1
jax: 0.10.0
libtpu: 0.0.40
codegen_flags: <defaults>
</compile_context>

<pallas_src>
import math
from functools import partial

import jax
import jax.numpy as jnp
from jax import lax
from jax.experimental import pallas as pl
from jax.experimental.pallas import tpu as pltpu

# ----------------------------- model config (small) -----------------------------
EMB = 32
NHEAD = 4
HEAD_DIM = EMB // NHEAD
FFN = 64
NUM_ENC = 2
NUM_DEC = 2
SRC_VOCAB = 50
TRG_VOCAB = 60
VPAD = 64               # vocab padded to a lane-friendlier width (padded cols masked)
MAXLEN = 64
NEG_INF = -1e9          # stand-in for float('-inf') in masks (numerically safe)
LN_EPS = 1e-5
_TRANS_B = (((1,), (1,)), ((), ()))   # contract last dims (q @ k^T without explicit .T)


def _layer_norm_2d(y, gamma, beta):
    """LayerNorm over the last dim of a 2D f32 array (stats in f32)."""
    mu = jnp.mean(y, axis=-1, keepdims=True)
    var = jnp.mean(jnp.square(y - mu), axis=-1, keepdims=True)
    return (y - mu) * lax.rsqrt(var + LN_EPS) * gamma + beta


# ----------------------------- fused attention sub-layer -------------------------
def _attn_sublayer_kernel(x_ref, kv_ref, bias_ref, wq_ref, wk_ref, wv_ref,
                          bq_ref, bk_ref, bv_ref, wo_ref, bo_ref, g_ref, be_ref,
                          o_ref, *, scale):
    # One batch element per grid step; all heads handled inside the kernel.
    x = x_ref[0]                       # (Sq, E) f32  (residual + query source)
    kv = kv_ref[0]                     # (Sk, E) f32  (key/value source)
    bias = bias_ref[0]                 # (Sq, Sk) f32 additive mask bias
    xb = x.astype(jnp.bfloat16)
    kvb = kv.astype(jnp.bfloat16)

    Sq, E = x.shape
    attn_out = jnp.zeros((Sq, E), jnp.float32)
    for h in range(NHEAD):             # static unrolled head loop; per-head weights
        q = jnp.dot(xb, wq_ref[h], preferred_element_type=jnp.float32) + bq_ref[h]
        k = jnp.dot(kvb, wk_ref[h], preferred_element_type=jnp.float32) + bk_ref[h]
        v = jnp.dot(kvb, wv_ref[h], preferred_element_type=jnp.float32) + bv_ref[h]
        # scores: q @ k^T via trans-B dot_general (no explicit transpose)
        s = lax.dot_general(q, k, _TRANS_B, preferred_element_type=jnp.float32)
        s = s * scale + bias
        m = jnp.max(s, axis=-1, keepdims=True)
        p = jnp.exp(s - m)
        denom = jnp.sum(p, axis=-1, keepdims=True)
        p = p * pl.reciprocal(denom, approx=True)
        ctx = jnp.dot(p, v, preferred_element_type=jnp.float32)       # (Sq, Dh)
        # per-head slice of the output projection, accumulated in f32
        attn_out = attn_out + jnp.dot(ctx.astype(jnp.bfloat16), wo_ref[h],
                                      preferred_element_type=jnp.float32)
    attn_out = attn_out + bo_ref[...]
    y = x + attn_out                                                  # residual
    o_ref[0] = _layer_norm_2d(y, g_ref[...], be_ref[...])             # post-LN


def attn_sublayer(x, kv, bias, p):
    B, Sq, E = x.shape
    Sk = kv.shape[1]
    return pl.pallas_call(
        partial(_attn_sublayer_kernel, scale=1.0 / math.sqrt(HEAD_DIM)),
        out_shape=jax.ShapeDtypeStruct((B, Sq, E), jnp.float32),
        grid=(B,),
        in_specs=[
            pl.BlockSpec((1, Sq, E), lambda b: (b, 0, 0)),
            pl.BlockSpec((1, Sk, E), lambda b: (b, 0, 0)),
            pl.BlockSpec((1, Sq, Sk), lambda b: (b, 0, 0)),
            pl.BlockSpec((NHEAD, E, HEAD_DIM), lambda b: (0, 0, 0)),   # wq
            pl.BlockSpec((NHEAD, E, HEAD_DIM), lambda b: (0, 0, 0)),   # wk
            pl.BlockSpec((NHEAD, E, HEAD_DIM), lambda b: (0, 0, 0)),   # wv
            pl.BlockSpec((NHEAD, 1, HEAD_DIM), lambda b: (0, 0, 0)),   # bq
            pl.BlockSpec((NHEAD, 1, HEAD_DIM), lambda b: (0, 0, 0)),   # bk
            pl.BlockSpec((NHEAD, 1, HEAD_DIM), lambda b: (0, 0, 0)),   # bv
            pl.BlockSpec((NHEAD, HEAD_DIM, E), lambda b: (0, 0, 0)),   # wo
            pl.BlockSpec((1, E), lambda b: (0, 0)),                    # bo
            pl.BlockSpec((1, E), lambda b: (0, 0)),                    # LN gamma
            pl.BlockSpec((1, E), lambda b: (0, 0)),                    # LN beta
        ],
        out_specs=pl.BlockSpec((1, Sq, E), lambda b: (b, 0, 0)),
        compiler_params=pltpu.CompilerParams(dimension_semantics=("parallel",)),
    )(x, kv, bias, p["wq"], p["wk"], p["wv"], p["bq"], p["bk"], p["bv"],
      p["wo"], p["bo"], p["g"], p["b"])


# ----------------------------- fused FFN sub-layer --------------------------------
def _ffn_sublayer_kernel(x_ref, w1_ref, b1_ref, w2_ref, b2_ref, g_ref, be_ref, o_ref):
    x = x_ref[0]                                                      # (S, E) f32
    h = jnp.dot(x.astype(jnp.bfloat16), w1_ref[...],
                preferred_element_type=jnp.float32) + b1_ref[...]
    h = jnp.maximum(h, 0.0)                                           # ReLU
    y = jnp.dot(h.astype(jnp.bfloat16), w2_ref[...],
                preferred_element_type=jnp.float32) + b2_ref[...]
    y = x + y                                                         # residual
    o_ref[0] = _layer_norm_2d(y, g_ref[...], be_ref[...])             # post-LN


def ffn_sublayer(x, p):
    B, S, E = x.shape
    return pl.pallas_call(
        _ffn_sublayer_kernel,
        out_shape=jax.ShapeDtypeStruct((B, S, E), jnp.float32),
        grid=(B,),
        in_specs=[
            pl.BlockSpec((1, S, E), lambda b: (b, 0, 0)),
            pl.BlockSpec((E, FFN), lambda b: (0, 0)),
            pl.BlockSpec((1, FFN), lambda b: (0, 0)),
            pl.BlockSpec((FFN, E), lambda b: (0, 0)),
            pl.BlockSpec((1, E), lambda b: (0, 0)),
            pl.BlockSpec((1, E), lambda b: (0, 0)),
            pl.BlockSpec((1, E), lambda b: (0, 0)),
        ],
        out_specs=pl.BlockSpec((1, S, E), lambda b: (b, 0, 0)),
        compiler_params=pltpu.CompilerParams(dimension_semantics=("parallel",)),
    )(x, p["w1"], p["b1"], p["w2"], p["b2"], p["g"], p["b"])


# ----------------------------- stand-alone LayerNorm (final enc/dec norms) -------
def _ln_kernel(x_ref, g_ref, b_ref, o_ref):
    o_ref[0] = _layer_norm_2d(x_ref[0], g_ref[...], b_ref[...])


def layer_norm(x, gamma, beta):
    B, S, E = x.shape
    return pl.pallas_call(
        _ln_kernel,
        out_shape=jax.ShapeDtypeStruct((B, S, E), jnp.float32),
        grid=(B,),
        in_specs=[
            pl.BlockSpec((1, S, E), lambda b: (b, 0, 0)),
            pl.BlockSpec((1, E), lambda b: (0, 0)),
            pl.BlockSpec((1, E), lambda b: (0, 0)),
        ],
        out_specs=pl.BlockSpec((1, S, E), lambda b: (b, 0, 0)),
        compiler_params=pltpu.CompilerParams(dimension_semantics=("parallel",)),
    )(x, gamma, beta)


# ----------------------------- fused generator + log_softmax ---------------------
def _gen_logsoftmax_kernel(x_ref, w_ref, b_ref, o_ref):
    x = x_ref[0]                                                      # (S, E) f32
    logits = jnp.dot(x.astype(jnp.bfloat16), w_ref[...],
                     preferred_element_type=jnp.float32) + b_ref[...]  # (S, VPAD)
    m = jnp.max(logits, axis=-1, keepdims=True)
    s = logits - m
    o_ref[0] = s - jnp.log(jnp.sum(jnp.exp(s), axis=-1, keepdims=True))


def generator_log_softmax(x, w, b):
    B, S, E = x.shape
    V = w.shape[1]
    return pl.pallas_call(
        _gen_logsoftmax_kernel,
        out_shape=jax.ShapeDtypeStruct((B, S, V), jnp.float32),
        grid=(B,),
        in_specs=[
            pl.BlockSpec((1, S, E), lambda b: (b, 0, 0)),
            pl.BlockSpec((E, V), lambda b: (0, 0)),
            pl.BlockSpec((1, V), lambda b: (0, 0)),
        ],
        out_specs=pl.BlockSpec((1, S, V), lambda b: (b, 0, 0)),
        compiler_params=pltpu.CompilerParams(dimension_semantics=("parallel",)),
    )(x, w, b)


# ----------------------------- parameters ----------------------------------------
def positional_encoding_table(maxlen, emb):
    den = jnp.exp(-jnp.arange(0, emb, 2, dtype=jnp.float32) * math.log(10000.0) / emb)
    pos = jnp.arange(maxlen, dtype=jnp.float32)[:, None]
    pe = jnp.zeros((maxlen, emb), jnp.float32)
    pe = pe.at[:, 0::2].set(jnp.sin(pos * den))
    pe = pe.at[:, 1::2].set(jnp.cos(pos * den))
    return pe


def init_params(key):
    """Weights are created directly in kernel-ready layout:
       per-head (in, out) matrices, bf16 for MXU operands, f32 biases / LN params."""
    keys = iter(jax.random.split(key, 64))

    def nrm(shape, dtype=jnp.float32):
        return (0.02 * jax.random.normal(next(keys), shape, jnp.float32)).astype(dtype)

    def attn_params():
        return dict(
            wq=nrm((NHEAD, EMB, HEAD_DIM), jnp.bfloat16),
            wk=nrm((NHEAD, EMB, HEAD_DIM), jnp.bfloat16),
            wv=nrm((NHEAD, EMB, HEAD_DIM), jnp.bfloat16),
            bq=jnp.zeros((NHEAD, 1, HEAD_DIM), jnp.float32),
            bk=jnp.zeros((NHEAD, 1, HEAD_DIM), jnp.float32),
            bv=jnp.zeros((NHEAD, 1, HEAD_DIM), jnp.float32),
            wo=nrm((NHEAD, HEAD_DIM, EMB), jnp.bfloat16),
            bo=jnp.zeros((1, EMB), jnp.float32),
            g=jnp.ones((1, EMB), jnp.float32),    # LayerNorm after this sub-layer
            b=jnp.zeros((1, EMB), jnp.float32),
        )

    def ffn_params():
        return dict(
            w1=nrm((EMB, FFN), jnp.bfloat16), b1=jnp.zeros((1, FFN), jnp.float32),
            w2=nrm((FFN, EMB), jnp.bfloat16), b2=jnp.zeros((1, EMB), jnp.float32),
            g=jnp.ones((1, EMB), jnp.float32), b=jnp.zeros((1, EMB), jnp.float32),
        )

    # generator: pre-transposed, vocab padded to VPAD lanes; padded bias = NEG_INF
    gen_w = jnp.zeros((EMB, VPAD), jnp.float32)
    gen_w = gen_w.at[:, :TRG_VOCAB].set(
        0.02 * jax.random.normal(next(keys), (EMB, TRG_VOCAB), jnp.float32))
    gen_b = jnp.full((1, VPAD), jnp.float32(NEG_INF)).at[:, :TRG_VOCAB].set(0.0)

    return dict(
        src_emb=nrm((SRC_VOCAB, EMB)),
        trg_emb=nrm((TRG_VOCAB, EMB)),
        gen_w=gen_w.astype(jnp.bfloat16), gen_b=gen_b,
        enc_layers=[dict(attn=attn_params(), ffn=ffn_params()) for _ in range(NUM_ENC)],
        dec_layers=[dict(self_attn=attn_params(), cross_attn=attn_params(),
                         ffn=ffn_params()) for _ in range(NUM_DEC)],
        enc_norm_g=jnp.ones((1, EMB), jnp.float32), enc_norm_b=jnp.zeros((1, EMB), jnp.float32),
        dec_norm_g=jnp.ones((1, EMB), jnp.float32), dec_norm_b=jnp.zeros((1, EMB), jnp.float32),
        pos_embedding=positional_encoding_table(MAXLEN, EMB),
    )


# ----------------------------- full forward --------------------------------------
def forward(params, src, trg, src_padding_mask, trg_padding_mask):
    B, Ss = src.shape
    St = trg.shape[1]

    # TODO(synk): token-embedding gather + positional-encoding add stay in XLA glue.
    src_e = jnp.take(params["src_emb"], src, axis=0) * math.sqrt(EMB) \
        + params["pos_embedding"][None, :Ss]
    trg_e = jnp.take(params["trg_emb"], trg, axis=0) * math.sqrt(EMB) \
        + params["pos_embedding"][None, :St]

    # Additive attention biases (small (B,Sq,Sk) tensors, no per-head broadcast).
    src_kpm = jnp.where(src_padding_mask, jnp.float32(NEG_INF), jnp.float32(0.0))
    trg_kpm = jnp.where(trg_padding_mask, jnp.float32(NEG_INF), jnp.float32(0.0))
    causal = jnp.where(jnp.triu(jnp.ones((St, St), bool), k=1),
                       jnp.float32(NEG_INF), jnp.float32(0.0))
    enc_bias = jnp.broadcast_to(src_kpm[:, None, :], (B, Ss, Ss))
    dec_self_bias = causal[None, :, :] + trg_kpm[:, None, :]
    dec_cross_bias = jnp.broadcast_to(src_kpm[:, None, :], (B, St, Ss))

    x = src_e
    for lp in params["enc_layers"]:
        x = attn_sublayer(x, x, enc_bias, lp["attn"])     # self-attn + residual + LN
        x = ffn_sublayer(x, lp["ffn"])                    # FFN + residual + LN
    memory = layer_norm(x, params["enc_norm_g"], params["enc_norm_b"])

    y = trg_e
    for lp in params["dec_layers"]:
        y = attn_sublayer(y, y, dec_self_bias, lp["self_attn"])
        y = attn_sublayer(y, memory, dec_cross_bias, lp["cross_attn"])
        y = ffn_sublayer(y, lp["ffn"])
    y = layer_norm(y, params["dec_norm_g"], params["dec_norm_b"])

    logp = generator_log_softmax(y, params["gen_w"], params["gen_b"])   # (B, St, VPAD)
    return logp[..., :TRG_VOCAB]                                        # drop padded vocab


# ----------------------------- main ----------------------------------------------
if __name__ == "__main__":
    key = jax.random.PRNGKey(0)
    pkey, skey, tkey = jax.random.split(key, 3)
    params = init_params(pkey)

    B, S_SRC, S_TRG = 2, 8, 8
    src = jax.random.randint(skey, (B, S_SRC), 0, SRC_VOCAB, dtype=jnp.int32)
    trg = jax.random.randint(tkey, (B, S_TRG), 0, TRG_VOCAB, dtype=jnp.int32)
    # True = padded position (never all-padded per row)
    src_padding_mask = jnp.array([[False] * 8, [False] * 6 + [True] * 2])
    trg_padding_mask = jnp.array([[False] * 7 + [True], [False] * 8])

    out = jax.jit(forward)(params, src, trg, src_padding_mask, trg_padding_mask)
    out = jax.block_until_ready(out)

    assert out.shape == (B, S_TRG, TRG_VOCAB), out.shape
    assert bool(jnp.all(jnp.isfinite(out)))
    # log_softmax rows must sum to ~1 in prob space
    assert bool(jnp.allclose(jnp.sum(jnp.exp(out), axis=-1), 1.0, atol=1e-4))
    print("KERNEL_OK")
</pallas_src>

<mosaic_0001>
module attributes {stable_mosaic.version = 11 : i64} {
  func.func @_attn_sublayer_kernel(%arg0: i32, %arg1: memref<1x8x32xf32, #tpu.memory_space<vmem>>, %arg2: memref<1x8x32xf32, #tpu.memory_space<vmem>>, %arg3: memref<1x8x8xf32, #tpu.memory_space<vmem>>, %arg4: memref<4x32x8xbf16, #tpu.memory_space<vmem>>, %arg5: memref<4x32x8xbf16, #tpu.memory_space<vmem>>, %arg6: memref<4x32x8xbf16, #tpu.memory_space<vmem>>, %arg7: memref<4x1x8xf32, #tpu.memory_space<vmem>>, %arg8: memref<4x1x8xf32, #tpu.memory_space<vmem>>, %arg9: memref<4x1x8xf32, #tpu.memory_space<vmem>>, %arg10: memref<4x8x32xbf16, #tpu.memory_space<vmem>>, %arg11: memref<1x32xf32, #tpu.memory_space<vmem>>, %arg12: memref<1x32xf32, #tpu.memory_space<vmem>>, %arg13: memref<1x32xf32, #tpu.memory_space<vmem>>, %arg14: memref<1x8x32xf32, #tpu.memory_space<vmem>>) attributes {dimension_semantics = [#tpu.dimension_semantics<parallel>], iteration_bounds = array<i64: 2>, scalar_prefetch = 0 : i64, scratch_operands = 0 : i64, tpu.core_type = #tpu.core_type<tc>, window_params = [{transform_indices = @transform_0, window_bounds = array<i64: 1, 8, 32>}, {transform_indices = @transform_1, window_bounds = array<i64: 1, 8, 32>}, {transform_indices = @transform_2, window_bounds = array<i64: 1, 8, 8>}, {pipeline_mode = #tpu.pipeline_mode<synchronous>, transform_indices = @transform_3, window_bounds = array<i64: 4, 32, 8>}, {pipeline_mode = #tpu.pipeline_mode<synchronous>, transform_indices = @transform_4, window_bounds = array<i64: 4, 32, 8>}, {pipeline_mode = #tpu.pipeline_mode<synchronous>, transform_indices = @transform_5, window_bounds = array<i64: 4, 32, 8>}, {pipeline_mode = #tpu.pipeline_mode<synchronous>, transform_indices = @transform_6, window_bounds = array<i64: 4, 1, 8>}, {pipeline_mode = #tpu.pipeline_mode<synchronous>, transform_indices = @transform_7, window_bounds = array<i64: 4, 1, 8>}, {pipeline_mode = #tpu.pipeline_mode<synchronous>, transform_indices = @transform_8, window_bounds = array<i64: 4, 1, 8>}, {pipeline_mode = #tpu.pipeline_mode<synchronous>, transform_indices = @transform_9, window_bounds = array<i64: 4, 8, 32>}, {pipeline_mode = #tpu.pipeline_mode<synchronous>, transform_indices = @transform_10, window_bounds = array<i64: 1, 32>}, {pipeline_mode = #tpu.pipeline_mode<synchronous>, transform_indices = @transform_11, window_bounds = array<i64: 1, 32>}, {pipeline_mode = #tpu.pipeline_mode<synchronous>, transform_indices = @transform_12, window_bounds = array<i64: 1, 32>}, {transform_indices = @transform_13, window_bounds = array<i64: 1, 8, 32>}]} {
    %c0 = arith.constant 0 : index
    %c0_0 = arith.constant 0 : index
    %c0_1 = arith.constant 0 : index
    %0 = vector.load %arg1[%c0, %c0_0, %c0_1] : memref<1x8x32xf32, #tpu.memory_space<vmem>>, vector<1x8x32xf32>
    %1 = vector.shape_cast %0 : vector<1x8x32xf32> to vector<8x32xf32>
    %c0_2 = arith.constant 0 : index
    %c0_3 = arith.constant 0 : index
    %c0_4 = arith.constant 0 : index
    %2 = vector.load %arg2[%c0_2, %c0_3, %c0_4] : memref<1x8x32xf32, #tpu.memory_space<vmem>>, vector<1x8x32xf32>
    %3 = vector.shape_cast %2 : vector<1x8x32xf32> to vector<8x32xf32>
    %c0_5 = arith.constant 0 : index
    %c0_6 = arith.constant 0 : index
    %c0_7 = arith.constant 0 : index
    %4 = vector.load %arg3[%c0_5, %c0_6, %c0_7] : memref<1x8x8xf32, #tpu.memory_space<vmem>>, vector<1x8x8xf32>
    %5 = vector.shape_cast %4 : vector<1x8x8xf32> to vector<8x8xf32>
    %6 = arith.truncf %1 : vector<8x32xf32> to vector<8x32xbf16>
    %7 = arith.truncf %3 : vector<8x32xf32> to vector<8x32xbf16>
    %cst = arith.constant 0.000000e+00 : f32
    %8 = vector.broadcast %cst : f32 to vector<8x32xf32>
    %c0_8 = arith.constant 0 : index
    %c0_9 = arith.constant 0 : index
    %c0_10 = arith.constant 0 : index
    %9 = vector.load %arg4[%c0_8, %c0_9, %c0_10] : memref<4x32x8xbf16, #tpu.memory_space<vmem>>, vector<1x32x8xbf16>
    %10 = vector.shape_cast %9 : vector<1x32x8xbf16> to vector<32x8xbf16>
    %cst_11 = arith.constant dense<0.000000e+00> : vector<8x8xf32>
    %11 = tpu.matmul %6, %10, %cst_11 {dimension_numbers = #tpu.dot_dimension_numbers<[1], [0], [0], [1], [0, 0, 1, 1], [], []>} : vector<8x32xbf16>, vector<32x8xbf16>, vector<8x8xf32> -> vector<8x8xf32>
    %c0_12 = arith.constant 0 : index
    %c0_13 = arith.constant 0 : index
    %c0_14 = arith.constant 0 : index
    %12 = vector.load %arg7[%c0_12, %c0_13, %c0_14] : memref<4x1x8xf32, #tpu.memory_space<vmem>>, vector<1x1x8xf32>
    %13 = vector.shape_cast %12 : vector<1x1x8xf32> to vector<1x8xf32>
    %14 = vector.broadcast %13 : vector<1x8xf32> to vector<8x8xf32>
    %15 = arith.addf %11, %14 : vector<8x8xf32>
    %c0_15 = arith.constant 0 : index
    %c0_16 = arith.constant 0 : index
    %c0_17 = arith.constant 0 : index
    %16 = vector.load %arg5[%c0_15, %c0_16, %c0_17] : memref<4x32x8xbf16, #tpu.memory_space<vmem>>, vector<1x32x8xbf16>
    %17 = vector.shape_cast %16 : vector<1x32x8xbf16> to vector<32x8xbf16>
    %cst_18 = arith.constant dense<0.000000e+00> : vector<8x8xf32>
    %18 = tpu.matmul %7, %17, %cst_18 {dimension_numbers = #tpu.dot_dimension_numbers<[1], [0], [0], [1], [0, 0, 1, 1], [], []>} : vector<8x32xbf16>, vector<32x8xbf16>, vector<8x8xf32> -> vector<8x8xf32>
    %c0_19 = arith.constant 0 : index
    %c0_20 = arith.constant 0 : index
    %c0_21 = arith.constant 0 : index
    %19 = vector.load %arg8[%c0_19, %c0_20, %c0_21] : memref<4x1x8xf32, #tpu.memory_space<vmem>>, vector<1x1x8xf32>
    %20 = vector.shape_cast %19 : vector<1x1x8xf32> to vector<1x8xf32>
    %21 = vector.broadcast %20 : vector<1x8xf32> to vector<8x8xf32>
    %22 = arith.addf %18, %21 : vector<8x8xf32>
    %c0_22 = arith.constant 0 : index
    %c0_23 = arith.constant 0 : index
    %c0_24 = arith.constant 0 : index
    %23 = vector.load %arg6[%c0_22, %c0_23, %c0_24] : memref<4x32x8xbf16, #tpu.memory_space<vmem>>, vector<1x32x8xbf16>
    %24 = vector.shape_cast %23 : vector<1x32x8xbf16> to vector<32x8xbf16>
    %cst_25 = arith.constant dense<0.000000e+00> : vector<8x8xf32>
    %25 = tpu.matmul %7, %24, %cst_25 {dimension_numbers = #tpu.dot_dimension_numbers<[1], [0], [0], [1], [0, 0, 1, 1], [], []>} : vector<8x32xbf16>, vector<32x8xbf16>, vector<8x8xf32> -> vector<8x8xf32>
    %c0_26 = arith.constant 0 : index
    %c0_27 = arith.constant 0 : index
    %c0_28 = arith.constant 0 : index
    %26 = vector.load %arg9[%c0_26, %c0_27, %c0_28] : memref<4x1x8xf32, #tpu.memory_space<vmem>>, vector<1x1x8xf32>
    %27 = vector.shape_cast %26 : vector<1x1x8xf32> to vector<1x8xf32>
    %28 = vector.broadcast %27 : vector<1x8xf32> to vector<8x8xf32>
    %29 = arith.addf %25, %28 : vector<8x8xf32>
    %cst_29 = arith.constant dense<0.000000e+00> : vector<8x8xf32>
    %30 = tpu.matmul %15, %22, %cst_29 {dimension_numbers = #tpu.dot_dimension_numbers<[1], [1], [0], [0], [0, 0, 1, 0], [], []>} : vector<8x8xf32>, vector<8x8xf32>, vector<8x8xf32> -> vector<8x8xf32>
    %cst_30 = arith.constant 0.353553385 : f32
    %31 = vector.broadcast %cst_30 : f32 to vector<8x8xf32>
    %32 = arith.mulf %30, %31 : vector<8x8xf32>
    %33 = arith.addf %32, %5 : vector<8x8xf32>
    %cst_31 = arith.constant dense<0xFF800000> : vector<8xf32>
    %34 = vector.multi_reduction <maximumf>, %33, %cst_31 [1] : vector<8x8xf32> to vector<8xf32>
    %35 = vector.shape_cast %34 : vector<8xf32> to vector<8x1xf32>
    %36 = vector.broadcast %35 : vector<8x1xf32> to vector<8x8xf32>
    %37 = arith.subf %33, %36 : vector<8x8xf32>
    %38 = math.exp %37 : vector<8x8xf32>
    %cst_32 = arith.constant dense<0.000000e+00> : vector<8xf32>
    %39 = vector.multi_reduction <add>, %38, %cst_32 [1] : vector<8x8xf32> to vector<8xf32>
    %40 = vector.shape_cast %39 : vector<8xf32> to vector<8x1xf32>
    %41 = tpu.reciprocal %40 {approx = true} : vector<8x1xf32> -> vector<8x1xf32>
    %42 = vector.broadcast %41 : vector<8x1xf32> to vector<8x8xf32>
    %43 = arith.mulf %38, %42 : vector<8x8xf32>
    %cst_33 = arith.constant dense<0.000000e+00> : vector<8x8xf32>
    %44 = tpu.matmul %43, %29, %cst_33 {dimension_numbers = #tpu.dot_dimension_numbers<[1], [0], [0], [1], [0, 0, 1, 1], [], []>} : vector<8x8xf32>, vector<8x8xf32>, vector<8x8xf32> -> vector<8x8xf32>
    %45 = arith.truncf %44 : vector<8x8xf32> to vector<8x8xbf16>
    %c0_34 = arith.constant 0 : index
    %c0_35 = arith.constant 0 : index
    %c0_36 = arith.constant 0 : index
    %46 = vector.load %arg10[%c0_34, %c0_35, %c0_36] : memref<4x8x32xbf16, #tpu.memory_space<vmem>>, vector<1x8x32xbf16>
    %47 = vector.shape_cast %46 : vector<1x8x32xbf16> to vector<8x32xbf16>
    %cst_37 = arith.constant dense<0.000000e+00> : vector<8x32xf32>
    %48 = tpu.matmul %45, %47, %cst_37 {dimension_numbers = #tpu.dot_dimension_numbers<[1], [0], [0], [1], [0, 0, 1, 1], [], []>} : vector<8x8xbf16>, vector<8x32xbf16>, vector<8x32xf32> -> vector<8x32xf32>
    %49 = arith.addf %8, %48 : vector<8x32xf32>
    %c1 = arith.constant 1 : index
    %c0_38 = arith.constant 0 : index
    %c0_39 = arith.constant 0 : index
    %50 = vector.load %arg4[%c1, %c0_38, %c0_39] : memref<4x32x8xbf16, #tpu.memory_space<vmem>>, vector<1x32x8xbf16>
    %51 = vector.shape_cast %50 : vector<1x32x8xbf16> to vector<32x8xbf16>
    %cst_40 = arith.constant dense<0.000000e+00> : vector<8x8xf32>
    %52 = tpu.matmul %6, %51, %cst_40 {dimension_numbers = #tpu.dot_dimension_numbers<[1], [0], [0], [1], [0, 0, 1, 1], [], []>} : vector<8x32xbf16>, vector<32x8xbf16>, vector<8x8xf32> -> vector<8x8xf32>
    %c1_41 = arith.constant 1 : index
    %c0_42 = arith.constant 0 : index
    %c0_43 = arith.constant 0 : index
    %53 = vector.load %arg7[%c1_41, %c0_42, %c0_43] : memref<4x1x8xf32, #tpu.memory_space<vmem>>, vector<1x1x8xf32>
    %54 = vector.shape_cast %53 : vector<1x1x8xf32> to vector<1x8xf32>
    %55 = vector.broadcast %54 : vector<1x8xf32> to vector<8x8xf32>
    %56 = arith.addf %52, %55 : vector<8x8xf32>
    %c1_44 = arith.constant 1 : index
    %c0_45 = arith.constant 0 : index
    %c0_46 = arith.constant 0 : index
    %57 = vector.load %arg5[%c1_44, %c0_45, %c0_46] : memref<4x32x8xbf16, #tpu.memory_space<vmem>>, vector<1x32x8xbf16>
    %58 = vector.shape_cast %57 : vector<1x32x8xbf16> to vector<32x8xbf16>
    %cst_47 = arith.constant dense<0.000000e+00> : vector<8x8xf32>
    %59 = tpu.matmul %7, %58, %cst_47 {dimension_numbers = #tpu.dot_dimension_numbers<[1], [0], [0], [1], [0, 0, 1, 1], [], []>} : vector<8x32xbf16>, vector<32x8xbf16>, vector<8x8xf32> -> vector<8x8xf32>
    %c1_48 = arith.constant 1 : index
    %c0_49 = arith.constant 0 : index
    %c0_50 = arith.constant 0 : index
    %60 = vector.load %arg8[%c1_48, %c0_49, %c0_50] : memref<4x1x8xf32, #tpu.memory_space<vmem>>, vector<1x1x8xf32>
    %61 = vector.shape_cast %60 : vector<1x1x8xf32> to vector<1x8xf32>
    %62 = vector.broadcast %61 : vector<1x8xf32> to vector<8x8xf32>
    %63 = arith.addf %59, %62 : vector<8x8xf32>
    %c1_51 = arith.constant 1 : index
    %c0_52 = arith.constant 0 : index
    %c0_53 = arith.constant 0 : index
    %64 = vector.load %arg6[%c1_51, %c0_52, %c0_53] : memref<4x32x8xbf16, #tpu.memory_space<vmem>>, vector<1x32x8xbf16>
    %65 = vector.shape_cast %64 : vector<1x32x8xbf16> to vector<32x8xbf16>
    %cst_54 = arith.constant dense<0.000000e+00> : vector<8x8xf32>
    %66 = tpu.matmul %7, %65, %cst_54 {dimension_numbers = #tpu.dot_dimension_numbers<[1], [0], [0], [1], [0, 0, 1, 1], [], []>} : vector<8x32xbf16>, vector<32x8xbf16>, vector<8x8xf32> -> vector<8x8xf32>
    %c1_55 = arith.constant 1 : index
    %c0_56 = arith.constant 0 : index
    %c0_57 = arith.constant 0 : index
    %67 = vector.load %arg9[%c1_55, %c0_56, %c0_57] : memref<4x1x8xf32, #tpu.memory_space<vmem>>, vector<1x1x8xf32>
    %68 = vector.shape_cast %67 : vector<1x1x8xf32> to vector<1x8xf32>
    %69 = vector.broadcast %68 : vector<1x8xf32> to vector<8x8xf32>
    %70 = arith.addf %66, %69 : vector<8x8xf32>
    %cst_58 = arith.constant dense<0.000000e+00> : vector<8x8xf32>
    %71 = tpu.matmul %56, %63, %cst_58 {dimension_numbers = #tpu.dot_dimension_numbers<[1], [1], [0], [0], [0, 0, 1, 0], [], []>} : vector<8x8xf32>, vector<8x8xf32>, vector<8x8xf32> -> vector<8x8xf32>
    %cst_59 = arith.constant 0.353553385 : f32
    %72 = vector.broadcast %cst_59 : f32 to vector<8x8xf32>
    %73 = arith.mulf %71, %72 : vector<8x8xf32>
    %74 = arith.addf %73, %5 : vector<8x8xf32>
    %cst_60 = arith.constant dense<0xFF800000> : vector<8xf32>
    %75 = vector.multi_reduction <maximumf>, %74, %cst_60 [1] : vector<8x8xf32> to vector<8xf32>
    %76 = vector.shape_cast %75 : vector<8xf32> to vector<8x1xf32>
    %77 = vector.broadcast %76 : vector<8x1xf32> to vector<8x8xf32>
    %78 = arith.subf %74, %77 : vector<8x8xf32>
    %79 = math.exp %78 : vector<8x8xf32>
    %cst_61 = arith.constant dense<0.000000e+00> : vector<8xf32>
    %80 = vector.multi_reduction <add>, %79, %cst_61 [1] : vector<8x8xf32> to vector<8xf32>
    %81 = vector.shape_cast %80 : vector<8xf32> to vector<8x1xf32>
    %82 = tpu.reciprocal %81 {approx = true} : vector<8x1xf32> -> vector<8x1xf32>
    %83 = vector.broadcast %82 : vector<8x1xf32> to vector<8x8xf32>
    %84 = arith.mulf %79, %83 : vector<8x8xf32>
    %cst_62 = arith.constant dense<0.000000e+00> : vector<8x8xf32>
    %85 = tpu.matmul %84, %70, %cst_62 {dimension_numbers = #tpu.dot_dimension_numbers<[1], [0], [0], [1], [0, 0, 1, 1], [], []>} : vector<8x8xf32>, vector<8x8xf32>, vector<8x8xf32> -> vector<8x8xf32>
    %86 = arith.truncf %85 : vector<8x8xf32> to vector<8x8xbf16>
    %c1_63 = arith.constant 1 : index
    %c0_64 = arith.constant 0 : index
    %c0_65 = arith.constant 0 : index
    %87 = vector.load %arg10[%c1_63, %c0_64, %c0_65] : memref<4x8x32xbf16, #tpu.memory_space<vmem>>, vector<1x8x32xbf16>
    %88 = vector.shape_cast %87 : vector<1x8x32xbf16> to vector<8x32xbf16>
    %cst_66 = arith.constant dense<0.000000e+00> : vector<8x32xf32>
    %89 = tpu.matmul %86, %88, %cst_66 {dimension_numbers = #tpu.dot_dimension_numbers<[1], [0], [0], [1], [0, 0, 1, 1], [], []>} : vector<8x8xbf16>, vector<8x32xbf16>, vector<8x32xf32> -> vector<8x32xf32>
    %90 = arith.addf %49, %89 : vector<8x32xf32>
    %c2 = arith.constant 2 : index
    %c0_67 = arith.constant 0 : index
    %c0_68 = arith.constant 0 : index
    %91 = vector.load %arg4[%c2, %c0_67, %c0_68] : memref<4x32x8xbf16, #tpu.memory_space<vmem>>, vector<1x32x8xbf16>
    %92 = vector.shape_cast %91 : vector<1x32x8xbf16> to vector<32x8xbf16>
    %cst_69 = arith.constant dense<0.000000e+00> : vector<8x8xf32>
    %93 = tpu.matmul %6, %92, %cst_69 {dimension_numbers = #tpu.dot_dimension_numbers<[1], [0], [0], [1], [0, 0, 1, 1], [], []>} : vector<8x32xbf16>, vector<32x8xbf16>, vector<8x8xf32> -> vector<8x8xf32>
    %c2_70 = arith.constant 2 : index
    %c0_71 = arith.constant 0 : index
    %c0_72 = arith.constant 0 : index
    %94 = vector.load %arg7[%c2_70, %c0_71, %c0_72] : memref<4x1x8xf32, #tpu.memory_space<vmem>>, vector<1x1x8xf32>
    %95 = vector.shape_cast %94 : vector<1x1x8xf32> to vector<1x8xf32>
    %96 = vector.broadcast %95 : vector<1x8xf32> to vector<8x8xf32>
    %97 = arith.addf %93, %96 : vector<8x8xf32>
    %c2_73 = arith.constant 2 : index
    %c0_74 = arith.constant 0 : index
    %c0_75 = arith.constant 0 : index
    %98 = vector.load %arg5[%c2_73, %c0_74, %c0_75] : memref<4x32x8xbf16, #tpu.memory_space<vmem>>, vector<1x32x8xbf16>
    %99 = vector.shape_cast %98 : vector<1x32x8xbf16> to vector<32x8xbf16>
    %cst_76 = arith.constant dense<0.000000e+00> : vector<8x8xf32>
    %100 = tpu.matmul %7, %99, %cst_76 {dimension_numbers = #tpu.dot_dimension_numbers<[1], [0], [0], [1], [0, 0, 1, 1], [], []>} : vector<8x32xbf16>, vector<32x8xbf16>, vector<8x8xf32> -> vector<8x8xf32>
    %c2_77 = arith.constant 2 : index
    %c0_78 = arith.constant 0 : index
    %c0_79 = arith.constant 0 : index
    %101 = vector.load %arg8[%c2_77, %c0_78, %c0_79] : memref<4x1x8xf32, #tpu.memory_space<vmem>>, vector<1x1x8xf32>
    %102 = vector.shape_cast %101 : vector<1x1x8xf32> to vector<1x8xf32>
    %103 = vector.broadcast %102 : vector<1x8xf32> to vector<8x8xf32>
    %104 = arith.addf %100, %103 : vector<8x8xf32>
    %c2_80 = arith.constant 2 : index
    %c0_81 = arith.constant 0 : index
    %c0_82 = arith.constant 0 : index
    %105 = vector.load %arg6[%c2_80, %c0_81, %c0_82] : memref<4x32x8xbf16, #tpu.memory_space<vmem>>, vector<1x32x8xbf16>
    %106 = vector.shape_cast %105 : vector<1x32x8xbf16> to vector<32x8xbf16>
    %cst_83 = arith.constant dense<0.000000e+00> : vector<8x8xf32>
    %107 = tpu.matmul %7, %106, %cst_83 {dimension_numbers = #tpu.dot_dimension_numbers<[1], [0], [0], [1], [0, 0, 1, 1], [], []>} : vector<8x32xbf16>, vector<32x8xbf16>, vector<8x8xf32> -> vector<8x8xf32>
    %c2_84 = arith.constant 2 : index
    %c0_85 = arith.constant 0 : index
    %c0_86 = arith.constant 0 : index
    %108 = vector.load %arg9[%c2_84, %c0_85, %c0_86] : memref<4x1x8xf32, #tpu.memory_space<vmem>>, vector<1x1x8xf32>
    %109 = vector.shape_cast %108 : vector<1x1x8xf32> to vector<1x8xf32>
    %110 = vector.broadcast %109 : vector<1x8xf32> to vector<8x8xf32>
    %111 = arith.addf %107, %110 : vector<8x8xf32>
    %cst_87 = arith.constant dense<0.000000e+00> : vector<8x8xf32>
    %112 = tpu.matmul %97, %104, %cst_87 {dimension_numbers = #tpu.dot_dimension_numbers<[1], [1], [0], [0], [0, 0, 1, 0], [], []>} : vector<8x8xf32>, vector<8x8xf32>, vector<8x8xf32> -> vector<8x8xf32>
    %cst_88 = arith.constant 0.353553385 : f32
    %113 = vector.broadcast %cst_88 : f32 to vector<8x8xf32>
    %114 = arith.mulf %112, %113 : vector<8x8xf32>
    %115 = arith.addf %114, %5 : vector<8x8xf32>
    %cst_89 = arith.constant dense<0xFF800000> : vector<8xf32>
    %116 = vector.multi_reduction <maximumf>, %115, %cst_89 [1] : vector<8x8xf32> to vector<8xf32>
    %117 = vector.shape_cast %116 : vector<8xf32> to vector<8x1xf32>
    %118 = vector.broadcast %117 : vector<8x1xf32> to vector<8x8xf32>
    %119 = arith.subf %115, %118 : vector<8x8xf32>
    %120 = math.exp %119 : vector<8x8xf32>
    %cst_90 = arith.constant dense<0.000000e+00> : vector<8xf32>
    %121 = vector.multi_reduction <add>, %120, %cst_90 [1] : vector<8x8xf32> to vector<8xf32>
    %122 = vector.shape_cast %121 : vector<8xf32> to vector<8x1xf32>
    %123 = tpu.reciprocal %122 {approx = true} : vector<8x1xf32> -> vector<8x1xf32>
    %124 = vector.broadcast %123 : vector<8x1xf32> to vector<8x8xf32>
    %125 = arith.mulf %120, %124 : vector<8x8xf32>
    %cst_91 = arith.constant dense<0.000000e+00> : vector<8x8xf32>
    %126 = tpu.matmul %125, %111, %cst_91 {dimension_numbers = #tpu.dot_dimension_numbers<[1], [0], [0], [1], [0, 0, 1, 1], [], []>} : vector<8x8xf32>, vector<8x8xf32>, vector<8x8xf32> -> vector<8x8xf32>
    %127 = arith.truncf %126 : vector<8x8xf32> to vector<8x8xbf16>
    %c2_92 = arith.constant 2 : index
    %c0_93 = arith.constant 0 : index
    %c0_94 = arith.constant 0 : index
    %128 = vector.load %arg10[%c2_92, %c0_93, %c0_94] : memref<4x8x32xbf16, #tpu.memory_space<vmem>>, vector<1x8x32xbf16>
    %129 = vector.shape_cast %128 : vector<1x8x32xbf16> to vector<8x32xbf16>
    %cst_95 = arith.constant dense<0.000000e+00> : vector<8x32xf32>
    %130 = tpu.matmul %127, %129, %cst_95 {dimension_numbers = #tpu.dot_dimension_numbers<[1], [0], [0], [1], [0, 0, 1, 1], [], []>} : vector<8x8xbf16>, vector<8x32xbf16>, vector<8x32xf32> -> vector<8x32xf32>
    %131 = arith.addf %90, %130 : vector<8x32xf32>
    %c3 = arith.constant 3 : index
    %c0_96 = arith.constant 0 : index
    %c0_97 = arith.constant 0 : index
    %132 = vector.load %arg4[%c3, %c0_96, %c0_97] : memref<4x32x8xbf16, #tpu.memory_space<vmem>>, vector<1x32x8xbf16>
    %133 = vector.shape_cast %132 : vector<1x32x8xbf16> to vector<32x8xbf16>
    %cst_98 = arith.constant dense<0.000000e+00> : vector<8x8xf32>
    %134 = tpu.matmul %6, %133, %cst_98 {dimension_numbers = #tpu.dot_dimension_numbers<[1], [0], [0], [1], [0, 0, 1, 1], [], []>} : vector<8x32xbf16>, vector<32x8xbf16>, vector<8x8xf32> -> vector<8x8xf32>
    %c3_99 = arith.constant 3 : index
    %c0_100 = arith.constant 0 : index
    %c0_101 = arith.constant 0 : index
    %135 = vector.load %arg7[%c3_99, %c0_100, %c0_101] : memref<4x1x8xf32, #tpu.memory_space<vmem>>, vector<1x1x8xf32>
    %136 = vector.shape_cast %135 : vector<1x1x8xf32> to vector<1x8xf32>
    %137 = vector.broadcast %136 : vector<1x8xf32> to vector<8x8xf32>
    %138 = arith.addf %134, %137 : vector<8x8xf32>
    %c3_102 = arith.constant 3 : index
    %c0_103 = arith.constant 0 : index
    %c0_104 = arith.constant 0 : index
    %139 = vector.load %arg5[%c3_102, %c0_103, %c0_104] : memref<4x32x8xbf16, #tpu.memory_space<vmem>>, vector<1x32x8xbf16>
    %140 = vector.shape_cast %139 : vector<1x32x8xbf16> to vector<32x8xbf16>
    %cst_105 = arith.constant dense<0.000000e+00> : vector<8x8xf32>
    %141 = tpu.matmul %7, %140, %cst_105 {dimension_numbers = #tpu.dot_dimension_numbers<[1], [0], [0], [1], [0, 0, 1, 1], [], []>} : vector<8x32xbf16>, vector<32x8xbf16>, vector<8x8xf32> -> vector<8x8xf32>
    %c3_106 = arith.constant 3 : index
    %c0_107 = arith.constant 0 : index
    %c0_108 = arith.constant 0 : index
    %142 = vector.load %arg8[%c3_106, %c0_107, %c0_108] : memref<4x1x8xf32, #tpu.memory_space<vmem>>, vector<1x1x8xf32>
    %143 = vector.shape_cast %142 : vector<1x1x8xf32> to vector<1x8xf32>
    %144 = vector.broadcast %143 : vector<1x8xf32> to vector<8x8xf32>
    %145 = arith.addf %141, %144 : vector<8x8xf32>
    %c3_109 = arith.constant 3 : index
    %c0_110 = arith.constant 0 : index
    %c0_111 = arith.constant 0 : index
    %146 = vector.load %arg6[%c3_109, %c0_110, %c0_111] : memref<4x32x8xbf16, #tpu.memory_space<vmem>>, vector<1x32x8xbf16>
    %147 = vector.shape_cast %146 : vector<1x32x8xbf16> to vector<32x8xbf16>
    %cst_112 = arith.constant dense<0.000000e+00> : vector<8x8xf32>
    %148 = tpu.matmul %7, %147, %cst_112 {dimension_numbers = #tpu.dot_dimension_numbers<[1], [0], [0], [1], [0, 0, 1, 1], [], []>} : vector<8x32xbf16>, vector<32x8xbf16>, vector<8x8xf32> -> vector<8x8xf32>
    %c3_113 = arith.constant 3 : index
    %c0_114 = arith.constant 0 : index
    %c0_115 = arith.constant 0 : index
    %149 = vector.load %arg9[%c3_113, %c0_114, %c0_115] : memref<4x1x8xf32, #tpu.memory_space<vmem>>, vector<1x1x8xf32>
    %150 = vector.shape_cast %149 : vector<1x1x8xf32> to vector<1x8xf32>
    %151 = vector.broadcast %150 : vector<1x8xf32> to vector<8x8xf32>
    %152 = arith.addf %148, %151 : vector<8x8xf32>
    %cst_116 = arith.constant dense<0.000000e+00> : vector<8x8xf32>
    %153 = tpu.matmul %138, %145, %cst_116 {dimension_numbers = #tpu.dot_dimension_numbers<[1], [1], [0], [0], [0, 0, 1, 0], [], []>} : vector<8x8xf32>, vector<8x8xf32>, vector<8x8xf32> -> vector<8x8xf32>
    %cst_117 = arith.constant 0.353553385 : f32
    %154 = vector.broadcast %cst_117 : f32 to vector<8x8xf32>
    %155 = arith.mulf %153, %154 : vector<8x8xf32>
    %156 = arith.addf %155, %5 : vector<8x8xf32>
    %cst_118 = arith.constant dense<0xFF800000> : vector<8xf32>
    %157 = vector.multi_reduction <maximumf>, %156, %cst_118 [1] : vector<8x8xf32> to vector<8xf32>
    %158 = vector.shape_cast %157 : vector<8xf32> to vector<8x1xf32>
    %159 = vector.broadcast %158 : vector<8x1xf32> to vector<8x8xf32>
    %160 = arith.subf %156, %159 : vector<8x8xf32>
    %161 = math.exp %160 : vector<8x8xf32>
    %cst_119 = arith.constant dense<0.000000e+00> : vector<8xf32>
    %162 = vector.multi_reduction <add>, %161, %cst_119 [1] : vector<8x8xf32> to vector<8xf32>
    %163 = vector.shape_cast %162 : vector<8xf32> to vector<8x1xf32>
    %164 = tpu.reciprocal %163 {approx = true} : vector<8x1xf32> -> vector<8x1xf32>
    %165 = vector.broadcast %164 : vector<8x1xf32> to vector<8x8xf32>
    %166 = arith.mulf %161, %165 : vector<8x8xf32>
    %cst_120 = arith.constant dense<0.000000e+00> : vector<8x8xf32>
    %167 = tpu.matmul %166, %152, %cst_120 {dimension_numbers = #tpu.dot_dimension_numbers<[1], [0], [0], [1], [0, 0, 1, 1], [], []>} : vector<8x8xf32>, vector<8x8xf32>, vector<8x8xf32> -> vector<8x8xf32>
    %168 = arith.truncf %167 : vector<8x8xf32> to vector<8x8xbf16>
    %c3_121 = arith.constant 3 : index
    %c0_122 = arith.constant 0 : index
    %c0_123 = arith.constant 0 : index
    %169 = vector.load %arg10[%c3_121, %c0_122, %c0_123] : memref<4x8x32xbf16, #tpu.memory_space<vmem>>, vector<1x8x32xbf16>
    %170 = vector.shape_cast %169 : vector<1x8x32xbf16> to vector<8x32xbf16>
    %cst_124 = arith.constant dense<0.000000e+00> : vector<8x32xf32>
    %171 = tpu.matmul %168, %170, %cst_124 {dimension_numbers = #tpu.dot_dimension_numbers<[1], [0], [0], [1], [0, 0, 1, 1], [], []>} : vector<8x8xbf16>, vector<8x32xbf16>, vector<8x32xf32> -> vector<8x32xf32>
    %172 = arith.addf %131, %171 : vector<8x32xf32>
    %c0_125 = arith.constant 0 : index
    %c0_126 = arith.constant 0 : index
    %173 = vector.load %arg11[%c0_125, %c0_126] : memref<1x32xf32, #tpu.memory_space<vmem>>, vector<1x32xf32>
    %174 = vector.broadcast %173 : vector<1x32xf32> to vector<8x32xf32>
    %175 = arith.addf %172, %174 : vector<8x32xf32>
    %176 = arith.addf %1, %175 : vector<8x32xf32>
    %c0_127 = arith.constant 0 : index
    %c0_128 = arith.constant 0 : index
    %177 = vector.load %arg12[%c0_127, %c0_128] : memref<1x32xf32, #tpu.memory_space<vmem>>, vector<1x32xf32>
    %c0_129 = arith.constant 0 : index
    %c0_130 = arith.constant 0 : index
    %178 = vector.load %arg13[%c0_129, %c0_130] : memref<1x32xf32, #tpu.memory_space<vmem>>, vector<1x32xf32>
    %cst_131 = arith.constant dense<0.000000e+00> : vector<8xf32>
    %179 = vector.multi_reduction <add>, %176, %cst_131 [1] : vector<8x32xf32> to vector<8xf32>
    %180 = vector.shape_cast %179 : vector<8xf32> to vector<8x1xf32>
    %cst_132 = arith.constant 3.200000e+01 : f32
    %181 = vector.broadcast %cst_132 : f32 to vector<8x1xf32>
    %182 = arith.divf %180, %181 : vector<8x1xf32>
    %183 = vector.broadcast %182 : vector<8x1xf32> to vector<8x32xf32>
    %184 = arith.subf %176, %183 : vector<8x32xf32>
    %185 = arith.mulf %184, %184 : vector<8x32xf32>
    %cst_133 = arith.constant dense<0.000000e+00> : vector<8xf32>
    %186 = vector.multi_reduction <add>, %185, %cst_133 [1] : vector<8x32xf32> to vector<8xf32>
    %187 = vector.shape_cast %186 : vector<8xf32> to vector<8x1xf32>
    %cst_134 = arith.constant 3.200000e+01 : f32
    %188 = vector.broadcast %cst_134 : f32 to vector<8x1xf32>
    %189 = arith.divf %187, %188 : vector<8x1xf32>
    %190 = vector.broadcast %182 : vector<8x1xf32> to vector<8x32xf32>
    %191 = arith.subf %176, %190 : vector<8x32xf32>
    %cst_135 = arith.constant 9.99999974E-6 : f32
    %192 = vector.broadcast %cst_135 : f32 to vector<8x1xf32>
    %193 = arith.addf %189, %192 : vector<8x1xf32>
    %194 = math.rsqrt %193 : vector<8x1xf32>
    %195 = vector.broadcast %194 : vector<8x1xf32> to vector<8x32xf32>
    %196 = arith.mulf %191, %195 : vector<8x32xf32>
    %197 = vector.broadcast %177 : vector<1x32xf32> to vector<8x32xf32>
    %198 = arith.mulf %196, %197 : vector<8x32xf32>
    %199 = vector.broadcast %178 : vector<1x32xf32> to vector<8x32xf32>
    %200 = arith.addf %198, %199 : vector<8x32xf32>
    %c0_136 = arith.constant 0 : index
    %c0_137 = arith.constant 0 : index
    %c0_138 = arith.constant 0 : index
    %201 = vector.load %arg14[%c0_136, %c0_137, %c0_138] : memref<1x8x32xf32, #tpu.memory_space<vmem>>, vector<1x8x32xf32>
    %202 = vector.shape_cast %201 : vector<1x8x32xf32> to vector<8x32xf32>
    %203 = vector.shape_cast %200 : vector<8x32xf32> to vector<1x8x32xf32>
    tpu.vector_store %arg14[%c0_136, %c0_137, %c0_138], %203 {strides = array<i32>} : memref<1x8x32xf32, #tpu.memory_space<vmem>>, vector<1x8x32xf32>,
    return
  }
  func.func @transform_0(%arg0: i32) -> (i32, i32, i32) {
    %c0_i32 = arith.constant 0 : i32
    %c0_i32_0 = arith.constant 0 : i32
    %c0_i32_1 = arith.constant 0 : i32
    return %arg0, %c0_i32, %c0_i32_0 : i32, i32, i32
  }
  func.func @transform_1(%arg0: i32) -> (i32, i32, i32) {
    %c0_i32 = arith.constant 0 : i32
    %c0_i32_0 = arith.constant 0 : i32
    %c0_i32_1 = arith.constant 0 : i32
    return %arg0, %c0_i32, %c0_i32_0 : i32, i32, i32
  }
  func.func @transform_2(%arg0: i32) -> (i32, i32, i32) {
    %c0_i32 = arith.constant 0 : i32
    %c0_i32_0 = arith.constant 0 : i32
    %c0_i32_1 = arith.constant 0 : i32
    return %arg0, %c0_i32, %c0_i32_0 : i32, i32, i32
  }
  func.func @transform_3(%arg0: i32) -> (i32, i32, i32) {
    %c0_i32 = arith.constant 0 : i32
    %c0_i32_0 = arith.constant 0 : i32
    %c0_i32_1 = arith.constant 0 : i32
    %c0_i32_2 = arith.constant 0 : i32
    return %c0_i32, %c0_i32_0, %c0_i32_1 : i32, i32, i32
  }
  func.func @transform_4(%arg0: i32) -> (i32, i32, i32) {
    %c0_i32 = arith.constant 0 : i32
    %c0_i32_0 = arith.constant 0 : i32
    %c0_i32_1 = arith.constant 0 : i32
    %c0_i32_2 = arith.constant 0 : i32
    return %c0_i32, %c0_i32_0, %c0_i32_1 : i32, i32, i32
  }
  func.func @transform_5(%arg0: i32) -> (i32, i32, i32) {
    %c0_i32 = arith.constant 0 : i32
    %c0_i32_0 = arith.constant 0 : i32
    %c0_i32_1 = arith.constant 0 : i32
    %c0_i32_2 = arith.constant 0 : i32
    return %c0_i32, %c0_i32_0, %c0_i32_1 : i32, i32, i32
  }
  func.func @transform_6(%arg0: i32) -> (i32, i32, i32) {
    %c0_i32 = arith.constant 0 : i32
    %c0_i32_0 = arith.constant 0 : i32
    %c0_i32_1 = arith.constant 0 : i32
    %c0_i32_2 = arith.constant 0 : i32
    return %c0_i32, %c0_i32_0, %c0_i32_1 : i32, i32, i32
  }
  func.func @transform_7(%arg0: i32) -> (i32, i32, i32) {
    %c0_i32 = arith.constant 0 : i32
    %c0_i32_0 = arith.constant 0 : i32
    %c0_i32_1 = arith.constant 0 : i32
    %c0_i32_2 = arith.constant 0 : i32
    return %c0_i32, %c0_i32_0, %c0_i32_1 : i32, i32, i32
  }
  func.func @transform_8(%arg0: i32) -> (i32, i32, i32) {
    %c0_i32 = arith.constant 0 : i32
    %c0_i32_0 = arith.constant 0 : i32
    %c0_i32_1 = arith.constant 0 : i32
    %c0_i32_2 = arith.constant 0 : i32
    return %c0_i32, %c0_i32_0, %c0_i32_1 : i32, i32, i32
  }
  func.func @transform_9(%arg0: i32) -> (i32, i32, i32) {
    %c0_i32 = arith.constant 0 : i32
    %c0_i32_0 = arith.constant 0 : i32
    %c0_i32_1 = arith.constant 0 : i32
    %c0_i32_2 = arith.constant 0 : i32
    return %c0_i32, %c0_i32_0, %c0_i32_1 : i32, i32, i32
  }
  func.func @transform_10(%arg0: i32) -> (i32, i32) {
    %c0_i32 = arith.constant 0 : i32
    %c0_i32_0 = arith.constant 0 : i32
    %c0_i32_1 = arith.constant 0 : i32
    return %c0_i32, %c0_i32_0 : i32, i32
  }
  func.func @transform_11(%arg0: i32) -> (i32, i32) {
    %c0_i32 = arith.constant 0 : i32
    %c0_i32_0 = arith.constant 0 : i32
    %c0_i32_1 = arith.constant 0 : i32
    return %c0_i32, %c0_i32_0 : i32, i32
  }
  func.func @transform_12(%arg0: i32) -> (i32, i32) {
    %c0_i32 = arith.constant 0 : i32
    %c0_i32_0 = arith.constant 0 : i32
    %c0_i32_1 = arith.constant 0 : i32
    return %c0_i32, %c0_i32_0 : i32, i32
  }
  func.func @transform_13(%arg0: i32) -> (i32, i32, i32) {
    %c0_i32 = arith.constant 0 : i32
    %c0_i32_0 = arith.constant 0 : i32
    %c0_i32_1 = arith.constant 0 : i32
    return %arg0, %c0_i32, %c0_i32_0 : i32, i32, i32
  }
}

module attributes {stable_mosaic.version = 11 : i64} {
  func.func @_ln_kernel(%arg0: i32, %arg1: memref<1x8x32xf32, #tpu.memory_space<vmem>>, %arg2: memref<1x32xf32, #tpu.memory_space<vmem>>, %arg3: memref<1x32xf32, #tpu.memory_space<vmem>>, %arg4: memref<1x8x32xf32, #tpu.memory_space<vmem>>) attributes {dimension_semantics = [#tpu.dimension_semantics<parallel>], iteration_bounds = array<i64: 2>, scalar_prefetch = 0 : i64, scratch_operands = 0 : i64, tpu.core_type = #tpu.core_type<tc>, window_params = [{transform_indices = @transform_0, window_bounds = array<i64: 1, 8, 32>}, {pipeline_mode = #tpu.pipeline_mode<synchronous>, transform_indices = @transform_1, window_bounds = array<i64: 1, 32>}, {pipeline_mode = #tpu.pipeline_mode<synchronous>, transform_indices = @transform_2, window_bounds = array<i64: 1, 32>}, {transform_indices = @transform_3, window_bounds = array<i64: 1, 8, 32>}]} {
    %c0 = arith.constant 0 : index
    %c0_0 = arith.constant 0 : index
    %c0_1 = arith.constant 0 : index
    %0 = vector.load %arg1[%c0, %c0_0, %c0_1] : memref<1x8x32xf32, #tpu.memory_space<vmem>>, vector<1x8x32xf32>
    %1 = vector.shape_cast %0 : vector<1x8x32xf32> to vector<8x32xf32>
    %c0_2 = arith.constant 0 : index
    %c0_3 = arith.constant 0 : index
    %2 = vector.load %arg2[%c0_2, %c0_3] : memref<1x32xf32, #tpu.memory_space<vmem>>, vector<1x32xf32>
    %c0_4 = arith.constant 0 : index
    %c0_5 = arith.constant 0 : index
    %3 = vector.load %arg3[%c0_4, %c0_5] : memref<1x32xf32, #tpu.memory_space<vmem>>, vector<1x32xf32>
    %cst = arith.constant dense<0.000000e+00> : vector<8xf32>
    %4 = vector.multi_reduction <add>, %1, %cst [1] : vector<8x32xf32> to vector<8xf32>
    %5 = vector.shape_cast %4 : vector<8xf32> to vector<8x1xf32>
    %cst_6 = arith.constant 3.200000e+01 : f32
    %6 = vector.broadcast %cst_6 : f32 to vector<8x1xf32>
    %7 = arith.divf %5, %6 : vector<8x1xf32>
    %8 = vector.broadcast %7 : vector<8x1xf32> to vector<8x32xf32>
    %9 = arith.subf %1, %8 : vector<8x32xf32>
    %10 = arith.mulf %9, %9 : vector<8x32xf32>
    %cst_7 = arith.constant dense<0.000000e+00> : vector<8xf32>
    %11 = vector.multi_reduction <add>, %10, %cst_7 [1] : vector<8x32xf32> to vector<8xf32>
    %12 = vector.shape_cast %11 : vector<8xf32> to vector<8x1xf32>
    %cst_8 = arith.constant 3.200000e+01 : f32
    %13 = vector.broadcast %cst_8 : f32 to vector<8x1xf32>
    %14 = arith.divf %12, %13 : vector<8x1xf32>
    %15 = vector.broadcast %7 : vector<8x1xf32> to vector<8x32xf32>
    %16 = arith.subf %1, %15 : vector<8x32xf32>
    %cst_9 = arith.constant 9.99999974E-6 : f32
    %17 = vector.broadcast %cst_9 : f32 to vector<8x1xf32>
    %18 = arith.addf %14, %17 : vector<8x1xf32>
    %19 = math.rsqrt %18 : vector<8x1xf32>
    %20 = vector.broadcast %19 : vector<8x1xf32> to vector<8x32xf32>
    %21 = arith.mulf %16, %20 : vector<8x32xf32>
    %22 = vector.broadcast %2 : vector<1x32xf32> to vector<8x32xf32>
    %23 = arith.mulf %21, %22 : vector<8x32xf32>
    %24 = vector.broadcast %3 : vector<1x32xf32> to vector<8x32xf32>
    %25 = arith.addf %23, %24 : vector<8x32xf32>
    %c0_10 = arith.constant 0 : index
    %c0_11 = arith.constant 0 : index
    %c0_12 = arith.constant 0 : index
    %26 = vector.load %arg4[%c0_10, %c0_11, %c0_12] : memref<1x8x32xf32, #tpu.memory_space<vmem>>, vector<1x8x32xf32>
    %27 = vector.shape_cast %26 : vector<1x8x32xf32> to vector<8x32xf32>
    %28 = vector.shape_cast %25 : vector<8x32xf32> to vector<1x8x32xf32>
    tpu.vector_store %arg4[%c0_10, %c0_11, %c0_12], %28 {strides = array<i32>} : memref<1x8x32xf32, #tpu.memory_space<vmem>>, vector<1x8x32xf32>,
    return
  }
  func.func @transform_0(%arg0: i32) -> (i32, i32, i32) {
    %c0_i32 = arith.constant 0 : i32
    %c0_i32_0 = arith.constant 0 : i32
    %c0_i32_1 = arith.constant 0 : i32
    return %arg0, %c0_i32, %c0_i32_0 : i32, i32, i32
  }
  func.func @transform_1(%arg0: i32) -> (i32, i32) {
    %c0_i32 = arith.constant 0 : i32
    %c0_i32_0 = arith.constant 0 : i32
    %c0_i32_1 = arith.constant 0 : i32
    return %c0_i32, %c0_i32_0 : i32, i32
  }
  func.func @transform_2(%arg0: i32) -> (i32, i32) {
    %c0_i32 = arith.constant 0 : i32
    %c0_i32_0 = arith.constant 0 : i32
    %c0_i32_1 = arith.constant 0 : i32
    return %c0_i32, %c0_i32_0 : i32, i32
  }
  func.func @transform_3(%arg0: i32) -> (i32, i32, i32) {
    %c0_i32 = arith.constant 0 : i32
    %c0_i32_0 = arith.constant 0 : i32
    %c0_i32_1 = arith.constant 0 : i32
    return %arg0, %c0_i32, %c0_i32_0 : i32, i32, i32
  }
}

module attributes {stable_mosaic.version = 11 : i64} {
  func.func @_ffn_sublayer_kernel(%arg0: i32, %arg1: memref<1x8x32xf32, #tpu.memory_space<vmem>>, %arg2: memref<32x64xbf16, #tpu.memory_space<vmem>>, %arg3: memref<1x64xf32, #tpu.memory_space<vmem>>, %arg4: memref<64x32xbf16, #tpu.memory_space<vmem>>, %arg5: memref<1x32xf32, #tpu.memory_space<vmem>>, %arg6: memref<1x32xf32, #tpu.memory_space<vmem>>, %arg7: memref<1x32xf32, #tpu.memory_space<vmem>>, %arg8: memref<1x8x32xf32, #tpu.memory_space<vmem>>) attributes {dimension_semantics = [#tpu.dimension_semantics<parallel>], iteration_bounds = array<i64: 2>, scalar_prefetch = 0 : i64, scratch_operands = 0 : i64, tpu.core_type = #tpu.core_type<tc>, window_params = [{transform_indices = @transform_0, window_bounds = array<i64: 1, 8, 32>}, {pipeline_mode = #tpu.pipeline_mode<synchronous>, transform_indices = @transform_1, window_bounds = array<i64: 32, 64>}, {pipeline_mode = #tpu.pipeline_mode<synchronous>, transform_indices = @transform_2, window_bounds = array<i64: 1, 64>}, {pipeline_mode = #tpu.pipeline_mode<synchronous>, transform_indices = @transform_3, window_bounds = array<i64: 64, 32>}, {pipeline_mode = #tpu.pipeline_mode<synchronous>, transform_indices = @transform_4, window_bounds = array<i64: 1, 32>}, {pipeline_mode = #tpu.pipeline_mode<synchronous>, transform_indices = @transform_5, window_bounds = array<i64: 1, 32>}, {pipeline_mode = #tpu.pipeline_mode<synchronous>, transform_indices = @transform_6, window_bounds = array<i64: 1, 32>}, {transform_indices = @transform_7, window_bounds = array<i64: 1, 8, 32>}]} {
    %c0 = arith.constant 0 : index
    %c0_0 = arith.constant 0 : index
    %c0_1 = arith.constant 0 : index
    %0 = vector.load %arg1[%c0, %c0_0, %c0_1] : memref<1x8x32xf32, #tpu.memory_space<vmem>>, vector<1x8x32xf32>
    %1 = vector.shape_cast %0 : vector<1x8x32xf32> to vector<8x32xf32>
    %2 = arith.truncf %1 : vector<8x32xf32> to vector<8x32xbf16>
    %c0_2 = arith.constant 0 : index
    %c0_3 = arith.constant 0 : index
    %3 = vector.load %arg2[%c0_2, %c0_3] : memref<32x64xbf16, #tpu.memory_space<vmem>>, vector<32x64xbf16>
    %cst = arith.constant dense<0.000000e+00> : vector<8x64xf32>
    %4 = tpu.matmul %2, %3, %cst {dimension_numbers = #tpu.dot_dimension_numbers<[1], [0], [0], [1], [0, 0, 1, 1], [], []>} : vector<8x32xbf16>, vector<32x64xbf16>, vector<8x64xf32> -> vector<8x64xf32>
    %c0_4 = arith.constant 0 : index
    %c0_5 = arith.constant 0 : index
    %5 = vector.load %arg3[%c0_4, %c0_5] : memref<1x64xf32, #tpu.memory_space<vmem>>, vector<1x64xf32>
    %6 = vector.broadcast %5 : vector<1x64xf32> to vector<8x64xf32>
    %7 = arith.addf %4, %6 : vector<8x64xf32>
    %cst_6 = arith.constant 0.000000e+00 : f32
    %8 = vector.broadcast %cst_6 : f32 to vector<8x64xf32>
    %9 = arith.maximumf %7, %8 : vector<8x64xf32>
    %10 = arith.truncf %9 : vector<8x64xf32> to vector<8x64xbf16>
    %c0_7 = arith.constant 0 : index
    %c0_8 = arith.constant 0 : index
    %11 = vector.load %arg4[%c0_7, %c0_8] : memref<64x32xbf16, #tpu.memory_space<vmem>>, vector<64x32xbf16>
    %cst_9 = arith.constant dense<0.000000e+00> : vector<8x32xf32>
    %12 = tpu.matmul %10, %11, %cst_9 {dimension_numbers = #tpu.dot_dimension_numbers<[1], [0], [0], [1], [0, 0, 1, 1], [], []>} : vector<8x64xbf16>, vector<64x32xbf16>, vector<8x32xf32> -> vector<8x32xf32>
    %c0_10 = arith.constant 0 : index
    %c0_11 = arith.constant 0 : index
    %13 = vector.load %arg5[%c0_10, %c0_11] : memref<1x32xf32, #tpu.memory_space<vmem>>, vector<1x32xf32>
    %14 = vector.broadcast %13 : vector<1x32xf32> to vector<8x32xf32>
    %15 = arith.addf %12, %14 : vector<8x32xf32>
    %16 = arith.addf %1, %15 : vector<8x32xf32>
    %c0_12 = arith.constant 0 : index
    %c0_13 = arith.constant 0 : index
    %17 = vector.load %arg6[%c0_12, %c0_13] : memref<1x32xf32, #tpu.memory_space<vmem>>, vector<1x32xf32>
    %c0_14 = arith.constant 0 : index
    %c0_15 = arith.constant 0 : index
    %18 = vector.load %arg7[%c0_14, %c0_15] : memref<1x32xf32, #tpu.memory_space<vmem>>, vector<1x32xf32>
    %cst_16 = arith.constant dense<0.000000e+00> : vector<8xf32>
    %19 = vector.multi_reduction <add>, %16, %cst_16 [1] : vector<8x32xf32> to vector<8xf32>
    %20 = vector.shape_cast %19 : vector<8xf32> to vector<8x1xf32>
    %cst_17 = arith.constant 3.200000e+01 : f32
    %21 = vector.broadcast %cst_17 : f32 to vector<8x1xf32>
    %22 = arith.divf %20, %21 : vector<8x1xf32>
    %23 = vector.broadcast %22 : vector<8x1xf32> to vector<8x32xf32>
    %24 = arith.subf %16, %23 : vector<8x32xf32>
    %25 = arith.mulf %24, %24 : vector<8x32xf32>
    %cst_18 = arith.constant dense<0.000000e+00> : vector<8xf32>
    %26 = vector.multi_reduction <add>, %25, %cst_18 [1] : vector<8x32xf32> to vector<8xf32>
    %27 = vector.shape_cast %26 : vector<8xf32> to vector<8x1xf32>
    %cst_19 = arith.constant 3.200000e+01 : f32
    %28 = vector.broadcast %cst_19 : f32 to vector<8x1xf32>
    %29 = arith.divf %27, %28 : vector<8x1xf32>
    %30 = vector.broadcast %22 : vector<8x1xf32> to vector<8x32xf32>
    %31 = arith.subf %16, %30 : vector<8x32xf32>
    %cst_20 = arith.constant 9.99999974E-6 : f32
    %32 = vector.broadcast %cst_20 : f32 to vector<8x1xf32>
    %33 = arith.addf %29, %32 : vector<8x1xf32>
    %34 = math.rsqrt %33 : vector<8x1xf32>
    %35 = vector.broadcast %34 : vector<8x1xf32> to vector<8x32xf32>
    %36 = arith.mulf %31, %35 : vector<8x32xf32>
    %37 = vector.broadcast %17 : vector<1x32xf32> to vector<8x32xf32>
    %38 = arith.mulf %36, %37 : vector<8x32xf32>
    %39 = vector.broadcast %18 : vector<1x32xf32> to vector<8x32xf32>
    %40 = arith.addf %38, %39 : vector<8x32xf32>
    %c0_21 = arith.constant 0 : index
    %c0_22 = arith.constant 0 : index
    %c0_23 = arith.constant 0 : index
    %41 = vector.load %arg8[%c0_21, %c0_22, %c0_23] : memref<1x8x32xf32, #tpu.memory_space<vmem>>, vector<1x8x32xf32>
    %42 = vector.shape_cast %41 : vector<1x8x32xf32> to vector<8x32xf32>
    %43 = vector.shape_cast %40 : vector<8x32xf32> to vector<1x8x32xf32>
    tpu.vector_store %arg8[%c0_21, %c0_22, %c0_23], %43 {strides = array<i32>} : memref<1x8x32xf32, #tpu.memory_space<vmem>>, vector<1x8x32xf32>,
    return
  }
  func.func @transform_0(%arg0: i32) -> (i32, i32, i32) {
    %c0_i32 = arith.constant 0 : i32
    %c0_i32_0 = arith.constant 0 : i32
    %c0_i32_1 = arith.constant 0 : i32
    return %arg0, %c0_i32, %c0_i32_0 : i32, i32, i32
  }
  func.func @transform_1(%arg0: i32) -> (i32, i32) {
    %c0_i32 = arith.constant 0 : i32
    %c0_i32_0 = arith.constant 0 : i32
    %c0_i32_1 = arith.constant 0 : i32
    return %c0_i32, %c0_i32_0 : i32, i32
  }
  func.func @transform_2(%arg0: i32) -> (i32, i32) {
    %c0_i32 = arith.constant 0 : i32
    %c0_i32_0 = arith.constant 0 : i32
    %c0_i32_1 = arith.constant 0 : i32
    return %c0_i32, %c0_i32_0 : i32, i32
  }
  func.func @transform_3(%arg0: i32) -> (i32, i32) {
    %c0_i32 = arith.constant 0 : i32
    %c0_i32_0 = arith.constant 0 : i32
    %c0_i32_1 = arith.constant 0 : i32
    return %c0_i32, %c0_i32_0 : i32, i32
  }
  func.func @transform_4(%arg0: i32) -> (i32, i32) {
    %c0_i32 = arith.constant 0 : i32
    %c0_i32_0 = arith.constant 0 : i32
    %c0_i32_1 = arith.constant 0 : i32
    return %c0_i32, %c0_i32_0 : i32, i32
  }
  func.func @transform_5(%arg0: i32) -> (i32, i32) {
    %c0_i32 = arith.constant 0 : i32
    %c0_i32_0 = arith.constant 0 : i32
    %c0_i32_1 = arith.constant 0 : i32
    return %c0_i32, %c0_i32_0 : i32, i32
  }
  func.func @transform_6(%arg0: i32) -> (i32, i32) {
    %c0_i32 = arith.constant 0 : i32
    %c0_i32_0 = arith.constant 0 : i32
    %c0_i32_1 = arith.constant 0 : i32
    return %c0_i32, %c0_i32_0 : i32, i32
  }
  func.func @transform_7(%arg0: i32) -> (i32, i32, i32) {
    %c0_i32 = arith.constant 0 : i32
    %c0_i32_0 = arith.constant 0 : i32
    %c0_i32_1 = arith.constant 0 : i32
    return %arg0, %c0_i32, %c0_i32_0 : i32, i32, i32
  }
}

module attributes {stable_mosaic.version = 11 : i64} {
  func.func @_gen_logsoftmax_kernel(%arg0: i32, %arg1: memref<1x8x32xf32, #tpu.memory_space<vmem>>, %arg2: memref<32x64xbf16, #tpu.memory_space<vmem>>, %arg3: memref<1x64xf32, #tpu.memory_space<vmem>>, %arg4: memref<1x8x64xf32, #tpu.memory_space<vmem>>) attributes {dimension_semantics = [#tpu.dimension_semantics<parallel>], iteration_bounds = array<i64: 2>, scalar_prefetch = 0 : i64, scratch_operands = 0 : i64, tpu.core_type = #tpu.core_type<tc>, window_params = [{transform_indices = @transform_0, window_bounds = array<i64: 1, 8, 32>}, {pipeline_mode = #tpu.pipeline_mode<synchronous>, transform_indices = @transform_1, window_bounds = array<i64: 32, 64>}, {pipeline_mode = #tpu.pipeline_mode<synchronous>, transform_indices = @transform_2, window_bounds = array<i64: 1, 64>}, {transform_indices = @transform_3, window_bounds = array<i64: 1, 8, 64>}]} {
    %c0 = arith.constant 0 : index
    %c0_0 = arith.constant 0 : index
    %c0_1 = arith.constant 0 : index
    %0 = vector.load %arg1[%c0, %c0_0, %c0_1] : memref<1x8x32xf32, #tpu.memory_space<vmem>>, vector<1x8x32xf32>
    %1 = vector.shape_cast %0 : vector<1x8x32xf32> to vector<8x32xf32>
    %2 = arith.truncf %1 : vector<8x32xf32> to vector<8x32xbf16>
    %c0_2 = arith.constant 0 : index
    %c0_3 = arith.constant 0 : index
    %3 = vector.load %arg2[%c0_2, %c0_3] : memref<32x64xbf16, #tpu.memory_space<vmem>>, vector<32x64xbf16>
    %cst = arith.constant dense<0.000000e+00> : vector<8x64xf32>
    %4 = tpu.matmul %2, %3, %cst {dimension_numbers = #tpu.dot_dimension_numbers<[1], [0], [0], [1], [0, 0, 1, 1], [], []>} : vector<8x32xbf16>, vector<32x64xbf16>, vector<8x64xf32> -> vector<8x64xf32>
    %c0_4 = arith.constant 0 : index
    %c0_5 = arith.constant 0 : index
    %5 = vector.load %arg3[%c0_4, %c0_5] : memref<1x64xf32, #tpu.memory_space<vmem>>, vector<1x64xf32>
    %6 = vector.broadcast %5 : vector<1x64xf32> to vector<8x64xf32>
    %7 = arith.addf %4, %6 : vector<8x64xf32>
    %cst_6 = arith.constant dense<0xFF800000> : vector<8xf32>
    %8 = vector.multi_reduction <maximumf>, %7, %cst_6 [1] : vector<8x64xf32> to vector<8xf32>
    %9 = vector.shape_cast %8 : vector<8xf32> to vector<8x1xf32>
    %10 = vector.broadcast %9 : vector<8x1xf32> to vector<8x64xf32>
    %11 = arith.subf %7, %10 : vector<8x64xf32>
    %12 = math.exp %11 : vector<8x64xf32>
    %cst_7 = arith.constant dense<0.000000e+00> : vector<8xf32>
    %13 = vector.multi_reduction <add>, %12, %cst_7 [1] : vector<8x64xf32> to vector<8xf32>
    %14 = vector.shape_cast %13 : vector<8xf32> to vector<8x1xf32>
    %15 = math.log %14 : vector<8x1xf32>
    %16 = vector.broadcast %15 : vector<8x1xf32> to vector<8x64xf32>
    %17 = arith.subf %11, %16 : vector<8x64xf32>
    %c0_8 = arith.constant 0 : index
    %c0_9 = arith.constant 0 : index
    %c0_10 = arith.constant 0 : index
    %18 = vector.load %arg4[%c0_8, %c0_9, %c0_10] : memref<1x8x64xf32, #tpu.memory_space<vmem>>, vector<1x8x64xf32>
    %19 = vector.shape_cast %18 : vector<1x8x64xf32> to vector<8x64xf32>
    %20 = vector.shape_cast %17 : vector<8x64xf32> to vector<1x8x64xf32>
    tpu.vector_store %arg4[%c0_8, %c0_9, %c0_10], %20 {strides = array<i32>} : memref<1x8x64xf32, #tpu.memory_space<vmem>>, vector<1x8x64xf32>,
    return
  }
  func.func @transform_0(%arg0: i32) -> (i32, i32, i32) {
    %c0_i32 = arith.constant 0 : i32
    %c0_i32_0 = arith.constant 0 : i32
    %c0_i32_1 = arith.constant 0 : i32
    return %arg0, %c0_i32, %c0_i32_0 : i32, i32, i32
  }
  func.func @transform_1(%arg0: i32) -> (i32, i32) {
    %c0_i32 = arith.constant 0 : i32
    %c0_i32_0 = arith.constant 0 : i32
    %c0_i32_1 = arith.constant 0 : i32
    return %c0_i32, %c0_i32_0 : i32, i32
  }
  func.func @transform_2(%arg0: i32) -> (i32, i32) {
    %c0_i32 = arith.constant 0 : i32
    %c0_i32_0 = arith.constant 0 : i32
    %c0_i32_1 = arith.constant 0 : i32
    return %c0_i32, %c0_i32_0 : i32, i32
  }
  func.func @transform_3(%arg0: i32) -> (i32, i32, i32) {
    %c0_i32 = arith.constant 0 : i32
    %c0_i32_0 = arith.constant 0 : i32
    %c0_i32_1 = arith.constant 0 : i32
    return %arg0, %c0_i32, %c0_i32_0 : i32, i32, i32
  }
}

</mosaic_0001>

<llo_original>
// kernel: forward.17
$region0: #{forward.17}
  #allocation0 [shape = 'u32[]', space=smem, size = 0x4, offset = 0x4, fixed_abs, tag = 'smem constant byte address 0x4 - core index']
  #allocation1 [shape = 'u32[144,128]{1,0:T(1,128)}', space=vmem, size = 0x12000, scoped, tag = 'internal scratch']
  %s0 = inlined_call_operand.vmem [shape: f32[2,8,32], index: 0, kind: input, shape index: {}]
  %s1 = inlined_call_operand.vmem [shape: f32[1,32], index: 1, kind: input, shape index: {}]
  %s2 = inlined_call_operand.vmem [shape: f32[1,32], index: 2, kind: input, shape index: {}]
  %s3 = inlined_call_operand.vmem [shape: f32[2,8,32], index: 3, kind: output, shape index: {}]
  %s4 = sld [smem:[#allocation0]]
  $region45: #{forward.17} parent=0
    _
  %s6 = ssub.s32 1, %s4
  %s7 = scalar_select 0, %s6, %s4
  loop: start=0, step=1, limit=4
  $region2: #{forward.17} parent=0 // loop_pre_header
    _
  $region3: #{forward.17} parent=0 // loop_header
    %s9 = sphi 0, %s13
    %p10 = scmp.ge.s32.totalorder %s9, 4
    %s19 = sphi 0, %s21
    %s22 = sphi 0, %s19
    %s23 = sphi 0, %s22
    %s39 = sphi 0, %s23
    %s43 = sphi 0, %s43
    %s45 = sphi 0, %s43
    %s46 = sphi 0, %s45
    %s60 = sphi 0, %s46
    %s64 = sphi 0, %s64
    %s66 = sphi 0, %s64
    %s67 = sphi 0, %s66
    %s81 = sphi 0, %s67
    %s87 = sphi 0, %s89
    %s90 = sphi 0, %s87
    %s91 = sphi 0, %s90
    %s107 = sphi 0, %s91
  $region4: #{forward.17} parent=0 // loop_header_branch
    %12 = sbr.rel (%p10) target = $region8
  $region5: #{forward.17} parent=0 // loop_body
    %s14 = ssub.s32 %s9, 1
    %s15 = ssub.s32 %s9, 2
    %s16 = sadd.s32 %s9, 1
    %s17 = ssub.s32 %s9, %s16
    %p18 = scmp.eq.s32.totalorder %s17, 0
    %s20 = sadd.s32 %s19, 1
    %s21 = scalar_select %p18, %s19, %s20
    %p24 = pneg %p18
    %p25 = scmp.eq.s32.totalorder %s9, 1
    %p26 = por %p24, %p25
    %p27 = scmp.ne.s32.totalorder %s19, %s22
    %p28 = scmp.eq.s32.totalorder %s9, 0
    %p29 = por %p27, %p28
    %p30 = scmp.ne.s32.totalorder %s19, %s22
    %p31 = scmp.eq.s32.totalorder %s14, 1
    %p32 = por %p30, %p31
    %p33 = scmp.ne.s32.totalorder %s22, %s23
    %p34 = scmp.eq.s32.totalorder %s14, 0
    %p35 = por %p33, %p34
    %p36 = scmp.ne.s32.totalorder %s22, %s23
    %p37 = scmp.eq.s32.totalorder %s15, 1
    %p38 = por %p36, %p37
    %p40 = scmp.ne.s32.totalorder %s23, %s39
    %p41 = scmp.eq.s32.totalorder %s15, 0
    %p42 = por %p40, %p41
    %s44 = sadd.s32 %s43, 1
    %p47 = scmp.eq.s32.totalorder %s9, 1
    %p48 = scmp.ne.s32.totalorder %s43, %s45
    %p49 = scmp.eq.s32.totalorder %s9, 0
    %p50 = por %p48, %p49
    %p51 = scmp.ne.s32.totalorder %s43, %s45
    %p52 = scmp.eq.s32.totalorder %s14, 1
    %p53 = por %p51, %p52
    %p54 = scmp.ne.s32.totalorder %s45, %s46
    %p55 = scmp.eq.s32.totalorder %s14, 0
    %p56 = por %p54, %p55
    %p57 = scmp.ne.s32.totalorder %s45, %s46
    %p58 = scmp.eq.s32.totalorder %s15, 1
    %p59 = por %p57, %p58
    %p61 = scmp.ne.s32.totalorder %s46, %s60
    %p62 = scmp.eq.s32.totalorder %s15, 0
    %p63 = por %p61, %p62
    %s65 = sadd.s32 %s64, 1
    %p68 = scmp.eq.s32.totalorder %s9, 1
    %p69 = scmp.ne.s32.totalorder %s64, %s66
    %p70 = scmp.eq.s32.totalorder %s9, 0
    %p71 = por %p69, %p70
    %p72 = scmp.ne.s32.totalorder %s64, %s66
    %p73 = scmp.eq.s32.totalorder %s14, 1
    %p74 = por %p72, %p73
    %p75 = scmp.ne.s32.totalorder %s66, %s67
    %p76 = scmp.eq.s32.totalorder %s14, 0
    %p77 = por %p75, %p76
    %p78 = scmp.ne.s32.totalorder %s66, %s67
    %p79 = scmp.eq.s32.totalorder %s15, 1
    %p80 = por %p78, %p79
    %p82 = scmp.ne.s32.totalorder %s67, %s81
    %p83 = scmp.eq.s32.totalorder %s15, 0
    %p84 = por %p82, %p83
    %s85 = ssub.s32 %s9, %s16
    %p86 = scmp.eq.s32.totalorder %s85, 0
    %s88 = sadd.s32 %s87, 1
    %s89 = scalar_select %p86, %s87, %s88
    %p92 = pneg %p86
    %p93 = scmp.eq.s32.totalorder %s9, 1
    %p94 = por %p92, %p93
    %p95 = scmp.ne.s32.totalorder %s87, %s90
    %p96 = scmp.eq.s32.totalorder %s9, 0
    %p97 = por %p95, %p96
    %p98 = scmp.ne.s32.totalorder %s87, %s90
    %p99 = scmp.eq.s32.totalorder %s14, 1
    %p100 = por %p98, %p99
    %p101 = scmp.ne.s32.totalorder %s90, %s91
    %p102 = scmp.eq.s32.totalorder %s14, 0
    %p103 = por %p101, %p102
    %p104 = scmp.ne.s32.totalorder %s90, %s91
    %p105 = scmp.eq.s32.totalorder %s15, 1
    %p106 = por %p104, %p105
    %p108 = scmp.ne.s32.totalorder %s91, %s107
    %p109 = scmp.eq.s32.totalorder %s15, 0
    %p110 = por %p108, %p109
    %p111 = scmp.le.s32.totalorder 1, %s9
    %p112 = scmp.lt.s32.totalorder %s9, 3
    %p113 = pnand %p111, %p112
    %p114 = pneg %p113
    // Predicated region
    $region9: #{forward.17} parent=5 // pred_check
      _
    $region10: #{forward.17} parent=5 // pred_check_branch
      %116 = sbr.rel (%p113) target = $region12
    $region11: #{forward.17} parent=5 // pred_region
      %s117 = ssub.s32 %s9, 1
      // Predicated region
      $region13: #{forward.17} parent=11 // pred_check
        %p118 = pneg %p56
      $region14: #{forward.17} parent=11 // pred_check_branch
        %120 = sbr.rel (%p118) target = $region16
      $region15: #{forward.17} parent=11 // pred_region
        _
      $region16: #{forward.17} parent=11 // pred_fallthru
        _
      // Predicated region
      $region17: #{forward.17} parent=11 // pred_check
        %p121 = pneg %p77
      $region18: #{forward.17} parent=11 // pred_check_branch
        %123 = sbr.rel (%p121) target = $region20
      $region19: #{forward.17} parent=11 // pred_region
        _
      $region20: #{forward.17} parent=11 // pred_fallthru
        _
    $region12: #{forward.17} parent=5 // pred_fallthru
      _
    %p124 = scmp.lt.s32.totalorder %s9, 2
    // Predicated region
    $region21: #{forward.17} parent=5 // pred_check
      %p125 = pneg %p124
    $region22: #{forward.17} parent=5 // pred_check_branch
      %127 = sbr.rel (%p125) target = $region24
    $region23: #{forward.17} parent=5 // pred_region
      // Predicated region
      $region25: #{forward.17} parent=23 // pred_check
        %p128 = pneg %p29
      $region26: #{forward.17} parent=23 // pred_check_branch
        %130 = sbr.rel (%p128) target = $region28
      $region27: #{forward.17} parent=23 // pred_region
        %p131 = scmp.lt.s32.totalorder %s9, 1
        %s132 = scalar_select %p131, %s9, 1
        %s133 = smul.addr %s132, 8
        %s134 = scalar_lea.vmem %s0, %s133
      $region28: #{forward.17} parent=23 // pred_fallthru
        _
    $region24: #{forward.17} parent=5 // pred_fallthru
      _
    %p135 = scmp.le.s32.totalorder 1, %s9
    %p136 = scmp.lt.s32.totalorder %s9, 3
    %p137 = pnand %p135, %p136
    %p138 = pneg %p137
    // Predicated region
    $region29: #{forward.17} parent=5 // pred_check
      _
    $region30: #{forward.17} parent=5 // pred_check_branch
      %140 = sbr.rel (%p137) target = $region32
    $region31: #{forward.17} parent=5 // pred_region
      %s141 = ssub.s32 %s9, 1
      %p142 = scmp.lt.s32.totalorder %s14, 1
      %s143 = scalar_select %p142, %s14, 1
      %s144 = smul.addr %s143, 8
      %s145 = scalar_lea.vmem %s0, %s144
      %p146 = pneg %p35
      %p147 = pneg %p32
      %p148 = pneg %p56
      %p149 = pneg %p53
      %p150 = pneg %p77
      %p151 = pneg %p74
      %p152 = pneg %p103
      %p153 = pneg %p100
      %p154 = scmp.lt.s32.totalorder %s14, 1
      %s155 = scalar_select %p154, %s14, 1
      %s156 = smul.addr %s155, 8
      %s157 = scalar_lea.vmem %s3, %s156
      %p158 = scmp.lt.s32.totalorder %s14, 1
      %s159 = scalar_select %p158, %s14, 1
      %s160 = smul.addr %s159, 8
      %s161 = scalar_lea.vmem %s0, %s160
      %p162 = scmp.lt.s32.totalorder %s14, 1
      %s163 = scalar_select %p162, %s14, 1
      %s164 = smul.addr %s163, 8
      %s165 = scalar_lea.vmem %s3, %s164
      %v166 = vld [vmem:[%s161] sm:$0xff]
      %v167 = vld [vmem:[%s1] sm:$0x1]
      %v168 = vld [vmem:[%s2] sm:$0x1]
      %vm169 = vcmask 261120
      %v170 = vsel %vm169, %v166, 0.0
      %171 = vadd.xlane.f32.xlu0 %v170
      %v172 = vpop.xlane.xlu0 %171
      %v173 = vrcp.pop 32.0
      %v174 = vmul.f32 %v172, %v173
      %v175 = vsub.f32 %v166, %v174
      %v176 = vmul.f32 %v175, %v175
      %v177 = vsel %vm169, %v176, 0.0
      %178 = vadd.xlane.f32.xlu0 %v177
      %v179 = vpop.xlane.xlu0 %178
      %v180 = vmul.f32 %v179, %v173
      %v181 = vadd.f32 %v180, 1e-05
      %v182 = vrsqrt.pop %v181
      %v183 = vmul.f32 %v175, %v182
      %v185 = vlaneseq
      %v186 = vshrl.u32 %v185, 7
      %v187 = vsub.s32 0, %v186
      %v188 = vrot.slane %v167, %v187
      %v190 = vmul.f32 %v183, %v188
      %v192 = vlaneseq
      %v193 = vshrl.u32 %v192, 7
      %v194 = vsub.s32 0, %v193
      %v195 = vrot.slane %v168, %v194
      %v197 = vadd.f32 %v190, %v195
      %198 = vst.msk [vmem:[%s165] sm:$0xff] %vm169, %v197
      %p199 = scmp.lt.s32.totalorder %s14, 1
      %s200 = scalar_select %p199, %s14, 1
      %s201 = smul.addr %s200, 8
      %s202 = scalar_lea.vmem %s3, %s201
      // Predicated region
      $region33: #{forward.17} parent=31 // pred_check
        %p203 = pneg %p100
      $region34: #{forward.17} parent=31 // pred_check_branch
        %205 = sbr.rel (%p203) target = $region36
      $region35: #{forward.17} parent=31 // pred_region
        _
      $region36: #{forward.17} parent=31 // pred_fallthru
        _
    $region32: #{forward.17} parent=5 // pred_fallthru
      _
    %p206 = scmp.le.s32.totalorder 2, %s9
    // Predicated region
    $region37: #{forward.17} parent=5 // pred_check
      %p207 = pneg %p206
    $region38: #{forward.17} parent=5 // pred_check_branch
      %209 = sbr.rel (%p207) target = $region40
    $region39: #{forward.17} parent=5 // pred_region
      %s210 = ssub.s32 %s9, 2
      // Predicated region
      $region41: #{forward.17} parent=39 // pred_check
        %p211 = pneg %p106
      $region42: #{forward.17} parent=39 // pred_check_branch
        %213 = sbr.rel (%p211) target = $region44
      $region43: #{forward.17} parent=39 // pred_region
        %p214 = scmp.lt.s32.totalorder %s15, 1
        %s215 = scalar_select %p214, %s15, 1
        %s216 = smul.addr %s215, 8
        %s217 = scalar_lea.vmem %s3, %s216
      $region44: #{forward.17} parent=39 // pred_fallthru
        _
    $region40: #{forward.17} parent=5 // pred_fallthru
      _
  $region6: #{forward.17} parent=0 // loop_footer
    %s13 = sadd.s32 1, %s9
  $region7: #{forward.17} parent=0 // loop_footer_branch
    %8 = sbr.rel target = $region3
  $region8: #{forward.17} parent=0 // loop_exit
    _

// kernel: forward.14
$region0: #{forward.14}
  #allocation0 [shape = 'u32[]', space=smem, size = 0x4, offset = 0x4, fixed_abs, tag = 'smem constant byte address 0x4 - core index']
  #allocation1 [shape = 'u32[144,128]{1,0:T(1,128)}', space=vmem, size = 0x12000, scoped, tag = 'internal scratch']
  %s0 = inlined_call_operand.vmem [shape: f32[2,8,32], index: 0, kind: input, shape index: {}]
  %s1 = inlined_call_operand.vmem [shape: bf16[32,64], index: 1, kind: input, shape index: {}]
  %s2 = inlined_call_operand.vmem [shape: f32[1,64], index: 2, kind: input, shape index: {}]
  %s3 = inlined_call_operand.vmem [shape: bf16[64,32], index: 3, kind: input, shape index: {}]
  %s4 = inlined_call_operand.vmem [shape: f32[1,32], index: 4, kind: input, shape index: {}]
  %s5 = inlined_call_operand.vmem [shape: f32[1,32], index: 5, kind: input, shape index: {}]
  %s6 = inlined_call_operand.vmem [shape: f32[1,32], index: 6, kind: input, shape index: {}]
  %s7 = inlined_call_operand.vmem [shape: f32[2,8,32], index: 7, kind: output, shape index: {}]
  %s8 = sld [smem:[#allocation0]]
  $region61: #{forward.14} parent=0
    _
  %s10 = ssub.s32 1, %s8
  %s11 = scalar_select 0, %s10, %s8
  loop: start=0, step=1, limit=4
  $region2: #{forward.14} parent=0 // loop_pre_header
    _
  $region3: #{forward.14} parent=0 // loop_header
    %s13 = sphi 0, %s17
    %p14 = scmp.ge.s32.totalorder %s13, 4
    %s23 = sphi 0, %s25
    %s26 = sphi 0, %s23
    %s27 = sphi 0, %s26
    %s43 = sphi 0, %s27
    %s47 = sphi 0, %s47
    %s49 = sphi 0, %s47
    %s50 = sphi 0, %s49
    %s64 = sphi 0, %s50
    %s68 = sphi 0, %s68
    %s70 = sphi 0, %s68
    %s71 = sphi 0, %s70
    %s85 = sphi 0, %s71
    %s89 = sphi 0, %s89
    %s91 = sphi 0, %s89
    %s92 = sphi 0, %s91
    %s106 = sphi 0, %s92
    %s110 = sphi 0, %s110
    %s112 = sphi 0, %s110
    %s113 = sphi 0, %s112
    %s127 = sphi 0, %s113
    %s131 = sphi 0, %s131
    %s133 = sphi 0, %s131
    %s134 = sphi 0, %s133
    %s148 = sphi 0, %s134
    %s152 = sphi 0, %s152
    %s154 = sphi 0, %s152
    %s155 = sphi 0, %s154
    %s169 = sphi 0, %s155
    %s175 = sphi 0, %s177
    %s178 = sphi 0, %s175
    %s179 = sphi 0, %s178
    %s195 = sphi 0, %s179
  $region4: #{forward.14} parent=0 // loop_header_branch
    %16 = sbr.rel (%p14) target = $region8
  $region5: #{forward.14} parent=0 // loop_body
    %s18 = ssub.s32 %s13, 1
    %s19 = ssub.s32 %s13, 2
    %s20 = sadd.s32 %s13, 1
    %s21 = ssub.s32 %s13, %s20
    %p22 = scmp.eq.s32.totalorder %s21, 0
    %s24 = sadd.s32 %s23, 1
    %s25 = scalar_select %p22, %s23, %s24
    %p28 = pneg %p22
    %p29 = scmp.eq.s32.totalorder %s13, 1
    %p30 = por %p28, %p29
    %p31 = scmp.ne.s32.totalorder %s23, %s26
    %p32 = scmp.eq.s32.totalorder %s13, 0
    %p33 = por %p31, %p32
    %p34 = scmp.ne.s32.totalorder %s23, %s26
    %p35 = scmp.eq.s32.totalorder %s18, 1
    %p36 = por %p34, %p35
    %p37 = scmp.ne.s32.totalorder %s26, %s27
    %p38 = scmp.eq.s32.totalorder %s18, 0
    %p39 = por %p37, %p38
    %p40 = scmp.ne.s32.totalorder %s26, %s27
    %p41 = scmp.eq.s32.totalorder %s19, 1
    %p42 = por %p40, %p41
    %p44 = scmp.ne.s32.totalorder %s27, %s43
    %p45 = scmp.eq.s32.totalorder %s19, 0
    %p46 = por %p44, %p45
    %s48 = sadd.s32 %s47, 1
    %p51 = scmp.eq.s32.totalorder %s13, 1
    %p52 = scmp.ne.s32.totalorder %s47, %s49
    %p53 = scmp.eq.s32.totalorder %s13, 0
    %p54 = por %p52, %p53
    %p55 = scmp.ne.s32.totalorder %s47, %s49
    %p56 = scmp.eq.s32.totalorder %s18, 1
    %p57 = por %p55, %p56
    %p58 = scmp.ne.s32.totalorder %s49, %s50
    %p59 = scmp.eq.s32.totalorder %s18, 0
    %p60 = por %p58, %p59
    %p61 = scmp.ne.s32.totalorder %s49, %s50
    %p62 = scmp.eq.s32.totalorder %s19, 1
    %p63 = por %p61, %p62
    %p65 = scmp.ne.s32.totalorder %s50, %s64
    %p66 = scmp.eq.s32.totalorder %s19, 0
    %p67 = por %p65, %p66
    %s69 = sadd.s32 %s68, 1
    %p72 = scmp.eq.s32.totalorder %s13, 1
    %p73 = scmp.ne.s32.totalorder %s68, %s70
    %p74 = scmp.eq.s32.totalorder %s13, 0
    %p75 = por %p73, %p74
    %p76 = scmp.ne.s32.totalorder %s68, %s70
    %p77 = scmp.eq.s32.totalorder %s18, 1
    %p78 = por %p76, %p77
    %p79 = scmp.ne.s32.totalorder %s70, %s71
    %p80 = scmp.eq.s32.totalorder %s18, 0
    %p81 = por %p79, %p80
    %p82 = scmp.ne.s32.totalorder %s70, %s71
    %p83 = scmp.eq.s32.totalorder %s19, 1
    %p84 = por %p82, %p83
    %p86 = scmp.ne.s32.totalorder %s71, %s85
    %p87 = scmp.eq.s32.totalorder %s19, 0
    %p88 = por %p86, %p87
    %s90 = sadd.s32 %s89, 1
    %p93 = scmp.eq.s32.totalorder %s13, 1
    %p94 = scmp.ne.s32.totalorder %s89, %s91
    %p95 = scmp.eq.s32.totalorder %s13, 0
    %p96 = por %p94, %p95
    %p97 = scmp.ne.s32.totalorder %s89, %s91
    %p98 = scmp.eq.s32.totalorder %s18, 1
    %p99 = por %p97, %p98
    %p100 = scmp.ne.s32.totalorder %s91, %s92
    %p101 = scmp.eq.s32.totalorder %s18, 0
    %p102 = por %p100, %p101
    %p103 = scmp.ne.s32.totalorder %s91, %s92
    %p104 = scmp.eq.s32.totalorder %s19, 1
    %p105 = por %p103, %p104
    %p107 = scmp.ne.s32.totalorder %s92, %s106
    %p108 = scmp.eq.s32.totalorder %s19, 0
    %p109 = por %p107, %p108
    %s111 = sadd.s32 %s110, 1
    %p114 = scmp.eq.s32.totalorder %s13, 1
    %p115 = scmp.ne.s32.totalorder %s110, %s112
    %p116 = scmp.eq.s32.totalorder %s13, 0
    %p117 = por %p115, %p116
    %p118 = scmp.ne.s32.totalorder %s110, %s112
    %p119 = scmp.eq.s32.totalorder %s18, 1
    %p120 = por %p118, %p119
    %p121 = scmp.ne.s32.totalorder %s112, %s113
    %p122 = scmp.eq.s32.totalorder %s18, 0
    %p123 = por %p121, %p122
    %p124 = scmp.ne.s32.totalorder %s112, %s113
    %p125 = scmp.eq.s32.totalorder %s19, 1
    %p126 = por %p124, %p125
    %p128 = scmp.ne.s32.totalorder %s113, %s127
    %p129 = scmp.eq.s32.totalorder %s19, 0
    %p130 = por %p128, %p129
    %s132 = sadd.s32 %s131, 1
    %p135 = scmp.eq.s32.totalorder %s13, 1
    %p136 = scmp.ne.s32.totalorder %s131, %s133
    %p137 = scmp.eq.s32.totalorder %s13, 0
    %p138 = por %p136, %p137
    %p139 = scmp.ne.s32.totalorder %s131, %s133
    %p140 = scmp.eq.s32.totalorder %s18, 1
    %p141 = por %p139, %p140
    %p142 = scmp.ne.s32.totalorder %s133, %s134
    %p143 = scmp.eq.s32.totalorder %s18, 0
    %p144 = por %p142, %p143
    %p145 = scmp.ne.s32.totalorder %s133, %s134
    %p146 = scmp.eq.s32.totalorder %s19, 1
    %p147 = por %p145, %p146
    %p149 = scmp.ne.s32.totalorder %s134, %s148
    %p150 = scmp.eq.s32.totalorder %s19, 0
    %p151 = por %p149, %p150
    %s153 = sadd.s32 %s152, 1
    %p156 = scmp.eq.s32.totalorder %s13, 1
    %p157 = scmp.ne.s32.totalorder %s152, %s154
    %p158 = scmp.eq.s32.totalorder %s13, 0
    %p159 = por %p157, %p158
    %p160 = scmp.ne.s32.totalorder %s152, %s154
    %p161 = scmp.eq.s32.totalorder %s18, 1
    %p162 = por %p160, %p161
    %p163 = scmp.ne.s32.totalorder %s154, %s155
    %p164 = scmp.eq.s32.totalorder %s18, 0
    %p165 = por %p163, %p164
    %p166 = scmp.ne.s32.totalorder %s154, %s155
    %p167 = scmp.eq.s32.totalorder %s19, 1
    %p168 = por %p166, %p167
    %p170 = scmp.ne.s32.totalorder %s155, %s169
    %p171 = scmp.eq.s32.totalorder %s19, 0
    %p172 = por %p170, %p171
    %s173 = ssub.s32 %s13, %s20
    %p174 = scmp.eq.s32.totalorder %s173, 0
    %s176 = sadd.s32 %s175, 1
    %s177 = scalar_select %p174, %s175, %s176
    %p180 = pneg %p174
    %p181 = scmp.eq.s32.totalorder %s13, 1
    %p182 = por %p180, %p181
    %p183 = scmp.ne.s32.totalorder %s175, %s178
    %p184 = scmp.eq.s32.totalorder %s13, 0
    %p185 = por %p183, %p184
    %p186 = scmp.ne.s32.totalorder %s175, %s178
    %p187 = scmp.eq.s32.totalorder %s18, 1
    %p188 = por %p186, %p187
    %p189 = scmp.ne.s32.totalorder %s178, %s179
    %p190 = scmp.eq.s32.totalorder %s18, 0
    %p191 = por %p189, %p190
    %p192 = scmp.ne.s32.totalorder %s178, %s179
    %p193 = scmp.eq.s32.totalorder %s19, 1
    %p194 = por %p192, %p193
    %p196 = scmp.ne.s32.totalorder %s179, %s195
    %p197 = scmp.eq.s32.totalorder %s19, 0
    %p198 = por %p196, %p197
    %p199 = scmp.le.s32.totalorder 1, %s13
    %p200 = scmp.lt.s32.totalorder %s13, 3
    %p201 = pnand %p199, %p200
    %p202 = pneg %p201
    // Predicated region
    $region9: #{forward.14} parent=5 // pred_check
      _
    $region10: #{forward.14} parent=5 // pred_check_branch
      %204 = sbr.rel (%p201) target = $region12
    $region11: #{forward.14} parent=5 // pred_region
      %s205 = ssub.s32 %s13, 1
      // Predicated region
      $region13: #{forward.14} parent=11 // pred_check
        %p206 = pneg %p60
      $region14: #{forward.14} parent=11 // pred_check_branch
        %208 = sbr.rel (%p206) target = $region16
      $region15: #{forward.14} parent=11 // pred_region
        _
      $region16: #{forward.14} parent=11 // pred_fallthru
        _
      // Predicated region
      $region17: #{forward.14} parent=11 // pred_check
        %p209 = pneg %p81
      $region18: #{forward.14} parent=11 // pred_check_branch
        %211 = sbr.rel (%p209) target = $region20
      $region19: #{forward.14} parent=11 // pred_region
        _
      $region20: #{forward.14} parent=11 // pred_fallthru
        _
      // Predicated region
      $region21: #{forward.14} parent=11 // pred_check
        %p212 = pneg %p102
      $region22: #{forward.14} parent=11 // pred_check_branch
        %214 = sbr.rel (%p212) target = $region24
      $region23: #{forward.14} parent=11 // pred_region
        _
      $region24: #{forward.14} parent=11 // pred_fallthru
        _
      // Predicated region
      $region25: #{forward.14} parent=11 // pred_check
        %p215 = pneg %p123
      $region26: #{forward.14} parent=11 // pred_check_branch
        %217 = sbr.rel (%p215) target = $region28
      $region27: #{forward.14} parent=11 // pred_region
        _
      $region28: #{forward.14} parent=11 // pred_fallthru
        _
      // Predicated region
      $region29: #{forward.14} parent=11 // pred_check
        %p218 = pneg %p144
      $region30: #{forward.14} parent=11 // pred_check_branch
        %220 = sbr.rel (%p218) target = $region32
      $region31: #{forward.14} parent=11 // pred_region
        _
      $region32: #{forward.14} parent=11 // pred_fallthru
        _
      // Predicated region
      $region33: #{forward.14} parent=11 // pred_check
        %p221 = pneg %p165
      $region34: #{forward.14} parent=11 // pred_check_branch
        %223 = sbr.rel (%p221) target = $region36
      $region35: #{forward.14} parent=11 // pred_region
        _
      $region36: #{forward.14} parent=11 // pred_fallthru
        _
    $region12: #{forward.14} parent=5 // pred_fallthru
      _
    %p224 = scmp.lt.s32.totalorder %s13, 2
    // Predicated region
    $region37: #{forward.14} parent=5 // pred_check
      %p225 = pneg %p224
    $region38: #{forward.14} parent=5 // pred_check_branch
      %227 = sbr.rel (%p225) target = $region40
    $region39: #{forward.14} parent=5 // pred_region
      // Predicated region
      $region41: #{forward.14} parent=39 // pred_check
        %p228 = pneg %p33
      $region42: #{forward.14} parent=39 // pred_check_branch
        %230 = sbr.rel (%p228) target = $region44
      $region43: #{forward.14} parent=39 // pred_region
        %p231 = scmp.lt.s32.totalorder %s13, 1
        %s232 = scalar_select %p231, %s13, 1
        %s233 = smul.addr %s232, 8
        %s234 = scalar_lea.vmem %s0, %s233
      $region44: #{forward.14} parent=39 // pred_fallthru
        _
    $region40: #{forward.14} parent=5 // pred_fallthru
      _
    %p235 = scmp.le.s32.totalorder 1, %s13
    %p236 = scmp.lt.s32.totalorder %s13, 3
    %p237 = pnand %p235, %p236
    %p238 = pneg %p237
    // Predicated region
    $region45: #{forward.14} parent=5 // pred_check
      _
    $region46: #{forward.14} parent=5 // pred_check_branch
      %240 = sbr.rel (%p237) target = $region48
    $region47: #{forward.14} parent=5 // pred_region
      %s241 = ssub.s32 %s13, 1
      %p242 = scmp.lt.s32.totalorder %s18, 1
      %s243 = scalar_select %p242, %s18, 1
      %s244 = smul.addr %s243, 8
      %s245 = scalar_lea.vmem %s0, %s244
      %p246 = pneg %p39
      %p247 = pneg %p36
      %p248 = pneg %p60
      %p249 = pneg %p57
      %p250 = pneg %p81
      %p251 = pneg %p78
      %p252 = pneg %p102
      %p253 = pneg %p99
      %p254 = pneg %p123
      %p255 = pneg %p120
      %p256 = pneg %p144
      %p257 = pneg %p141
      %p258 = pneg %p165
      %p259 = pneg %p162
      %p260 = pneg %p191
      %p261 = pneg %p188
      %p262 = scmp.lt.s32.totalorder %s18, 1
      %s263 = scalar_select %p262, %s18, 1
      %s264 = smul.addr %s263, 8
      %s265 = scalar_lea.vmem %s7, %s264
      %p266 = scmp.lt.s32.totalorder %s18, 1
      %s267 = scalar_select %p266, %s18, 1
      %s268 = smul.addr %s267, 8
      %s269 = scalar_lea.vmem %s0, %s268
      %p270 = scmp.lt.s32.totalorder %s18, 1
      %s271 = scalar_select %p270, %s18, 1
      %s272 = smul.addr %s271, 8
      %s273 = scalar_lea.vmem %s7, %s272
      %v275 = vld [vmem:[%s269] sm:$0xff]
      %v276 = vpack.c.bf16 %v275, %v275
      %v277 = vld [vmem:[%s1] sm:$0xf]
      %v278 = vld [vmem:[%s1 + $0x4] sm:$0xf]
      %v279 = vld [vmem:[%s1 + $0x8] sm:$0xf]
      %v280 = vld [vmem:[%s1 + $0xc] sm:$0xf]
      %v281 = vld [vmem:[%s2] sm:$0x1]
      %v283 = vlaneseq
      %v284 = vshrl.u32 %v283, 7
      %v285 = vsub.s32 0, %v284
      %v286 = vrot.slane %v281, %v285
      %v292 = vunpack.c.l.b16 %v277
      %v293 = vunpack.c.l.b16 %v278
      %v294 = vunpack.c.l.b16 %v279
      %v295 = vunpack.c.l.b16 %v280
      %v296 = vpack.c.b16 %v293, %v292
      %v297 = vpack.c.b16 %v295, %v294
      %vm300 = vcmask 261120
      %v302 = vsel %vm300, %v276, 0
      %304 = vmatprep.subr.bf16.mxu0 0
      %305 = vmatpush1.bf16.msra.mxu0 0
      %306 = vmatprep.subr.bf16.mxu0 0
      %307 = vmatpush1.bf16.msra.mxu0 0
      %308 = vmatprep.subr.bf16.mxu0 0
      %309 = vmatpush1.bf16.msra.mxu0 0
      %310 = vmatprep.subr.bf16.mxu0 0
      %311 = vmatpush1.bf16.msra.mxu0 0
      %312 = vmatprep.subr.bf16.mxu0 0
      %313 = vmatpush1.bf16.msra.mxu0 0
      %314 = vmatprep.subr.bf16.mxu0 0
      %315 = vmatpush1.bf16.msra.mxu0 0
      %316 = vmatprep.subr.bf16.mxu0 0
      %317 = vmatpush1.bf16.msra.mxu0 %v297
      %318 = vmatprep.subr.bf16.mxu0 0
      %319 = vmatpush1.bf16.msra.mxu0 %v296
      %320 = vmatprep.subr.bf16.mxu0 0
      %321 = vmatpush2.bf16.msra.mxu0 0
      %322 = vmatprep.subr.bf16.mxu0 0
      %323 = vmatpush2.bf16.msra.mxu0 0
      %324 = vmatprep.subr.bf16.mxu0 0
      %325 = vmatpush2.bf16.msra.mxu0 0
      %326 = vmatprep.subr.bf16.mxu0 0
      %327 = vmatpush2.bf16.msra.mxu0 0
      %328 = vmatprep.subr.bf16.mxu0 0
      %329 = vmatpush2.bf16.msra.mxu0 0
      %330 = vmatprep.subr.bf16.mxu0 0
      %331 = vmatpush2.bf16.msra.mxu0 0
      %332 = vmatprep.subr.bf16.mxu0 0
      %333 = vmatpush2.bf16.msra.mxu0 0
      %334 = vmatprep.subr.bf16.mxu0 0
      %335 = vmatpush2.bf16.msra.mxu0 0
      %336 = vmatprep.mubr.bf16.mxu0 0
      %337 = vmatmul.mubr.bf16.gmra.mxu0 %v302
      %v338 = vpop.f32.mrf.mxu0
      %v339 = vadd.f32 %v286, %v338
      %v340 = vpop.f32.mrf.mxu0
      %v341 = vpop.f32.mrf.mxu0
      %v342 = vpop.f32.mrf.mxu0
      %343 = vdwg.mxu0
      %v344 = vmax.f32 %v339, 0.0
      %v345 = vpack.c.bf16 %v344, %v344
      %v346 = vld [vmem:[%s3] sm:$0xf]
      %v347 = vld [vmem:[%s3 + $0x4] sm:$0xf]
      %v348 = vld [vmem:[%s3 + $0x8] sm:$0xf]
      %v349 = vld [vmem:[%s3 + $0xc] sm:$0xf]
      %v350 = vld [vmem:[%s3 + $0x10] sm:$0xf]
      %v351 = vld [vmem:[%s3 + $0x14] sm:$0xf]
      %v352 = vld [vmem:[%s3 + $0x18] sm:$0xf]
      %v353 = vld [vmem:[%s3 + $0x1c] sm:$0xf]
      %v354 = vld [vmem:[%s4] sm:$0x1]
      %v356 = vlaneseq
      %v357 = vshrl.u32 %v356, 7
      %v358 = vsub.s32 0, %v357
      %v359 = vrot.slane %v354, %v358
      %v369 = vunpack.c.l.b16 %v346
      %v370 = vunpack.c.l.b16 %v347
      %v371 = vunpack.c.l.b16 %v348
      %v372 = vunpack.c.l.b16 %v349
      %v373 = vunpack.c.l.b16 %v350
      %v374 = vunpack.c.l.b16 %v351
      %v375 = vunpack.c.l.b16 %v352
      %v376 = vunpack.c.l.b16 %v353
      %v377 = vpack.c.b16 %v370, %v369
      %v378 = vpack.c.b16 %v372, %v371
      %v379 = vpack.c.b16 %v374, %v373
      %v380 = vpack.c.b16 %v376, %v375
      %vm385 = vcmask 523264
      %v387 = vsel %vm385, %v345, 0
      %389 = vmatprep.subr.bf16.mxu0 0
      %390 = vmatpush1.bf16.msra.mxu0 0
      %391 = vmatprep.subr.bf16.mxu0 0
      %392 = vmatpush1.bf16.msra.mxu0 0
      %393 = vmatprep.subr.bf16.mxu0 0
      %394 = vmatpush1.bf16.msra.mxu0 0
      %395 = vmatprep.subr.bf16.mxu0 0
      %396 = vmatpush1.bf16.msra.mxu0 0
      %397 = vmatprep.subr.bf16.mxu0 0
      %398 = vmatpush1.bf16.msra.mxu0 %v380
      %399 = vmatprep.subr.bf16.mxu0 0
      %400 = vmatpush1.bf16.msra.mxu0 %v379
      %401 = vmatprep.subr.bf16.mxu0 0
      %402 = vmatpush1.bf16.msra.mxu0 %v378
      %403 = vmatprep.subr.bf16.mxu0 0
      %404 = vmatpush1.bf16.msra.mxu0 %v377
      %405 = vmatprep.subr.bf16.mxu0 0
      %406 = vmatpush2.bf16.msra.mxu0 0
      %407 = vmatprep.subr.bf16.mxu0 0
      %408 = vmatpush2.bf16.msra.mxu0 0
      %409 = vmatprep.subr.bf16.mxu0 0
      %410 = vmatpush2.bf16.msra.mxu0 0
      %411 = vmatprep.subr.bf16.mxu0 0
      %412 = vmatpush2.bf16.msra.mxu0 0
      %413 = vmatprep.subr.bf16.mxu0 0
      %414 = vmatpush2.bf16.msra.mxu0 0
      %415 = vmatprep.subr.bf16.mxu0 0
      %416 = vmatpush2.bf16.msra.mxu0 0
      %417 = vmatprep.subr.bf16.mxu0 0
      %418 = vmatpush2.bf16.msra.mxu0 0
      %419 = vmatprep.subr.bf16.mxu0 0
      %420 = vmatpush2.bf16.msra.mxu0 0
      %421 = vmatprep.mubr.bf16.mxu0 0
      %422 = vmatmul.mubr.bf16.gmra.mxu0 %v387
      %v423 = vpop.f32.mrf.mxu0
      %v424 = vadd.f32 %v359, %v423
      %v425 = vpop.f32.mrf.mxu0
      %v426 = vpop.f32.mrf.mxu0
      %v427 = vpop.f32.mrf.mxu0
      %428 = vdwg.mxu0
      %v429 = vadd.f32 %v275, %v424
      %v430 = vld [vmem:[%s5] sm:$0x1]
      %v431 = vld [vmem:[%s6] sm:$0x1]
      %v432 = vsel %vm300, %v429, 0.0
      %433 = vadd.xlane.f32.xlu0 %v432
      %v434 = vpop.xlane.xlu0 %433
      %v435 = vrcp.pop 32.0
      %v436 = vmul.f32 %v434, %v435
      %v437 = vsub.f32 %v429, %v436
      %v438 = vmul.f32 %v437, %v437
      %v439 = vsel %vm300, %v438, 0.0
      %440 = vadd.xlane.f32.xlu0 %v439
      %v441 = vpop.xlane.xlu0 %440
      %v442 = vmul.f32 %v441, %v435
      %v443 = vadd.f32 %v442, 1e-05
      %v444 = vrsqrt.pop %v443
      %v445 = vmul.f32 %v437, %v444
      %v447 = vlaneseq
      %v448 = vshrl.u32 %v447, 7
      %v449 = vsub.s32 0, %v448
      %v450 = vrot.slane %v430, %v449
      %v452 = vmul.f32 %v445, %v450
      %v454 = vlaneseq
      %v455 = vshrl.u32 %v454, 7
      %v456 = vsub.s32 0, %v455
      %v457 = vrot.slane %v431, %v456
      %v459 = vadd.f32 %v452, %v457
      %460 = vst.msk [vmem:[%s273] sm:$0xff] %vm300, %v459
      %p461 = scmp.lt.s32.totalorder %s18, 1
      %s462 = scalar_select %p461, %s18, 1
      %s463 = smul.addr %s462, 8
      %s464 = scalar_lea.vmem %s7, %s463
      // Predicated region
      $region49: #{forward.14} parent=47 // pred_check
        %p465 = pneg %p188
      $region50: #{forward.14} parent=47 // pred_check_branch
        %467 = sbr.rel (%p465) target = $region52
      $region51: #{forward.14} parent=47 // pred_region
        _
      $region52: #{forward.14} parent=47 // pred_fallthru
        _
    $region48: #{forward.14} parent=5 // pred_fallthru
      _
    %p468 = scmp.le.s32.totalorder 2, %s13
    // Predicated region
    $region53: #{forward.14} parent=5 // pred_check
      %p469 = pneg %p468
    $region54: #{forward.14} parent=5 // pred_check_branch
      %471 = sbr.rel (%p469) target = $region56
    $region55: #{forward.14} parent=5 // pred_region
      %s472 = ssub.s32 %s13, 2
      // Predicated region
      $region57: #{forward.14} parent=55 // pred_check
        %p473 = pneg %p194
      $region58: #{forward.14} parent=55 // pred_check_branch
        %475 = sbr.rel (%p473) target = $region60
      $region59: #{forward.14} parent=55 // pred_region
        %p476 = scmp.lt.s32.totalorder %s19, 1
        %s477 = scalar_select %p476, %s19, 1
        %s478 = smul.addr %s477, 8
        %s479 = scalar_lea.vmem %s7, %s478
      $region60: #{forward.14} parent=55 // pred_fallthru
        _
    $region56: #{forward.14} parent=5 // pred_fallthru
      _
  $region6: #{forward.14} parent=0 // loop_footer
    %s17 = sadd.s32 1, %s13
  $region7: #{forward.14} parent=0 // loop_footer_branch
    %12 = sbr.rel target = $region3
  $region8: #{forward.14} parent=0 // loop_exit
    _

// kernel: forward.25
$region0: #{forward.25}
  #allocation0 [shape = 'u32[]', space=smem, size = 0x4, offset = 0x4, fixed_abs, tag = 'smem constant byte address 0x4 - core index']
  #allocation1 [shape = 'u32[144,128]{1,0:T(1,128)}', space=vmem, size = 0x12000, scoped, tag = 'internal scratch']
  %s0 = inlined_call_operand.vmem [shape: f32[2,8,32], index: 0, kind: input, shape index: {}]
  %s1 = inlined_call_operand.vmem [shape: bf16[32,64], index: 1, kind: input, shape index: {}]
  %s2 = inlined_call_operand.vmem [shape: f32[1,64], index: 2, kind: input, shape index: {}]
  %s3 = inlined_call_operand.hbm [shape: f32[2,8,64], index: 3, kind: output, shape index: {}]
  %s4 = sld [smem:[#allocation0]]
  $region45: #{forward.25} parent=0
    _
  %s6 = ssub.s32 1, %s4
  %s7 = scalar_select 0, %s6, %s4
  $region1: #{forward.25} parent=0
    #allocation2 [shape = 'u8[8192]{0}', space=vmem, size = 0x2000, scoped, tag = 'output window, operand 0']
    #allocation3 [shape = 's32[2]{0}', space=sflag, size = 0x8, scoped, tag = 'scoped memory for forward.25']
    %8 = vsyncpa [#allocation3], 0
    %s9 = scalar_lea.sflag [#allocation3], 1
    %10 = vsyncpa %s9, 0
    loop: start=0, step=1, limit=4
    $region2: #{forward.25} parent=1 // loop_pre_header
      _
    $region3: #{forward.25} parent=1 // loop_header
      %s12 = sphi 0, %s16
      %p13 = scmp.ge.s32.totalorder %s12, 4
      %s22 = sphi 0, %s24
      %s25 = sphi 0, %s22
      %s26 = sphi 0, %s25
      %s42 = sphi 0, %s26
      %s46 = sphi 0, %s46
      %s48 = sphi 0, %s46
      %s49 = sphi 0, %s48
      %s63 = sphi 0, %s49
      %s67 = sphi 0, %s67
      %s69 = sphi 0, %s67
      %s70 = sphi 0, %s69
      %s84 = sphi 0, %s70
      %s90 = sphi 0, %s92
      %s93 = sphi 0, %s90
      %s94 = sphi 0, %s93
      %s110 = sphi 0, %s94
    $region4: #{forward.25} parent=1 // loop_header_branch
      %15 = sbr.rel (%p13) target = $region8
    $region5: #{forward.25} parent=1 // loop_body
      %s17 = ssub.s32 %s12, 1
      %s18 = ssub.s32 %s12, 2
      %s19 = sadd.s32 %s12, 1
      %s20 = ssub.s32 %s12, %s19
      %p21 = scmp.eq.s32.totalorder %s20, 0
      %s23 = sadd.s32 %s22, 1
      %s24 = scalar_select %p21, %s22, %s23
      %p27 = pneg %p21
      %p28 = scmp.eq.s32.totalorder %s12, 1
      %p29 = por %p27, %p28
      %p30 = scmp.ne.s32.totalorder %s22, %s25
      %p31 = scmp.eq.s32.totalorder %s12, 0
      %p32 = por %p30, %p31
      %p33 = scmp.ne.s32.totalorder %s22, %s25
      %p34 = scmp.eq.s32.totalorder %s17, 1
      %p35 = por %p33, %p34
      %p36 = scmp.ne.s32.totalorder %s25, %s26
      %p37 = scmp.eq.s32.totalorder %s17, 0
      %p38 = por %p36, %p37
      %p39 = scmp.ne.s32.totalorder %s25, %s26
      %p40 = scmp.eq.s32.totalorder %s18, 1
      %p41 = por %p39, %p40
      %p43 = scmp.ne.s32.totalorder %s26, %s42
      %p44 = scmp.eq.s32.totalorder %s18, 0
      %p45 = por %p43, %p44
      %s47 = sadd.s32 %s46, 1
      %p50 = scmp.eq.s32.totalorder %s12, 1
      %p51 = scmp.ne.s32.totalorder %s46, %s48
      %p52 = scmp.eq.s32.totalorder %s12, 0
      %p53 = por %p51, %p52
      %p54 = scmp.ne.s32.totalorder %s46, %s48
      %p55 = scmp.eq.s32.totalorder %s17, 1
      %p56 = por %p54, %p55
      %p57 = scmp.ne.s32.totalorder %s48, %s49
      %p58 = scmp.eq.s32.totalorder %s17, 0
      %p59 = por %p57, %p58
      %p60 = scmp.ne.s32.totalorder %s48, %s49
      %p61 = scmp.eq.s32.totalorder %s18, 1
      %p62 = por %p60, %p61
      %p64 = scmp.ne.s32.totalorder %s49, %s63
      %p65 = scmp.eq.s32.totalorder %s18, 0
      %p66 = por %p64, %p65
      %s68 = sadd.s32 %s67, 1
      %p71 = scmp.eq.s32.totalorder %s12, 1
      %p72 = scmp.ne.s32.totalorder %s67, %s69
      %p73 = scmp.eq.s32.totalorder %s12, 0
      %p74 = por %p72, %p73
      %p75 = scmp.ne.s32.totalorder %s67, %s69
      %p76 = scmp.eq.s32.totalorder %s17, 1
      %p77 = por %p75, %p76
      %p78 = scmp.ne.s32.totalorder %s69, %s70
      %p79 = scmp.eq.s32.totalorder %s17, 0
      %p80 = por %p78, %p79
      %p81 = scmp.ne.s32.totalorder %s69, %s70
      %p82 = scmp.eq.s32.totalorder %s18, 1
      %p83 = por %p81, %p82
      %p85 = scmp.ne.s32.totalorder %s70, %s84
      %p86 = scmp.eq.s32.totalorder %s18, 0
      %p87 = por %p85, %p86
      %s88 = ssub.s32 %s12, %s19
      %p89 = scmp.eq.s32.totalorder %s88, 0
      %s91 = sadd.s32 %s90, 1
      %s92 = scalar_select %p89, %s90, %s91
      %p95 = pneg %p89
      %p96 = scmp.eq.s32.totalorder %s12, 1
      %p97 = por %p95, %p96
      %p98 = scmp.ne.s32.totalorder %s90, %s93
      %p99 = scmp.eq.s32.totalorder %s12, 0
      %p100 = por %p98, %p99
      %p101 = scmp.ne.s32.totalorder %s90, %s93
      %p102 = scmp.eq.s32.totalorder %s17, 1
      %p103 = por %p101, %p102
      %p104 = scmp.ne.s32.totalorder %s93, %s94
      %p105 = scmp.eq.s32.totalorder %s17, 0
      %p106 = por %p104, %p105
      %p107 = scmp.ne.s32.totalorder %s93, %s94
      %p108 = scmp.eq.s32.totalorder %s18, 1
      %p109 = por %p107, %p108
      %p111 = scmp.ne.s32.totalorder %s94, %s110
      %p112 = scmp.eq.s32.totalorder %s18, 0
      %p113 = por %p111, %p112
      %p114 = scmp.le.s32.totalorder 1, %s12
      %p115 = scmp.lt.s32.totalorder %s12, 3
      %p116 = pnand %p114, %p115
      %p117 = pneg %p116
      // Predicated region
      $region9: #{forward.25} parent=5 // pred_check
        _
      $region10: #{forward.25} parent=5 // pred_check_branch
        %119 = sbr.rel (%p116) target = $region12
      $region11: #{forward.25} parent=5 // pred_region
        %s120 = ssub.s32 %s12, 1
        // Predicated region
        $region13: #{forward.25} parent=11 // pred_check
          %p121 = pneg %p59
        $region14: #{forward.25} parent=11 // pred_check_branch
          %123 = sbr.rel (%p121) target = $region16
        $region15: #{forward.25} parent=11 // pred_region
          _
        $region16: #{forward.25} parent=11 // pred_fallthru
          _
        // Predicated region
        $region17: #{forward.25} parent=11 // pred_check
          %p124 = pneg %p80
        $region18: #{forward.25} parent=11 // pred_check_branch
          %126 = sbr.rel (%p124) target = $region20
        $region19: #{forward.25} parent=11 // pred_region
          _
        $region20: #{forward.25} parent=11 // pred_fallthru
          _
      $region12: #{forward.25} parent=5 // pred_fallthru
        _
      %p127 = scmp.lt.s32.totalorder %s12, 2
      // Predicated region
      $region21: #{forward.25} parent=5 // pred_check
        %p128 = pneg %p127
      $region22: #{forward.25} parent=5 // pred_check_branch
        %130 = sbr.rel (%p128) target = $region24
      $region23: #{forward.25} parent=5 // pred_region
        // Predicated region
        $region25: #{forward.25} parent=23 // pred_check
          %p131 = pneg %p32
        $region26: #{forward.25} parent=23 // pred_check_branch
          %133 = sbr.rel (%p131) target = $region28
        $region27: #{forward.25} parent=23 // pred_region
          %p134 = scmp.lt.s32.totalorder %s12, 1
          %s135 = scalar_select %p134, %s12, 1
          %s136 = smul.addr %s135, 8
          %s137 = scalar_lea.vmem %s0, %s136
        $region28: #{forward.25} parent=23 // pred_fallthru
          _
      $region24: #{forward.25} parent=5 // pred_fallthru
        _
      %p138 = scmp.le.s32.totalorder 1, %s12
      %p139 = scmp.lt.s32.totalorder %s12, 3
      %p140 = pnand %p138, %p139
      %p141 = pneg %p140
      // Predicated region
      $region29: #{forward.25} parent=5 // pred_check
        _
      $region30: #{forward.25} parent=5 // pred_check_branch
        %143 = sbr.rel (%p140) target = $region32
      $region31: #{forward.25} parent=5 // pred_region
        %s144 = ssub.s32 %s12, 1
        %p145 = scmp.lt.s32.totalorder %s17, 1
        %s146 = scalar_select %p145, %s17, 1
        %s147 = smul.addr %s146, 8
        %s148 = scalar_lea.vmem %s0, %s147
        %p149 = pneg %p38
        %p150 = pneg %p35
        %p151 = pneg %p59
        %p152 = pneg %p56
        %p153 = pneg %p80
        %p154 = pneg %p77
        %p155 = pneg %p106
        %p156 = pneg %p103
        %s157 = sand.u32 %s93, 1
        %s158 = scalar_lea.sflag [#allocation3], %s157
        %s159 = sand.u32 %s93, 1
        %s160 = smul.addr %s159, 8
        %s161 = scalar_lea.vmem [#allocation2], %s160
        %p162 = scmp.lt.s32.totalorder %s17, 1
        %s163 = scalar_select %p162, %s17, 1
        %s164 = smul.addr %s163, 8
        %s165 = scalar_lea.vmem %s0, %s164
        %v167 = vld [vmem:[%s165] sm:$0xff]
        %v168 = vpack.c.bf16 %v167, %v167
        %v169 = vld [vmem:[%s1] sm:$0xf]
        %v170 = vld [vmem:[%s1 + $0x4] sm:$0xf]
        %v171 = vld [vmem:[%s1 + $0x8] sm:$0xf]
        %v172 = vld [vmem:[%s1 + $0xc] sm:$0xf]
        %v173 = vld [vmem:[%s2] sm:$0x1]
        %v175 = vlaneseq
        %v176 = vshrl.u32 %v175, 7
        %v177 = vsub.s32 0, %v176
        %v178 = vrot.slane %v173, %v177
        %v184 = vunpack.c.l.b16 %v169
        %v185 = vunpack.c.l.b16 %v170
        %v186 = vunpack.c.l.b16 %v171
        %v187 = vunpack.c.l.b16 %v172
        %v188 = vpack.c.b16 %v185, %v184
        %v189 = vpack.c.b16 %v187, %v186
        %vm192 = vcmask 261120
        %v194 = vsel %vm192, %v168, 0
        %196 = vmatprep.subr.bf16.mxu0 0
        %197 = vmatpush1.bf16.msra.mxu0 0
        %198 = vmatprep.subr.bf16.mxu0 0
        %199 = vmatpush1.bf16.msra.mxu0 0
        %200 = vmatprep.subr.bf16.mxu0 0
        %201 = vmatpush1.bf16.msra.mxu0 0
        %202 = vmatprep.subr.bf16.mxu0 0
        %203 = vmatpush1.bf16.msra.mxu0 0
        %204 = vmatprep.subr.bf16.mxu0 0
        %205 = vmatpush1.bf16.msra.mxu0 0
        %206 = vmatprep.subr.bf16.mxu0 0
        %207 = vmatpush1.bf16.msra.mxu0 0
        %208 = vmatprep.subr.bf16.mxu0 0
        %209 = vmatpush1.bf16.msra.mxu0 %v189
        %210 = vmatprep.subr.bf16.mxu0 0
        %211 = vmatpush1.bf16.msra.mxu0 %v188
        %212 = vmatprep.subr.bf16.mxu0 0
        %213 = vmatpush2.bf16.msra.mxu0 0
        %214 = vmatprep.subr.bf16.mxu0 0
        %215 = vmatpush2.bf16.msra.mxu0 0
        %216 = vmatprep.subr.bf16.mxu0 0
        %217 = vmatpush2.bf16.msra.mxu0 0
        %218 = vmatprep.subr.bf16.mxu0 0
        %219 = vmatpush2.bf16.msra.mxu0 0
        %220 = vmatprep.subr.bf16.mxu0 0
        %221 = vmatpush2.bf16.msra.mxu0 0
        %222 = vmatprep.subr.bf16.mxu0 0
        %223 = vmatpush2.bf16.msra.mxu0 0
        %224 = vmatprep.subr.bf16.mxu0 0
        %225 = vmatpush2.bf16.msra.mxu0 0
        %226 = vmatprep.subr.bf16.mxu0 0
        %227 = vmatpush2.bf16.msra.mxu0 0
        %228 = vmatprep.mubr.bf16.mxu0 0
        %229 = vmatmul.mubr.bf16.gmra.mxu0 %v194
        %v230 = vpop.f32.mrf.mxu0
        %v231 = vadd.f32 %v178, %v230
        %v232 = vpop.f32.mrf.mxu0
        %v233 = vpop.f32.mrf.mxu0
        %v234 = vpop.f32.mrf.mxu0
        %235 = vdwg.mxu0
        %vm236 = vcmask 523264
        %v237 = vsel %vm236, %v231, -inf
        %238 = vmax.xlane.f32.xlu0 %v237
        %v239 = vpop.xlane.xlu0 %238
        %v240 = vsub.f32 %v231, %v239
        %v241 = vmul.f32 %v240, 1.442695
        %v242 = vpow.pop %v241
        %v243 = vsel %vm236, %v242, 0.0
        %244 = vadd.xlane.f32.xlu0 %v243
        %v245 = vpop.xlane.xlu0 %244
        %v246 = vlog2.pop %v245
        %v247 = vmul.f32 %v246, 0.6931472
        %v248 = vsub.f32 %v240, %v247
        %249 = vst.msk [vmem:[%s161] sm:$0xff] %vm236, %v248
        %s250 = sand.u32 %s93, 1
        %s251 = scalar_lea.sflag [#allocation3], %s250
        %s252 = sand.u32 %s93, 1
        %s253 = smul.addr %s252, 8
        %s254 = scalar_lea.vmem [#allocation2], %s253
        // Predicated region
        $region33: #{forward.25} parent=31 // pred_check
          %p255 = pneg %p103
        $region34: #{forward.25} parent=31 // pred_check_branch
          %257 = sbr.rel (%p255) target = $region36
        $region35: #{forward.25} parent=31 // pred_region
          %s259 = ssub.s32 128, 128
          %260 = vsyncadd %s251, %s259
          %s261 = smul.addr %s17, 128
          %s262 = scalar_lea.hbm %s3, %s261
          %s264 = sshll.u32 %s254, 4
          %s265 = int_to_ptr.vmem [resolvable:$true] %s264
          %267 = dma.vmem_to_hbm [thread:$0]  %s265, 128, %s262, %s251
        $region36: #{forward.25} parent=31 // pred_fallthru
          _
      $region32: #{forward.25} parent=5 // pred_fallthru
        _
      %p268 = scmp.le.s32.totalorder 2, %s12
      // Predicated region
      $region37: #{forward.25} parent=5 // pred_check
        %p269 = pneg %p268
      $region38: #{forward.25} parent=5 // pred_check_branch
        %271 = sbr.rel (%p269) target = $region40
      $region39: #{forward.25} parent=5 // pred_region
        %s272 = ssub.s32 %s12, 2
        // Predicated region
        $region41: #{forward.25} parent=39 // pred_check
          %p273 = pneg %p109
        $region42: #{forward.25} parent=39 // pred_check_branch
          %275 = sbr.rel (%p273) target = $region44
        $region43: #{forward.25} parent=39 // pred_region
          %s276 = sand.u32 %s94, 1
          %s277 = scalar_lea.sflag [#allocation3], %s276
          %s278 = sand.u32 %s94, 1
          %s279 = smul.addr %s278, 8
          %s280 = scalar_lea.vmem [#allocation2], %s279
          %281 = dma.done %s277, 128
        $region44: #{forward.25} parent=39 // pred_fallthru
          _
      $region40: #{forward.25} parent=5 // pred_fallthru
        _
    $region6: #{forward.25} parent=1 // loop_footer
      %s16 = sadd.s32 1, %s12
    $region7: #{forward.25} parent=1 // loop_footer_branch
      %11 = sbr.rel target = $region3
    $region8: #{forward.25} parent=1 // loop_exit
      _
    %282 = vsyncpa [#allocation3], 1
    %s283 = scalar_lea.sflag [#allocation3], 1
    %284 = vsyncpa %s283, 1

// kernel: forward.13
$region0: #{forward.13}
  #allocation0 [shape = 'u32[]', space=smem, size = 0x4, offset = 0x4, fixed_abs, tag = 'smem constant byte address 0x4 - core index']
  #allocation1 [shape = 'u32[144,128]{1,0:T(1,128)}', space=vmem, size = 0x12000, scoped, tag = 'internal scratch']
  %s0 = inlined_call_operand.vmem [shape: f32[2,8,32], index: 0, kind: input, shape index: {}, may-alias: {0,1}]
  %s1 = inlined_call_operand.vmem [shape: f32[2,8,32], index: 1, kind: input, shape index: {}, may-alias: {0,1}]
  %s2 = inlined_call_operand.vmem [shape: f32[2,8,8], index: 2, kind: input, shape index: {}]
  %s3 = inlined_call_operand.vmem [shape: bf16[4,32,8], index: 3, kind: input, shape index: {}]
  %s4 = inlined_call_operand.vmem [shape: bf16[4,32,8], index: 4, kind: input, shape index: {}]
  %s5 = inlined_call_operand.vmem [shape: bf16[4,32,8], index: 5, kind: input, shape index: {}]
  %s6 = inlined_call_operand.vmem [shape: f32[4,1,8], index: 6, kind: input, shape index: {}]
  %s7 = inlined_call_operand.vmem [shape: f32[4,1,8], index: 7, kind: input, shape index: {}]
  %s8 = inlined_call_operand.vmem [shape: f32[4,1,8], index: 8, kind: input, shape index: {}]
  %s9 = inlined_call_operand.vmem [shape: bf16[4,8,32], index: 9, kind: input, shape index: {}]
  %s10 = inlined_call_operand.vmem [shape: f32[1,32], index: 10, kind: input, shape index: {}]
  %s11 = inlined_call_operand.vmem [shape: f32[1,32], index: 11, kind: input, shape index: {}]
  %s12 = inlined_call_operand.vmem [shape: f32[1,32], index: 12, kind: input, shape index: {}]
  %s13 = inlined_call_operand.vmem [shape: f32[2,8,32], index: 13, kind: output, shape index: {}]
  %s14 = sld [smem:[#allocation0]]
  $region85: #{forward.13} parent=0
    _
  %s16 = ssub.s32 1, %s14
  %s17 = scalar_select 0, %s16, %s14
  loop: start=0, step=1, limit=4
  $region2: #{forward.13} parent=0 // loop_pre_header
    _
  $region3: #{forward.13} parent=0 // loop_header
    %s19 = sphi 0, %s23
    %p20 = scmp.ge.s32.totalorder %s19, 4
    %s29 = sphi 0, %s31
    %s32 = sphi 0, %s29
    %s33 = sphi 0, %s32
    %s49 = sphi 0, %s33
    %s55 = sphi 0, %s57
    %s58 = sphi 0, %s55
    %s59 = sphi 0, %s58
    %s75 = sphi 0, %s59
    %s81 = sphi 0, %s83
    %s84 = sphi 0, %s81
    %s85 = sphi 0, %s84
    %s101 = sphi 0, %s85
    %s105 = sphi 0, %s105
    %s107 = sphi 0, %s105
    %s108 = sphi 0, %s107
    %s122 = sphi 0, %s108
    %s126 = sphi 0, %s126
    %s128 = sphi 0, %s126
    %s129 = sphi 0, %s128
    %s143 = sphi 0, %s129
    %s147 = sphi 0, %s147
    %s149 = sphi 0, %s147
    %s150 = sphi 0, %s149
    %s164 = sphi 0, %s150
    %s168 = sphi 0, %s168
    %s170 = sphi 0, %s168
    %s171 = sphi 0, %s170
    %s185 = sphi 0, %s171
    %s189 = sphi 0, %s189
    %s191 = sphi 0, %s189
    %s192 = sphi 0, %s191
    %s206 = sphi 0, %s192
    %s210 = sphi 0, %s210
    %s212 = sphi 0, %s210
    %s213 = sphi 0, %s212
    %s227 = sphi 0, %s213
    %s231 = sphi 0, %s231
    %s233 = sphi 0, %s231
    %s234 = sphi 0, %s233
    %s248 = sphi 0, %s234
    %s252 = sphi 0, %s252
    %s254 = sphi 0, %s252
    %s255 = sphi 0, %s254
    %s269 = sphi 0, %s255
    %s273 = sphi 0, %s273
    %s275 = sphi 0, %s273
    %s276 = sphi 0, %s275
    %s290 = sphi 0, %s276
    %s294 = sphi 0, %s294
    %s296 = sphi 0, %s294
    %s297 = sphi 0, %s296
    %s311 = sphi 0, %s297
    %s317 = sphi 0, %s319
    %s320 = sphi 0, %s317
    %s321 = sphi 0, %s320
    %s337 = sphi 0, %s321
  $region4: #{forward.13} parent=0 // loop_header_branch
    %22 = sbr.rel (%p20) target = $region8
  $region5: #{forward.13} parent=0 // loop_body
    %s24 = ssub.s32 %s19, 1
    %s25 = ssub.s32 %s19, 2
    %s26 = sadd.s32 %s19, 1
    %s27 = ssub.s32 %s19, %s26
    %p28 = scmp.eq.s32.totalorder %s27, 0
    %s30 = sadd.s32 %s29, 1
    %s31 = scalar_select %p28, %s29, %s30
    %p34 = pneg %p28
    %p35 = scmp.eq.s32.totalorder %s19, 1
    %p36 = por %p34, %p35
    %p37 = scmp.ne.s32.totalorder %s29, %s32
    %p38 = scmp.eq.s32.totalorder %s19, 0
    %p39 = por %p37, %p38
    %p40 = scmp.ne.s32.totalorder %s29, %s32
    %p41 = scmp.eq.s32.totalorder %s24, 1
    %p42 = por %p40, %p41
    %p43 = scmp.ne.s32.totalorder %s32, %s33
    %p44 = scmp.eq.s32.totalorder %s24, 0
    %p45 = por %p43, %p44
    %p46 = scmp.ne.s32.totalorder %s32, %s33
    %p47 = scmp.eq.s32.totalorder %s25, 1
    %p48 = por %p46, %p47
    %p50 = scmp.ne.s32.totalorder %s33, %s49
    %p51 = scmp.eq.s32.totalorder %s25, 0
    %p52 = por %p50, %p51
    %s53 = ssub.s32 %s19, %s26
    %p54 = scmp.eq.s32.totalorder %s53, 0
    %s56 = sadd.s32 %s55, 1
    %s57 = scalar_select %p54, %s55, %s56
    %p60 = pneg %p54
    %p61 = scmp.eq.s32.totalorder %s19, 1
    %p62 = por %p60, %p61
    %p63 = scmp.ne.s32.totalorder %s55, %s58
    %p64 = scmp.eq.s32.totalorder %s19, 0
    %p65 = por %p63, %p64
    %p66 = scmp.ne.s32.totalorder %s55, %s58
    %p67 = scmp.eq.s32.totalorder %s24, 1
    %p68 = por %p66, %p67
    %p69 = scmp.ne.s32.totalorder %s58, %s59
    %p70 = scmp.eq.s32.totalorder %s24, 0
    %p71 = por %p69, %p70
    %p72 = scmp.ne.s32.totalorder %s58, %s59
    %p73 = scmp.eq.s32.totalorder %s25, 1
    %p74 = por %p72, %p73
    %p76 = scmp.ne.s32.totalorder %s59, %s75
    %p77 = scmp.eq.s32.totalorder %s25, 0
    %p78 = por %p76, %p77
    %s79 = ssub.s32 %s19, %s26
    %p80 = scmp.eq.s32.totalorder %s79, 0
    %s82 = sadd.s32 %s81, 1
    %s83 = scalar_select %p80, %s81, %s82
    %p86 = pneg %p80
    %p87 = scmp.eq.s32.totalorder %s19, 1
    %p88 = por %p86, %p87
    %p89 = scmp.ne.s32.totalorder %s81, %s84
    %p90 = scmp.eq.s32.totalorder %s19, 0
    %p91 = por %p89, %p90
    %p92 = scmp.ne.s32.totalorder %s81, %s84
    %p93 = scmp.eq.s32.totalorder %s24, 1
    %p94 = por %p92, %p93
    %p95 = scmp.ne.s32.totalorder %s84, %s85
    %p96 = scmp.eq.s32.totalorder %s24, 0
    %p97 = por %p95, %p96
    %p98 = scmp.ne.s32.totalorder %s84, %s85
    %p99 = scmp.eq.s32.totalorder %s25, 1
    %p100 = por %p98, %p99
    %p102 = scmp.ne.s32.totalorder %s85, %s101
    %p103 = scmp.eq.s32.totalorder %s25, 0
    %p104 = por %p102, %p103
    %s106 = sadd.s32 %s105, 1
    %p109 = scmp.eq.s32.totalorder %s19, 1
    %p110 = scmp.ne.s32.totalorder %s105, %s107
    %p111 = scmp.eq.s32.totalorder %s19, 0
    %p112 = por %p110, %p111
    %p113 = scmp.ne.s32.totalorder %s105, %s107
    %p114 = scmp.eq.s32.totalorder %s24, 1
    %p115 = por %p113, %p114
    %p116 = scmp.ne.s32.totalorder %s107, %s108
    %p117 = scmp.eq.s32.totalorder %s24, 0
    %p118 = por %p116, %p117
    %p119 = scmp.ne.s32.totalorder %s107, %s108
    %p120 = scmp.eq.s32.totalorder %s25, 1
    %p121 = por %p119, %p120
    %p123 = scmp.ne.s32.totalorder %s108, %s122
    %p124 = scmp.eq.s32.totalorder %s25, 0
    %p125 = por %p123, %p124
    %s127 = sadd.s32 %s126, 1
    %p130 = scmp.eq.s32.totalorder %s19, 1
    %p131 = scmp.ne.s32.totalorder %s126, %s128
    %p132 = scmp.eq.s32.totalorder %s19, 0
    %p133 = por %p131, %p132
    %p134 = scmp.ne.s32.totalorder %s126, %s128
    %p135 = scmp.eq.s32.totalorder %s24, 1
    %p136 = por %p134, %p135
    %p137 = scmp.ne.s32.totalorder %s128, %s129
    %p138 = scmp.eq.s32.totalorder %s24, 0
    %p139 = por %p137, %p138
    %p140 = scmp.ne.s32.totalorder %s128, %s129
    %p141 = scmp.eq.s32.totalorder %s25, 1
    %p142 = por %p140, %p141
    %p144 = scmp.ne.s32.totalorder %s129, %s143
    %p145 = scmp.eq.s32.totalorder %s25, 0
    %p146 = por %p144, %p145
    %s148 = sadd.s32 %s147, 1
    %p151 = scmp.eq.s32.totalorder %s19, 1
    %p152 = scmp.ne.s32.totalorder %s147, %s149
    %p153 = scmp.eq.s32.totalorder %s19, 0
    %p154 = por %p152, %p153
    %p155 = scmp.ne.s32.totalorder %s147, %s149
    %p156 = scmp.eq.s32.totalorder %s24, 1
    %p157 = por %p155, %p156
    %p158 = scmp.ne.s32.totalorder %s149, %s150
    %p159 = scmp.eq.s32.totalorder %s24, 0
    %p160 = por %p158, %p159
    %p161 = scmp.ne.s32.totalorder %s149, %s150
    %p162 = scmp.eq.s32.totalorder %s25, 1
    %p163 = por %p161, %p162
    %p165 = scmp.ne.s32.totalorder %s150, %s164
    %p166 = scmp.eq.s32.totalorder %s25, 0
    %p167 = por %p165, %p166
    %s169 = sadd.s32 %s168, 1
    %p172 = scmp.eq.s32.totalorder %s19, 1
    %p173 = scmp.ne.s32.totalorder %s168, %s170
    %p174 = scmp.eq.s32.totalorder %s19, 0
    %p175 = por %p173, %p174
    %p176 = scmp.ne.s32.totalorder %s168, %s170
    %p177 = scmp.eq.s32.totalorder %s24, 1
    %p178 = por %p176, %p177
    %p179 = scmp.ne.s32.totalorder %s170, %s171
    %p180 = scmp.eq.s32.totalorder %s24, 0
    %p181 = por %p179, %p180
    %p182 = scmp.ne.s32.totalorder %s170, %s171
    %p183 = scmp.eq.s32.totalorder %s25, 1
    %p184 = por %p182, %p183
    %p186 = scmp.ne.s32.totalorder %s171, %s185
    %p187 = scmp.eq.s32.totalorder %s25, 0
    %p188 = por %p186, %p187
    %s190 = sadd.s32 %s189, 1
    %p193 = scmp.eq.s32.totalorder %s19, 1
    %p194 = scmp.ne.s32.totalorder %s189, %s191
    %p195 = scmp.eq.s32.totalorder %s19, 0
    %p196 = por %p194, %p195
    %p197 = scmp.ne.s32.totalorder %s189, %s191
    %p198 = scmp.eq.s32.totalorder %s24, 1
    %p199 = por %p197, %p198
    %p200 = scmp.ne.s32.totalorder %s191, %s192
    %p201 = scmp.eq.s32.totalorder %s24, 0
    %p202 = por %p200, %p201
    %p203 = scmp.ne.s32.totalorder %s191, %s192
    %p204 = scmp.eq.s32.totalorder %s25, 1
    %p205 = por %p203, %p204
    %p207 = scmp.ne.s32.totalorder %s192, %s206
    %p208 = scmp.eq.s32.totalorder %s25, 0
    %p209 = por %p207, %p208
    %s211 = sadd.s32 %s210, 1
    %p214 = scmp.eq.s32.totalorder %s19, 1
    %p215 = scmp.ne.s32.totalorder %s210, %s212
    %p216 = scmp.eq.s32.totalorder %s19, 0
    %p217 = por %p215, %p216
    %p218 = scmp.ne.s32.totalorder %s210, %s212
    %p219 = scmp.eq.s32.totalorder %s24, 1
    %p220 = por %p218, %p219
    %p221 = scmp.ne.s32.totalorder %s212, %s213
    %p222 = scmp.eq.s32.totalorder %s24, 0
    %p223 = por %p221, %p222
    %p224 = scmp.ne.s32.totalorder %s212, %s213
    %p225 = scmp.eq.s32.totalorder %s25, 1
    %p226 = por %p224, %p225
    %p228 = scmp.ne.s32.totalorder %s213, %s227
    %p229 = scmp.eq.s32.totalorder %s25, 0
    %p230 = por %p228, %p229
    %s232 = sadd.s32 %s231, 1
    %p235 = scmp.eq.s32.totalorder %s19, 1
    %p236 = scmp.ne.s32.totalorder %s231, %s233
    %p237 = scmp.eq.s32.totalorder %s19, 0
    %p238 = por %p236, %p237
    %p239 = scmp.ne.s32.totalorder %s231, %s233
    %p240 = scmp.eq.s32.totalorder %s24, 1
    %p241 = por %p239, %p240
    %p242 = scmp.ne.s32.totalorder %s233, %s234
    %p243 = scmp.eq.s32.totalorder %s24, 0
    %p244 = por %p242, %p243
    %p245 = scmp.ne.s32.totalorder %s233, %s234
    %p246 = scmp.eq.s32.totalorder %s25, 1
    %p247 = por %p245, %p246
    %p249 = scmp.ne.s32.totalorder %s234, %s248
    %p250 = scmp.eq.s32.totalorder %s25, 0
    %p251 = por %p249, %p250
    %s253 = sadd.s32 %s252, 1
    %p256 = scmp.eq.s32.totalorder %s19, 1
    %p257 = scmp.ne.s32.totalorder %s252, %s254
    %p258 = scmp.eq.s32.totalorder %s19, 0
    %p259 = por %p257, %p258
    %p260 = scmp.ne.s32.totalorder %s252, %s254
    %p261 = scmp.eq.s32.totalorder %s24, 1
    %p262 = por %p260, %p261
    %p263 = scmp.ne.s32.totalorder %s254, %s255
    %p264 = scmp.eq.s32.totalorder %s24, 0
    %p265 = por %p263, %p264
    %p266 = scmp.ne.s32.totalorder %s254, %s255
    %p267 = scmp.eq.s32.totalorder %s25, 1
    %p268 = por %p266, %p267
    %p270 = scmp.ne.s32.totalorder %s255, %s269
    %p271 = scmp.eq.s32.totalorder %s25, 0
    %p272 = por %p270, %p271
    %s274 = sadd.s32 %s273, 1
    %p277 = scmp.eq.s32.totalorder %s19, 1
    %p278 = scmp.ne.s32.totalorder %s273, %s275
    %p279 = scmp.eq.s32.totalorder %s19, 0
    %p280 = por %p278, %p279
    %p281 = scmp.ne.s32.totalorder %s273, %s275
    %p282 = scmp.eq.s32.totalorder %s24, 1
    %p283 = por %p281, %p282
    %p284 = scmp.ne.s32.totalorder %s275, %s276
    %p285 = scmp.eq.s32.totalorder %s24, 0
    %p286 = por %p284, %p285
    %p287 = scmp.ne.s32.totalorder %s275, %s276
    %p288 = scmp.eq.s32.totalorder %s25, 1
    %p289 = por %p287, %p288
    %p291 = scmp.ne.s32.totalorder %s276, %s290
    %p292 = scmp.eq.s32.totalorder %s25, 0
    %p293 = por %p291, %p292
    %s295 = sadd.s32 %s294, 1
    %p298 = scmp.eq.s32.totalorder %s19, 1
    %p299 = scmp.ne.s32.totalorder %s294, %s296
    %p300 = scmp.eq.s32.totalorder %s19, 0
    %p301 = por %p299, %p300
    %p302 = scmp.ne.s32.totalorder %s294, %s296
    %p303 = scmp.eq.s32.totalorder %s24, 1
    %p304 = por %p302, %p303
    %p305 = scmp.ne.s32.totalorder %s296, %s297
    %p306 = scmp.eq.s32.totalorder %s24, 0
    %p307 = por %p305, %p306
    %p308 = scmp.ne.s32.totalorder %s296, %s297
    %p309 = scmp.eq.s32.totalorder %s25, 1
    %p310 = por %p308, %p309
    %p312 = scmp.ne.s32.totalorder %s297, %s311
    %p313 = scmp.eq.s32.totalorder %s25, 0
    %p314 = por %p312, %p313
    %s315 = ssub.s32 %s19, %s26
    %p316 = scmp.eq.s32.totalorder %s315, 0
    %s318 = sadd.s32 %s317, 1
    %s319 = scalar_select %p316, %s317, %s318
    %p322 = pneg %p316
    %p323 = scmp.eq.s32.totalorder %s19, 1
    %p324 = por %p322, %p323
    %p325 = scmp.ne.s32.totalorder %s317, %s320
    %p326 = scmp.eq.s32.totalorder %s19, 0
    %p327 = por %p325, %p326
    %p328 = scmp.ne.s32.totalorder %s317, %s320
    %p329 = scmp.eq.s32.totalorder %s24, 1
    %p330 = por %p328, %p329
    %p331 = scmp.ne.s32.totalorder %s320, %s321
    %p332 = scmp.eq.s32.totalorder %s24, 0
    %p333 = por %p331, %p332
    %p334 = scmp.ne.s32.totalorder %s320, %s321
    %p335 = scmp.eq.s32.totalorder %s25, 1
    %p336 = por %p334, %p335
    %p338 = scmp.ne.s32.totalorder %s321, %s337
    %p339 = scmp.eq.s32.totalorder %s25, 0
    %p340 = por %p338, %p339
    %p341 = scmp.le.s32.totalorder 1, %s19
    %p342 = scmp.lt.s32.totalorder %s19, 3
    %p343 = pnand %p341, %p342
    %p344 = pneg %p343
    // Predicated region
    $region9: #{forward.13} parent=5 // pred_check
      _
    $region10: #{forward.13} parent=5 // pred_check_branch
      %346 = sbr.rel (%p343) target = $region12
    $region11: #{forward.13} parent=5 // pred_region
      %s347 = ssub.s32 %s19, 1
      // Predicated region
      $region13: #{forward.13} parent=11 // pred_check
        %p348 = pneg %p118
      $region14: #{forward.13} parent=11 // pred_check_branch
        %350 = sbr.rel (%p348) target = $region16
      $region15: #{forward.13} parent=11 // pred_region
        _
      $region16: #{forward.13} parent=11 // pred_fallthru
        _
      // Predicated region
      $region17: #{forward.13} parent=11 // pred_check
        %p351 = pneg %p139
      $region18: #{forward.13} parent=11 // pred_check_branch
        %353 = sbr.rel (%p351) target = $region20
      $region19: #{forward.13} parent=11 // pred_region
        _
      $region20: #{forward.13} parent=11 // pred_fallthru
        _
      // Predicated region
      $region21: #{forward.13} parent=11 // pred_check
        %p354 = pneg %p160
      $region22: #{forward.13} parent=11 // pred_check_branch
        %356 = sbr.rel (%p354) target = $region24
      $region23: #{forward.13} parent=11 // pred_region
        _
      $region24: #{forward.13} parent=11 // pred_fallthru
        _
      // Predicated region
      $region25: #{forward.13} parent=11 // pred_check
        %p357 = pneg %p181
      $region26: #{forward.13} parent=11 // pred_check_branch
        %359 = sbr.rel (%p357) target = $region28
      $region27: #{forward.13} parent=11 // pred_region
        _
      $region28: #{forward.13} parent=11 // pred_fallthru
        _
      // Predicated region
      $region29: #{forward.13} parent=11 // pred_check
        %p360 = pneg %p202
      $region30: #{forward.13} parent=11 // pred_check_branch
        %362 = sbr.rel (%p360) target = $region32
      $region31: #{forward.13} parent=11 // pred_region
        _
      $region32: #{forward.13} parent=11 // pred_fallthru
        _
      // Predicated region
      $region33: #{forward.13} parent=11 // pred_check
        %p363 = pneg %p223
      $region34: #{forward.13} parent=11 // pred_check_branch
        %365 = sbr.rel (%p363) target = $region36
      $region35: #{forward.13} parent=11 // pred_region
        _
      $region36: #{forward.13} parent=11 // pred_fallthru
        _
      // Predicated region
      $region37: #{forward.13} parent=11 // pred_check
        %p366 = pneg %p244
      $region38: #{forward.13} parent=11 // pred_check_branch
        %368 = sbr.rel (%p366) target = $region40
      $region39: #{forward.13} parent=11 // pred_region
        _
      $region40: #{forward.13} parent=11 // pred_fallthru
        _
      // Predicated region
      $region41: #{forward.13} parent=11 // pred_check
        %p369 = pneg %p265
      $region42: #{forward.13} parent=11 // pred_check_branch
        %371 = sbr.rel (%p369) target = $region44
      $region43: #{forward.13} parent=11 // pred_region
        _
      $region44: #{forward.13} parent=11 // pred_fallthru
        _
      // Predicated region
      $region45: #{forward.13} parent=11 // pred_check
        %p372 = pneg %p286
      $region46: #{forward.13} parent=11 // pred_check_branch
        %374 = sbr.rel (%p372) target = $region48
      $region47: #{forward.13} parent=11 // pred_region
        _
      $region48: #{forward.13} parent=11 // pred_fallthru
        _
      // Predicated region
      $region49: #{forward.13} parent=11 // pred_check
        %p375 = pneg %p307
      $region50: #{forward.13} parent=11 // pred_check_branch
        %377 = sbr.rel (%p375) target = $region52
      $region51: #{forward.13} parent=11 // pred_region
        _
      $region52: #{forward.13} parent=11 // pred_fallthru
        _
    $region12: #{forward.13} parent=5 // pred_fallthru
      _
    %p378 = scmp.lt.s32.totalorder %s19, 2
    // Predicated region
    $region53: #{forward.13} parent=5 // pred_check
      %p379 = pneg %p378
    $region54: #{forward.13} parent=5 // pred_check_branch
      %381 = sbr.rel (%p379) target = $region56
    $region55: #{forward.13} parent=5 // pred_region
      // Predicated region
      $region57: #{forward.13} parent=55 // pred_check
        %p382 = pneg %p39
      $region58: #{forward.13} parent=55 // pred_check_branch
        %384 = sbr.rel (%p382) target = $region60
      $region59: #{forward.13} parent=55 // pred_region
        %p385 = scmp.lt.s32.totalorder %s19, 1
        %s386 = scalar_select %p385, %s19, 1
        %s387 = smul.addr %s386, 8
        %s388 = scalar_lea.vmem %s0, %s387
      $region60: #{forward.13} parent=55 // pred_fallthru
        _
      // Predicated region
      $region61: #{forward.13} parent=55 // pred_check
        %p389 = pneg %p65
      $region62: #{forward.13} parent=55 // pred_check_branch
        %391 = sbr.rel (%p389) target = $region64
      $region63: #{forward.13} parent=55 // pred_region
        %p392 = scmp.lt.s32.totalorder %s19, 1
        %s393 = scalar_select %p392, %s19, 1
        %s394 = smul.addr %s393, 8
        %s395 = scalar_lea.vmem %s1, %s394
      $region64: #{forward.13} parent=55 // pred_fallthru
        _
      // Predicated region
      $region65: #{forward.13} parent=55 // pred_check
        %p396 = pneg %p91
      $region66: #{forward.13} parent=55 // pred_check_branch
        %398 = sbr.rel (%p396) target = $region68
      $region67: #{forward.13} parent=55 // pred_region
        %p399 = scmp.lt.s32.totalorder %s19, 1
        %s400 = scalar_select %p399, %s19, 1
        %s401 = smul.addr %s400, 8
        %s402 = scalar_lea.vmem %s2, %s401
      $region68: #{forward.13} parent=55 // pred_fallthru
        _
    $region56: #{forward.13} parent=5 // pred_fallthru
      _
    %p403 = scmp.le.s32.totalorder 1, %s19
    %p404 = scmp.lt.s32.totalorder %s19, 3
    %p405 = pnand %p403, %p404
    %p406 = pneg %p405
    // Predicated region
    $region69: #{forward.13} parent=5 // pred_check
      _
    $region70: #{forward.13} parent=5 // pred_check_branch
      %408 = sbr.rel (%p405) target = $region72
    $region71: #{forward.13} parent=5 // pred_region
      %s409 = ssub.s32 %s19, 1
      %p410 = scmp.lt.s32.totalorder %s24, 1
      %s411 = scalar_select %p410, %s24, 1
      %s412 = smul.addr %s411, 8
      %s413 = scalar_lea.vmem %s0, %s412
      %p414 = pneg %p45
      %p415 = pneg %p42
      %p416 = scmp.lt.s32.totalorder %s24, 1
      %s417 = scalar_select %p416, %s24, 1
      %s418 = smul.addr %s417, 8
      %s419 = scalar_lea.vmem %s1, %s418
      %p420 = pneg %p71
      %p421 = pneg %p68
      %p422 = scmp.lt.s32.totalorder %s24, 1
      %s423 = scalar_select %p422, %s24, 1
      %s424 = smul.addr %s423, 8
      %s425 = scalar_lea.vmem %s2, %s424
      %p426 = pneg %p97
      %p427 = pneg %p94
      %p428 = pneg %p118
      %p429 = pneg %p115
      %p430 = pneg %p139
      %p431 = pneg %p136
      %p432 = pneg %p160
      %p433 = pneg %p157
      %p434 = pneg %p181
      %p435 = pneg %p178
      %p436 = pneg %p202
      %p437 = pneg %p199
      %p438 = pneg %p223
      %p439 = pneg %p220
      %p440 = pneg %p244
      %p441 = pneg %p241
      %p442 = pneg %p265
      %p443 = pneg %p262
      %p444 = pneg %p286
      %p445 = pneg %p283
      %p446 = pneg %p307
      %p447 = pneg %p304
      %p448 = pneg %p333
      %p449 = pneg %p330
      %p450 = scmp.lt.s32.totalorder %s24, 1
      %s451 = scalar_select %p450, %s24, 1
      %s452 = smul.addr %s451, 8
      %s453 = scalar_lea.vmem %s13, %s452
      %p454 = scmp.lt.s32.totalorder %s24, 1
      %s455 = scalar_select %p454, %s24, 1
      %s456 = smul.addr %s455, 8
      %s457 = scalar_lea.vmem %s0, %s456
      %p458 = scmp.lt.s32.totalorder %s24, 1
      %s459 = scalar_select %p458, %s24, 1
      %s460 = smul.addr %s459, 8
      %s461 = scalar_lea.vmem %s1, %s460
      %p462 = scmp.lt.s32.totalorder %s24, 1
      %s463 = scalar_select %p462, %s24, 1
      %s464 = smul.addr %s463, 8
      %s465 = scalar_lea.vmem %s2, %s464
      %p466 = scmp.lt.s32.totalorder %s24, 1
      %s467 = scalar_select %p466, %s24, 1
      %s468 = smul.addr %s467, 8
      %s469 = scalar_lea.vmem %s13, %s468
      %v471 = vld [vmem:[%s457] sm:$0xff]
      %v472 = vld [vmem:[%s461] sm:$0xff]
      %v473 = vld [vmem:[%s465] sm:$0xff]
      %v474 = vpack.c.bf16 %v471, %v471
      %v475 = vpack.c.bf16 %v472, %v472
      %v476 = vld [vmem:[%s3] sm:$0xf]
      %v477 = vld [vmem:[%s3 + $0x4] sm:$0xf]
      %v478 = vld [vmem:[%s3 + $0x8] sm:$0xf]
      %v479 = vld [vmem:[%s3 + $0xc] sm:$0xf]
      %v480 = vld [vmem:[%s6] sm:$0x1]
      %v482 = vlaneseq
      %v483 = vshrl.u32 %v482, 7
      %v484 = vsub.s32 0, %v483
      %v485 = vrot.slane %v480, %v484
      %v491 = vunpack.c.l.b16 %v476
      %v492 = vunpack.c.l.b16 %v477
      %v493 = vunpack.c.l.b16 %v478
      %v494 = vunpack.c.l.b16 %v479
      %v495 = vpack.c.b16 %v492, %v491
      %v496 = vpack.c.b16 %v494, %v493
      %vm499 = vcmask 261120
      %v501 = vsel %vm499, %v474, 0
      %503 = vmatprep.subr.bf16.mxu0 0
      %504 = vmatpush1.bf16.msra.mxu0 0
      %505 = vmatprep.subr.bf16.mxu0 0
      %506 = vmatpush1.bf16.msra.mxu0 0
      %507 = vmatprep.subr.bf16.mxu0 0
      %508 = vmatpush1.bf16.msra.mxu0 0
      %509 = vmatprep.subr.bf16.mxu0 0
      %510 = vmatpush1.bf16.msra.mxu0 0
      %511 = vmatprep.subr.bf16.mxu0 0
      %512 = vmatpush1.bf16.msra.mxu0 0
      %513 = vmatprep.subr.bf16.mxu0 0
      %514 = vmatpush1.bf16.msra.mxu0 0
      %515 = vmatprep.subr.bf16.mxu0 0
      %516 = vmatpush1.bf16.msra.mxu0 %v496
      %517 = vmatprep.subr.bf16.mxu0 0
      %518 = vmatpush1.bf16.msra.mxu0 %v495
      %519 = vmatprep.subr.bf16.mxu0 0
      %520 = vmatpush2.bf16.msra.mxu0 0
      %521 = vmatprep.subr.bf16.mxu0 0
      %522 = vmatpush2.bf16.msra.mxu0 0
      %523 = vmatprep.subr.bf16.mxu0 0
      %524 = vmatpush2.bf16.msra.mxu0 0
      %525 = vmatprep.subr.bf16.mxu0 0
      %526 = vmatpush2.bf16.msra.mxu0 0
      %527 = vmatprep.subr.bf16.mxu0 0
      %528 = vmatpush2.bf16.msra.mxu0 0
      %529 = vmatprep.subr.bf16.mxu0 0
      %530 = vmatpush2.bf16.msra.mxu0 0
      %531 = vmatprep.subr.bf16.mxu0 0
      %532 = vmatpush2.bf16.msra.mxu0 0
      %533 = vmatprep.subr.bf16.mxu0 0
      %534 = vmatpush2.bf16.msra.mxu0 0
      %535 = vmatprep.mubr.bf16.mxu0 0
      %536 = vmatmul.mubr.bf16.gmra.mxu0 %v501
      %v537 = vpop.f32.mrf.mxu0
      %v538 = vadd.f32 %v485, %v537
      %v539 = vpop.f32.mrf.mxu0
      %v540 = vpop.f32.mrf.mxu0
      %v541 = vpop.f32.mrf.mxu0
      %542 = vdwg.mxu0
      %v543 = vld [vmem:[%s4] sm:$0xf]
      %v544 = vld [vmem:[%s4 + $0x4] sm:$0xf]
      %v545 = vld [vmem:[%s4 + $0x8] sm:$0xf]
      %v546 = vld [vmem:[%s4 + $0xc] sm:$0xf]
      %v547 = vld [vmem:[%s7] sm:$0x1]
      %v549 = vlaneseq
      %v550 = vshrl.u32 %v549, 7
      %v551 = vsub.s32 0, %v550
      %v552 = vrot.slane %v547, %v551
      %v558 = vunpack.c.l.b16 %v543
      %v559 = vunpack.c.l.b16 %v544
      %v560 = vunpack.c.l.b16 %v545
      %v561 = vunpack.c.l.b16 %v546
      %v562 = vpack.c.b16 %v559, %v558
      %v563 = vpack.c.b16 %v561, %v560
      %v567 = vsel %vm499, %v475, 0
      %569 = vmatprep.subr.bf16.mxu0 0
      %570 = vmatpush1.bf16.msra.mxu0 0
      %571 = vmatprep.subr.bf16.mxu0 0
      %572 = vmatpush1.bf16.msra.mxu0 0
      %573 = vmatprep.subr.bf16.mxu0 0
      %574 = vmatpush1.bf16.msra.mxu0 0
      %575 = vmatprep.subr.bf16.mxu0 0
      %576 = vmatpush1.bf16.msra.mxu0 0
      %577 = vmatprep.subr.bf16.mxu0 0
      %578 = vmatpush1.bf16.msra.mxu0 0
      %579 = vmatprep.subr.bf16.mxu0 0
      %580 = vmatpush1.bf16.msra.mxu0 0
      %581 = vmatprep.subr.bf16.mxu0 0
      %582 = vmatpush1.bf16.msra.mxu0 %v563
      %583 = vmatprep.subr.bf16.mxu0 0
      %584 = vmatpush1.bf16.msra.mxu0 %v562
      %585 = vmatprep.subr.bf16.mxu0 0
      %586 = vmatpush2.bf16.msra.mxu0 0
      %587 = vmatprep.subr.bf16.mxu0 0
      %588 = vmatpush2.bf16.msra.mxu0 0
      %589 = vmatprep.subr.bf16.mxu0 0
      %590 = vmatpush2.bf16.msra.mxu0 0
      %591 = vmatprep.subr.bf16.mxu0 0
      %592 = vmatpush2.bf16.msra.mxu0 0
      %593 = vmatprep.subr.bf16.mxu0 0
      %594 = vmatpush2.bf16.msra.mxu0 0
      %595 = vmatprep.subr.bf16.mxu0 0
      %596 = vmatpush2.bf16.msra.mxu0 0
      %597 = vmatprep.subr.bf16.mxu0 0
      %598 = vmatpush2.bf16.msra.mxu0 0
      %599 = vmatprep.subr.bf16.mxu0 0
      %600 = vmatpush2.bf16.msra.mxu0 0
      %601 = vmatprep.mubr.bf16.mxu0 0
      %602 = vmatmul.mubr.bf16.gmra.mxu0 %v567
      %v603 = vpop.f32.mrf.mxu0
      %v604 = vadd.f32 %v552, %v603
      %v605 = vpop.f32.mrf.mxu0
      %v606 = vpop.f32.mrf.mxu0
      %v607 = vpop.f32.mrf.mxu0
      %608 = vdwg.mxu0
      %v609 = vld [vmem:[%s5] sm:$0xf]
      %v610 = vld [vmem:[%s5 + $0x4] sm:$0xf]
      %v611 = vld [vmem:[%s5 + $0x8] sm:$0xf]
      %v612 = vld [vmem:[%s5 + $0xc] sm:$0xf]
      %v613 = vld [vmem:[%s8] sm:$0x1]
      %v615 = vlaneseq
      %v616 = vshrl.u32 %v615, 7
      %v617 = vsub.s32 0, %v616
      %v618 = vrot.slane %v613, %v617
      %v624 = vunpack.c.l.b16 %v609
      %v625 = vunpack.c.l.b16 %v610
      %v626 = vunpack.c.l.b16 %v611
      %v627 = vunpack.c.l.b16 %v612
      %v628 = vpack.c.b16 %v625, %v624
      %v629 = vpack.c.b16 %v627, %v626
      %632 = vmatprep.subr.bf16.mxu0 0
      %633 = vmatpush1.bf16.msra.mxu0 0
      %634 = vmatprep.subr.bf16.mxu0 0
      %635 = vmatpush1.bf16.msra.mxu0 0
      %636 = vmatprep.subr.bf16.mxu0 0
      %637 = vmatpush1.bf16.msra.mxu0 0
      %638 = vmatprep.subr.bf16.mxu0 0
      %639 = vmatpush1.bf16.msra.mxu0 0
      %640 = vmatprep.subr.bf16.mxu0 0
      %641 = vmatpush1.bf16.msra.mxu0 0
      %642 = vmatprep.subr.bf16.mxu0 0
      %643 = vmatpush1.bf16.msra.mxu0 0
      %644 = vmatprep.subr.bf16.mxu0 0
      %645 = vmatpush1.bf16.msra.mxu0 %v629
      %646 = vmatprep.subr.bf16.mxu0 0
      %647 = vmatpush1.bf16.msra.mxu0 %v628
      %648 = vmatprep.subr.bf16.mxu0 0
      %649 = vmatpush2.bf16.msra.mxu0 0
      %650 = vmatprep.subr.bf16.mxu0 0
      %651 = vmatpush2.bf16.msra.mxu0 0
      %652 = vmatprep.subr.bf16.mxu0 0
      %653 = vmatpush2.bf16.msra.mxu0 0
      %654 = vmatprep.subr.bf16.mxu0 0
      %655 = vmatpush2.bf16.msra.mxu0 0
      %656 = vmatprep.subr.bf16.mxu0 0
      %657 = vmatpush2.bf16.msra.mxu0 0
      %658 = vmatprep.subr.bf16.mxu0 0
      %659 = vmatpush2.bf16.msra.mxu0 0
      %660 = vmatprep.subr.bf16.mxu0 0
      %661 = vmatpush2.bf16.msra.mxu0 0
      %662 = vmatprep.subr.bf16.mxu0 0
      %663 = vmatpush2.bf16.msra.mxu0 0
      %664 = vmatprep.mubr.bf16.mxu0 0
      %665 = vmatmul.mubr.bf16.gmra.mxu0 %v567
      %v666 = vpop.f32.mrf.mxu0
      %v667 = vadd.f32 %v618, %v666
      %v668 = vpop.f32.mrf.mxu0
      %v669 = vpop.f32.mrf.mxu0
      %v670 = vpop.f32.mrf.mxu0
      %671 = vdwg.mxu0
      %vm672 = vcmask 64512
      %v674 = vsel %vm672, %v538, 0
      %v677 = vsel %vm672, %v604, 0
      %679 = vmatprep.subr.mxu0 0.0
      %680 = vmatpush1.xpose.msra.mxu0 0.0
      %681 = vmatprep.subr.mxu0 0.0
      %682 = vmatpush1.xpose.msra.mxu0 0.0
      %683 = vmatprep.subr.mxu0 0.0
      %684 = vmatpush1.xpose.msra.mxu0 0.0
      %685 = vmatprep.subr.mxu0 0.0
      %686 = vmatpush1.xpose.msra.mxu0 0.0
      %687 = vmatprep.subr.mxu0 0.0
      %688 = vmatpush1.xpose.msra.mxu0 0.0
      %689 = vmatprep.subr.mxu0 0.0
      %690 = vmatpush1.xpose.msra.mxu0 0.0
      %691 = vmatprep.subr.mxu0 0.0
      %692 = vmatpush1.xpose.msra.mxu0 0.0
      %693 = vmatprep.subr.mxu0 0.0
      %694 = vmatpush1.xpose.msra.mxu0 0.0
      %695 = vmatprep.subr.mxu0 0.0
      %696 = vmatpush1.xpose.msra.mxu0 0.0
      %697 = vmatprep.subr.mxu0 0.0
      %698 = vmatpush1.xpose.msra.mxu0 0.0
      %699 = vmatprep.subr.mxu0 0.0
      %700 = vmatpush1.xpose.msra.mxu0 0.0
      %701 = vmatprep.subr.mxu0 0.0
      %702 = vmatpush1.xpose.msra.mxu0 0.0
      %703 = vmatprep.subr.mxu0 0.0
      %704 = vmatpush1.xpose.msra.mxu0 0.0
      %705 = vmatprep.subr.mxu0 0.0
      %706 = vmatpush1.xpose.msra.mxu0 0.0
      %707 = vmatprep.subr.mxu0 0.0
      %708 = vmatpush1.xpose.msra.mxu0 0.0
      %709 = vmatprep.subr.mxu0 0.0
      %710 = vmatpush1.xpose.msra.mxu0 %v677
      %711 = vmatprep.subr.mxu0 0.0
      %712 = vmatpush2.xpose.msra.mxu0 0.0
      %713 = vmatprep.subr.mxu0 0.0
      %714 = vmatpush2.xpose.msra.mxu0 0.0
      %715 = vmatprep.subr.mxu0 0.0
      %716 = vmatpush2.xpose.msra.mxu0 0.0
      %717 = vmatprep.subr.mxu0 0.0
      %718 = vmatpush2.xpose.msra.mxu0 0.0
      %719 = vmatprep.subr.mxu0 0.0
      %720 = vmatpush2.xpose.msra.mxu0 0.0
      %721 = vmatprep.subr.mxu0 0.0
      %722 = vmatpush2.xpose.msra.mxu0 0.0
      %723 = vmatprep.subr.mxu0 0.0
      %724 = vmatpush2.xpose.msra.mxu0 0.0
      %725 = vmatprep.subr.mxu0 0.0
      %726 = vmatpush2.xpose.msra.mxu0 0.0
      %727 = vmatprep.subr.mxu0 0.0
      %728 = vmatpush2.xpose.msra.mxu0 0.0
      %729 = vmatprep.subr.mxu0 0.0
      %730 = vmatpush2.xpose.msra.mxu0 0.0
      %731 = vmatprep.subr.mxu0 0.0
      %732 = vmatpush2.xpose.msra.mxu0 0.0
      %733 = vmatprep.subr.mxu0 0.0
      %734 = vmatpush2.xpose.msra.mxu0 0.0
      %735 = vmatprep.subr.mxu0 0.0
      %736 = vmatpush2.xpose.msra.mxu0 0.0
      %737 = vmatprep.subr.mxu0 0.0
      %738 = vmatpush2.xpose.msra.mxu0 0.0
      %739 = vmatprep.subr.mxu0 0.0
      %740 = vmatpush2.xpose.msra.mxu0 0.0
      %741 = vmatprep.subr.mxu0 0.0
      %742 = vmatpush2.xpose.msra.mxu0 0.0
      %743 = vmatprep.mubr.f32.mxu0 0.0
      %744 = vmatmul.mubr.f32.gmra.mxu0 %v674
      %v745 = vpop.f32.mrf.mxu0
      %v746 = vadd.f32 0.0, %v745
      %v747 = vpop.f32.mrf.mxu0
      %748 = vdwg.mxu0
      %v749 = vmul.f32 %v746, 0.35355338
      %v750 = vadd.f32 %v749, %v473
      %v751 = vsel %vm672, %v750, -inf
      %752 = vmax.xlane.f32.xlu0 %v751
      %v753 = vpop.xlane.xlu0 %752
      %v754 = vsub.f32 %v750, %v753
      %v755 = vmul.f32 %v754, 1.442695
      %v756 = vpow.pop %v755
      %v757 = vsel %vm672, %v756, 0.0
      %758 = vadd.xlane.f32.xlu0 %v757
      %v759 = vpop.xlane.xlu0 %758
      %v760 = vrcp.pop %v759
      %v761 = vmul.f32 %v756, %v760
      %v763 = vsel %vm672, %v761, 0
      %765 = vmatprep.subr.mxu0 0.0
      %766 = vmatpush1.msra.mxu0 0.0
      %767 = vmatprep.subr.mxu0 0.0
      %768 = vmatpush1.msra.mxu0 0.0
      %769 = vmatprep.subr.mxu0 0.0
      %770 = vmatpush1.msra.mxu0 0.0
      %771 = vmatprep.subr.mxu0 0.0
      %772 = vmatpush1.msra.mxu0 0.0
      %773 = vmatprep.subr.mxu0 0.0
      %774 = vmatpush1.msra.mxu0 0.0
      %775 = vmatprep.subr.mxu0 0.0
      %776 = vmatpush1.msra.mxu0 0.0
      %777 = vmatprep.subr.mxu0 0.0
      %778 = vmatpush1.msra.mxu0 0.0
      %779 = vmatprep.subr.mxu0 0.0
      %780 = vmatpush1.msra.mxu0 0.0
      %781 = vmatprep.subr.mxu0 0.0
      %782 = vmatpush1.msra.mxu0 0.0
      %783 = vmatprep.subr.mxu0 0.0
      %784 = vmatpush1.msra.mxu0 0.0
      %785 = vmatprep.subr.mxu0 0.0
      %786 = vmatpush1.msra.mxu0 0.0
      %787 = vmatprep.subr.mxu0 0.0
      %788 = vmatpush1.msra.mxu0 0.0
      %789 = vmatprep.subr.mxu0 0.0
      %790 = vmatpush1.msra.mxu0 0.0
      %791 = vmatprep.subr.mxu0 0.0
      %792 = vmatpush1.msra.mxu0 0.0
      %793 = vmatprep.subr.mxu0 0.0
      %794 = vmatpush1.msra.mxu0 0.0
      %795 = vmatprep.subr.mxu0 0.0
      %796 = vmatpush1.msra.mxu0 %v667
      %797 = vmatprep.subr.mxu0 0.0
      %798 = vmatpush2.msra.mxu0 0.0
      %799 = vmatprep.subr.mxu0 0.0
      %800 = vmatpush2.msra.mxu0 0.0
      %801 = vmatprep.subr.mxu0 0.0
      %802 = vmatpush2.msra.mxu0 0.0
      %803 = vmatprep.subr.mxu0 0.0
      %804 = vmatpush2.msra.mxu0 0.0
      %805 = vmatprep.subr.mxu0 0.0
      %806 = vmatpush2.msra.mxu0 0.0
      %807 = vmatprep.subr.mxu0 0.0
      %808 = vmatpush2.msra.mxu0 0.0
      %809 = vmatprep.subr.mxu0 0.0
      %810 = vmatpush2.msra.mxu0 0.0
      %811 = vmatprep.subr.mxu0 0.0
      %812 = vmatpush2.msra.mxu0 0.0
      %813 = vmatprep.subr.mxu0 0.0
      %814 = vmatpush2.msra.mxu0 0.0
      %815 = vmatprep.subr.mxu0 0.0
      %816 = vmatpush2.msra.mxu0 0.0
      %817 = vmatprep.subr.mxu0 0.0
      %818 = vmatpush2.msra.mxu0 0.0
      %819 = vmatprep.subr.mxu0 0.0
      %820 = vmatpush2.msra.mxu0 0.0
      %821 = vmatprep.subr.mxu0 0.0
      %822 = vmatpush2.msra.mxu0 0.0
      %823 = vmatprep.subr.mxu0 0.0
      %824 = vmatpush2.msra.mxu0 0.0
      %825 = vmatprep.subr.mxu0 0.0
      %826 = vmatpush2.msra.mxu0 0.0
      %827 = vmatprep.subr.mxu0 0.0
      %828 = vmatpush2.msra.mxu0 0.0
      %829 = vmatprep.mubr.f32.mxu0 0.0
      %830 = vmatmul.mubr.f32.gmra.mxu0 %v763
      %v831 = vpop.f32.mrf.mxu0
      %v832 = vadd.f32 0.0, %v831
      %v833 = vpop.f32.mrf.mxu0
      %834 = vdwg.mxu0
      %v835 = vpack.c.bf16 %v832, %v832
      %v836 = vld [vmem:[%s9] sm:$0xf]
      %s837 = scalar_lea.vmem %s3, 16
      %v838 = vld [vmem:[%s837] sm:$0xf]
      %v839 = vld [vmem:[%s837 + $0x4] sm:$0xf]
      %v840 = vld [vmem:[%s837 + $0x8] sm:$0xf]
      %v841 = vld [vmem:[%s837 + $0xc] sm:$0xf]
      %s842 = scalar_lea.vmem %s6, 1
      %v843 = vld [vmem:[%s842] sm:$0x1]
      %v845 = vlaneseq
      %v846 = vshrl.u32 %v845, 7
      %v847 = vsub.s32 0, %v846
      %v848 = vrot.slane %v843, %v847
      %v854 = vunpack.c.l.b16 %v838
      %v855 = vunpack.c.l.b16 %v839
      %v856 = vunpack.c.l.b16 %v840
      %v857 = vunpack.c.l.b16 %v841
      %v858 = vpack.c.b16 %v855, %v854
      %v859 = vpack.c.b16 %v857, %v856
      %862 = vmatprep.subr.bf16.mxu0 0
      %863 = vmatpush1.bf16.msra.mxu0 0
      %864 = vmatprep.subr.bf16.mxu0 0
      %865 = vmatpush1.bf16.msra.mxu0 0
      %866 = vmatprep.subr.bf16.mxu0 0
      %867 = vmatpush1.bf16.msra.mxu0 0
      %868 = vmatprep.subr.bf16.mxu0 0
      %869 = vmatpush1.bf16.msra.mxu0 0
      %870 = vmatprep.subr.bf16.mxu0 0
      %871 = vmatpush1.bf16.msra.mxu0 0
      %872 = vmatprep.subr.bf16.mxu0 0
      %873 = vmatpush1.bf16.msra.mxu0 0
      %874 = vmatprep.subr.bf16.mxu0 0
      %875 = vmatpush1.bf16.msra.mxu0 %v859
      %876 = vmatprep.subr.bf16.mxu0 0
      %877 = vmatpush1.bf16.msra.mxu0 %v858
      %878 = vmatprep.subr.bf16.mxu0 0
      %879 = vmatpush2.bf16.msra.mxu0 0
      %880 = vmatprep.subr.bf16.mxu0 0
      %881 = vmatpush2.bf16.msra.mxu0 0
      %882 = vmatprep.subr.bf16.mxu0 0
      %883 = vmatpush2.bf16.msra.mxu0 0
      %884 = vmatprep.subr.bf16.mxu0 0
      %885 = vmatpush2.bf16.msra.mxu0 0
      %886 = vmatprep.subr.bf16.mxu0 0
      %887 = vmatpush2.bf16.msra.mxu0 0
      %888 = vmatprep.subr.bf16.mxu0 0
      %889 = vmatpush2.bf16.msra.mxu0 0
      %890 = vmatprep.subr.bf16.mxu0 0
      %891 = vmatpush2.bf16.msra.mxu0 0
      %892 = vmatprep.subr.bf16.mxu0 0
      %893 = vmatpush2.bf16.msra.mxu0 0
      %894 = vmatprep.mubr.bf16.mxu0 0
      %895 = vmatmul.mubr.bf16.gmra.mxu0 %v501
      %v896 = vpop.f32.mrf.mxu0
      %v897 = vadd.f32 %v848, %v896
      %v898 = vpop.f32.mrf.mxu0
      %v899 = vpop.f32.mrf.mxu0
      %v900 = vpop.f32.mrf.mxu0
      %901 = vdwg.mxu0
      %s902 = scalar_lea.vmem %s4, 16
      %v903 = vld [vmem:[%s902] sm:$0xf]
      %v904 = vld [vmem:[%s902 + $0x4] sm:$0xf]
      %v905 = vld [vmem:[%s902 + $0x8] sm:$0xf]
      %v906 = vld [vmem:[%s902 + $0xc] sm:$0xf]
      %s907 = scalar_lea.vmem %s7, 1
      %v908 = vld [vmem:[%s907] sm:$0x1]
      %v910 = vlaneseq
      %v911 = vshrl.u32 %v910, 7
      %v912 = vsub.s32 0, %v911
      %v913 = vrot.slane %v908, %v912
      %v919 = vunpack.c.l.b16 %v903
      %v920 = vunpack.c.l.b16 %v904
      %v921 = vunpack.c.l.b16 %v905
      %v922 = vunpack.c.l.b16 %v906
      %v923 = vpack.c.b16 %v920, %v919
      %v924 = vpack.c.b16 %v922, %v921
      %927 = vmatprep.subr.bf16.mxu0 0
      %928 = vmatpush1.bf16.msra.mxu0 0
      %929 = vmatprep.subr.bf16.mxu0 0
      %930 = vmatpush1.bf16.msra.mxu0 0
      %931 = vmatprep.subr.bf16.mxu0 0
      %932 = vmatpush1.bf16.msra.mxu0 0
      %933 = vmatprep.subr.bf16.mxu0 0
      %934 = vmatpush1.bf16.msra.mxu0 0
      %935 = vmatprep.subr.bf16.mxu0 0
      %936 = vmatpush1.bf16.msra.mxu0 0
      %937 = vmatprep.subr.bf16.mxu0 0
      %938 = vmatpush1.bf16.msra.mxu0 0
      %939 = vmatprep.subr.bf16.mxu0 0
      %940 = vmatpush1.bf16.msra.mxu0 %v924
      %941 = vmatprep.subr.bf16.mxu0 0
      %942 = vmatpush1.bf16.msra.mxu0 %v923
      %943 = vmatprep.subr.bf16.mxu0 0
      %944 = vmatpush2.bf16.msra.mxu0 0
      %945 = vmatprep.subr.bf16.mxu0 0
      %946 = vmatpush2.bf16.msra.mxu0 0
      %947 = vmatprep.subr.bf16.mxu0 0
      %948 = vmatpush2.bf16.msra.mxu0 0
      %949 = vmatprep.subr.bf16.mxu0 0
      %950 = vmatpush2.bf16.msra.mxu0 0
      %951 = vmatprep.subr.bf16.mxu0 0
      %952 = vmatpush2.bf16.msra.mxu0 0
      %953 = vmatprep.subr.bf16.mxu0 0
      %954 = vmatpush2.bf16.msra.mxu0 0
      %955 = vmatprep.subr.bf16.mxu0 0
      %956 = vmatpush2.bf16.msra.mxu0 0
      %957 = vmatprep.subr.bf16.mxu0 0
      %958 = vmatpush2.bf16.msra.mxu0 0
      %959 = vmatprep.mubr.bf16.mxu0 0
      %960 = vmatmul.mubr.bf16.gmra.mxu0 %v567
      %v961 = vpop.f32.mrf.mxu0
      %v962 = vadd.f32 %v913, %v961
      %v963 = vpop.f32.mrf.mxu0
      %v964 = vpop.f32.mrf.mxu0
      %v965 = vpop.f32.mrf.mxu0
      %966 = vdwg.mxu0
      %s967 = scalar_lea.vmem %s5, 16
      %v968 = vld [vmem:[%s967] sm:$0xf]
      %v969 = vld [vmem:[%s967 + $0x4] sm:$0xf]
      %v970 = vld [vmem:[%s967 + $0x8] sm:$0xf]
      %v971 = vld [vmem:[%s967 + $0xc] sm:$0xf]
      %s972 = scalar_lea.vmem %s8, 1
      %v973 = vld [vmem:[%s972] sm:$0x1]
      %v975 = vlaneseq
      %v976 = vshrl.u32 %v975, 7
      %v977 = vsub.s32 0, %v976
      %v978 = vrot.slane %v973, %v977
      %v984 = vunpack.c.l.b16 %v968
      %v985 = vunpack.c.l.b16 %v969
      %v986 = vunpack.c.l.b16 %v970
      %v987 = vunpack.c.l.b16 %v971
      %v988 = vpack.c.b16 %v985, %v984
      %v989 = vpack.c.b16 %v987, %v986
      %992 = vmatprep.subr.bf16.mxu0 0
      %993 = vmatpush1.bf16.msra.mxu0 0
      %994 = vmatprep.subr.bf16.mxu0 0
      %995 = vmatpush1.bf16.msra.mxu0 0
      %996 = vmatprep.subr.bf16.mxu0 0
      %997 = vmatpush1.bf16.msra.mxu0 0
      %998 = vmatprep.subr.bf16.mxu0 0
      %999 = vmatpush1.bf16.msra.mxu0 0
      %1000 = vmatprep.subr.bf16.mxu0 0
      %1001 = vmatpush1.bf16.msra.mxu0 0
      %1002 = vmatprep.subr.bf16.mxu0 0
      %1003 = vmatpush1.bf16.msra.mxu0 0
      %1004 = vmatprep.subr.bf16.mxu0 0
      %1005 = vmatpush1.bf16.msra.mxu0 %v989
      %1006 = vmatprep.subr.bf16.mxu0 0
      %1007 = vmatpush1.bf16.msra.mxu0 %v988
      %1008 = vmatprep.subr.bf16.mxu0 0
      %1009 = vmatpush2.bf16.msra.mxu0 0
      %1010 = vmatprep.subr.bf16.mxu0 0
      %1011 = vmatpush2.bf16.msra.mxu0 0
      %1012 = vmatprep.subr.bf16.mxu0 0
      %1013 = vmatpush2.bf16.msra.mxu0 0
      %1014 = vmatprep.subr.bf16.mxu0 0
      %1015 = vmatpush2.bf16.msra.mxu0 0
      %1016 = vmatprep.subr.bf16.mxu0 0
      %1017 = vmatpush2.bf16.msra.mxu0 0
      %1018 = vmatprep.subr.bf16.mxu0 0
      %1019 = vmatpush2.bf16.msra.mxu0 0
      %1020 = vmatprep.subr.bf16.mxu0 0
      %1021 = vmatpush2.bf16.msra.mxu0 0
      %1022 = vmatprep.subr.bf16.mxu0 0
      %1023 = vmatpush2.bf16.msra.mxu0 0
      %1024 = vmatprep.mubr.bf16.mxu0 0
      %1025 = vmatmul.mubr.bf16.gmra.mxu0 %v567
      %v1026 = vpop.f32.mrf.mxu0
      %v1027 = vadd.f32 %v978, %v1026
      %v1028 = vpop.f32.mrf.mxu0
      %v1029 = vpop.f32.mrf.mxu0
      %v1030 = vpop.f32.mrf.mxu0
      %1031 = vdwg.mxu0
      %v1033 = vsel %vm672, %v897, 0
      %v1036 = vsel %vm672, %v962, 0
      %1038 = vmatprep.subr.mxu0 0.0
      %1039 = vmatpush1.xpose.msra.mxu0 0.0
      %1040 = vmatprep.subr.mxu0 0.0
      %1041 = vmatpush1.xpose.msra.mxu0 0.0
      %1042 = vmatprep.subr.mxu0 0.0
      %1043 = vmatpush1.xpose.msra.mxu0 0.0
      %1044 = vmatprep.subr.mxu0 0.0
      %1045 = vmatpush1.xpose.msra.mxu0 0.0
      %1046 = vmatprep.subr.mxu0 0.0
      %1047 = vmatpush1.xpose.msra.mxu0 0.0
      %1048 = vmatprep.subr.mxu0 0.0
      %1049 = vmatpush1.xpose.msra.mxu0 0.0
      %1050 = vmatprep.subr.mxu0 0.0
      %1051 = vmatpush1.xpose.msra.mxu0 0.0
      %1052 = vmatprep.subr.mxu0 0.0
      %1053 = vmatpush1.xpose.msra.mxu0 0.0
      %1054 = vmatprep.subr.mxu0 0.0
      %1055 = vmatpush1.xpose.msra.mxu0 0.0
      %1056 = vmatprep.subr.mxu0 0.0
      %1057 = vmatpush1.xpose.msra.mxu0 0.0
      %1058 = vmatprep.subr.mxu0 0.0
      %1059 = vmatpush1.xpose.msra.mxu0 0.0
      %1060 = vmatprep.subr.mxu0 0.0
      %1061 = vmatpush1.xpose.msra.mxu0 0.0
      %1062 = vmatprep.subr.mxu0 0.0
      %1063 = vmatpush1.xpose.msra.mxu0 0.0
      %1064 = vmatprep.subr.mxu0 0.0
      %1065 = vmatpush1.xpose.msra.mxu0 0.0
      %1066 = vmatprep.subr.mxu0 0.0
      %1067 = vmatpush1.xpose.msra.mxu0 0.0
      %1068 = vmatprep.subr.mxu0 0.0
      %1069 = vmatpush1.xpose.msra.mxu0 %v1036
      %1070 = vmatprep.subr.mxu0 0.0
      %1071 = vmatpush2.xpose.msra.mxu0 0.0
      %1072 = vmatprep.subr.mxu0 0.0
      %1073 = vmatpush2.xpose.msra.mxu0 0.0
      %1074 = vmatprep.subr.mxu0 0.0
      %1075 = vmatpush2.xpose.msra.mxu0 0.0
      %1076 = vmatprep.subr.mxu0 0.0
      %1077 = vmatpush2.xpose.msra.mxu0 0.0
      %1078 = vmatprep.subr.mxu0 0.0
      %1079 = vmatpush2.xpose.msra.mxu0 0.0
      %1080 = vmatprep.subr.mxu0 0.0
      %1081 = vmatpush2.xpose.msra.mxu0 0.0
      %1082 = vmatprep.subr.mxu0 0.0
      %1083 = vmatpush2.xpose.msra.mxu0 0.0
      %1084 = vmatprep.subr.mxu0 0.0
      %1085 = vmatpush2.xpose.msra.mxu0 0.0
      %1086 = vmatprep.subr.mxu0 0.0
      %1087 = vmatpush2.xpose.msra.mxu0 0.0
      %1088 = vmatprep.subr.mxu0 0.0
      %1089 = vmatpush2.xpose.msra.mxu0 0.0
      %1090 = vmatprep.subr.mxu0 0.0
      %1091 = vmatpush2.xpose.msra.mxu0 0.0
      %1092 = vmatprep.subr.mxu0 0.0
      %1093 = vmatpush2.xpose.msra.mxu0 0.0
      %1094 = vmatprep.subr.mxu0 0.0
      %1095 = vmatpush2.xpose.msra.mxu0 0.0
      %1096 = vmatprep.subr.mxu0 0.0
      %1097 = vmatpush2.xpose.msra.mxu0 0.0
      %1098 = vmatprep.subr.mxu0 0.0
      %1099 = vmatpush2.xpose.msra.mxu0 0.0
      %1100 = vmatprep.subr.mxu0 0.0
      %1101 = vmatpush2.xpose.msra.mxu0 0.0
      %1102 = vmatprep.mubr.f32.mxu0 0.0
      %1103 = vmatmul.mubr.f32.gmra.mxu0 %v1033
      %v1104 = vpop.f32.mrf.mxu0
      %v1105 = vadd.f32 0.0, %v1104
      %v1106 = vpop.f32.mrf.mxu0
      %1107 = vdwg.mxu0
      %v1108 = vmul.f32 %v1105, 0.35355338
      %v1109 = vadd.f32 %v1108, %v473
      %v1110 = vsel %vm672, %v1109, -inf
      %1111 = vmax.xlane.f32.xlu0 %v1110
      %v1112 = vpop.xlane.xlu0 %1111
      %v1113 = vsub.f32 %v1109, %v1112
      %v1114 = vmul.f32 %v1113, 1.442695
      %v1115 = vpow.pop %v1114
      %v1116 = vsel %vm672, %v1115, 0.0
      %1117 = vadd.xlane.f32.xlu0 %v1116
      %v1118 = vpop.xlane.xlu0 %1117
      %v1119 = vrcp.pop %v1118
      %v1120 = vmul.f32 %v1115, %v1119
      %v1122 = vsel %vm672, %v1120, 0
      %1124 = vmatprep.subr.mxu0 0.0
      %1125 = vmatpush1.msra.mxu0 0.0
      %1126 = vmatprep.subr.mxu0 0.0
      %1127 = vmatpush1.msra.mxu0 0.0
      %1128 = vmatprep.subr.mxu0 0.0
      %1129 = vmatpush1.msra.mxu0 0.0
      %1130 = vmatprep.subr.mxu0 0.0
      %1131 = vmatpush1.msra.mxu0 0.0
      %1132 = vmatprep.subr.mxu0 0.0
      %1133 = vmatpush1.msra.mxu0 0.0
      %1134 = vmatprep.subr.mxu0 0.0
      %1135 = vmatpush1.msra.mxu0 0.0
      %1136 = vmatprep.subr.mxu0 0.0
      %1137 = vmatpush1.msra.mxu0 0.0
      %1138 = vmatprep.subr.mxu0 0.0
      %1139 = vmatpush1.msra.mxu0 0.0
      %1140 = vmatprep.subr.mxu0 0.0
      %1141 = vmatpush1.msra.mxu0 0.0
      %1142 = vmatprep.subr.mxu0 0.0
      %1143 = vmatpush1.msra.mxu0 0.0
      %1144 = vmatprep.subr.mxu0 0.0
      %1145 = vmatpush1.msra.mxu0 0.0
      %1146 = vmatprep.subr.mxu0 0.0
      %1147 = vmatpush1.msra.mxu0 0.0
      %1148 = vmatprep.subr.mxu0 0.0
      %1149 = vmatpush1.msra.mxu0 0.0
      %1150 = vmatprep.subr.mxu0 0.0
      %1151 = vmatpush1.msra.mxu0 0.0
      %1152 = vmatprep.subr.mxu0 0.0
      %1153 = vmatpush1.msra.mxu0 0.0
      %1154 = vmatprep.subr.mxu0 0.0
      %1155 = vmatpush1.msra.mxu0 %v1027
      %1156 = vmatprep.subr.mxu0 0.0
      %1157 = vmatpush2.msra.mxu0 0.0
      %1158 = vmatprep.subr.mxu0 0.0
      %1159 = vmatpush2.msra.mxu0 0.0
      %1160 = vmatprep.subr.mxu0 0.0
      %1161 = vmatpush2.msra.mxu0 0.0
      %1162 = vmatprep.subr.mxu0 0.0
      %1163 = vmatpush2.msra.mxu0 0.0
      %1164 = vmatprep.subr.mxu0 0.0
      %1165 = vmatpush2.msra.mxu0 0.0
      %1166 = vmatprep.subr.mxu0 0.0
      %1167 = vmatpush2.msra.mxu0 0.0
      %1168 = vmatprep.subr.mxu0 0.0
      %1169 = vmatpush2.msra.mxu0 0.0
      %1170 = vmatprep.subr.mxu0 0.0
      %1171 = vmatpush2.msra.mxu0 0.0
      %1172 = vmatprep.subr.mxu0 0.0
      %1173 = vmatpush2.msra.mxu0 0.0
      %1174 = vmatprep.subr.mxu0 0.0
      %1175 = vmatpush2.msra.mxu0 0.0
      %1176 = vmatprep.subr.mxu0 0.0
      %1177 = vmatpush2.msra.mxu0 0.0
      %1178 = vmatprep.subr.mxu0 0.0
      %1179 = vmatpush2.msra.mxu0 0.0
      %1180 = vmatprep.subr.mxu0 0.0
      %1181 = vmatpush2.msra.mxu0 0.0
      %1182 = vmatprep.subr.mxu0 0.0
      %1183 = vmatpush2.msra.mxu0 0.0
      %1184 = vmatprep.subr.mxu0 0.0
      %1185 = vmatpush2.msra.mxu0 0.0
      %1186 = vmatprep.subr.mxu0 0.0
      %1187 = vmatpush2.msra.mxu0 0.0
      %1188 = vmatprep.mubr.f32.mxu0 0.0
      %1189 = vmatmul.mubr.f32.gmra.mxu0 %v1122
      %v1190 = vpop.f32.mrf.mxu0
      %v1191 = vadd.f32 0.0, %v1190
      %v1192 = vpop.f32.mrf.mxu0
      %1193 = vdwg.mxu0
      %v1194 = vpack.c.bf16 %v1191, %v1191
      %s1195 = scalar_lea.vmem %s9, 4
      %v1196 = vld [vmem:[%s1195] sm:$0xf]
      %v1198 = vsel %vm672, %v1194, 0
      %vm1200 = vcmask 1043456
      %v1202 = vsel %vm1200, %v1196, 0
      %1204 = vmatprep.subr.bf16.mxu0 0
      %1205 = vmatpush1.bf16.msra.mxu0 0
      %1206 = vmatprep.subr.bf16.mxu0 0
      %1207 = vmatpush1.bf16.msra.mxu0 0
      %1208 = vmatprep.subr.bf16.mxu0 0
      %1209 = vmatpush1.bf16.msra.mxu0 0
      %1210 = vmatprep.subr.bf16.mxu0 0
      %1211 = vmatpush1.bf16.msra.mxu0 0
      %1212 = vmatprep.subr.bf16.mxu0 0
      %1213 = vmatpush1.bf16.msra.mxu0 0
      %1214 = vmatprep.subr.bf16.mxu0 0
      %1215 = vmatpush1.bf16.msra.mxu0 0
      %1216 = vmatprep.subr.bf16.mxu0 0
      %1217 = vmatpush1.bf16.msra.mxu0 0
      %1218 = vmatprep.subr.bf16.mxu0 0
      %1219 = vmatpush1.bf16.msra.mxu0 %v1202
      %1220 = vmatprep.subr.bf16.mxu0 0
      %1221 = vmatpush2.bf16.msra.mxu0 0
      %1222 = vmatprep.subr.bf16.mxu0 0
      %1223 = vmatpush2.bf16.msra.mxu0 0
      %1224 = vmatprep.subr.bf16.mxu0 0
      %1225 = vmatpush2.bf16.msra.mxu0 0
      %1226 = vmatprep.subr.bf16.mxu0 0
      %1227 = vmatpush2.bf16.msra.mxu0 0
      %1228 = vmatprep.subr.bf16.mxu0 0
      %1229 = vmatpush2.bf16.msra.mxu0 0
      %1230 = vmatprep.subr.bf16.mxu0 0
      %1231 = vmatpush2.bf16.msra.mxu0 0
      %1232 = vmatprep.subr.bf16.mxu0 0
      %1233 = vmatpush2.bf16.msra.mxu0 0
      %1234 = vmatprep.subr.bf16.mxu0 0
      %1235 = vmatpush2.bf16.msra.mxu0 0
      %1236 = vmatprep.mubr.bf16.mxu0 0
      %1237 = vmatmul.mubr.bf16.gmra.mxu0 %v1198
      %v1238 = vpop.f32.mrf.mxu0
      %v1239 = vadd.f32 0.0, %v1238
      %v1240 = vpop.f32.mrf.mxu0
      %v1241 = vpop.f32.mrf.mxu0
      %v1242 = vpop.f32.mrf.mxu0
      %1243 = vdwg.mxu0
      %v1245 = vsel %vm672, %v835, 0
      %v1248 = vsel %vm1200, %v836, 0
      %1250 = vmatprep.subr.bf16.mxu0 0
      %1251 = vmatpush1.bf16.msra.mxu0 0
      %1252 = vmatprep.subr.bf16.mxu0 0
      %1253 = vmatpush1.bf16.msra.mxu0 0
      %1254 = vmatprep.subr.bf16.mxu0 0
      %1255 = vmatpush1.bf16.msra.mxu0 0
      %1256 = vmatprep.subr.bf16.mxu0 0
      %1257 = vmatpush1.bf16.msra.mxu0 0
      %1258 = vmatprep.subr.bf16.mxu0 0
      %1259 = vmatpush1.bf16.msra.mxu0 0
      %1260 = vmatprep.subr.bf16.mxu0 0
      %1261 = vmatpush1.bf16.msra.mxu0 0
      %1262 = vmatprep.subr.bf16.mxu0 0
      %1263 = vmatpush1.bf16.msra.mxu0 0
      %1264 = vmatprep.subr.bf16.mxu0 0
      %1265 = vmatpush1.bf16.msra.mxu0 %v1248
      %1266 = vmatprep.subr.bf16.mxu0 0
      %1267 = vmatpush2.bf16.msra.mxu0 0
      %1268 = vmatprep.subr.bf16.mxu0 0
      %1269 = vmatpush2.bf16.msra.mxu0 0
      %1270 = vmatprep.subr.bf16.mxu0 0
      %1271 = vmatpush2.bf16.msra.mxu0 0
      %1272 = vmatprep.subr.bf16.mxu0 0
      %1273 = vmatpush2.bf16.msra.mxu0 0
      %1274 = vmatprep.subr.bf16.mxu0 0
      %1275 = vmatpush2.bf16.msra.mxu0 0
      %1276 = vmatprep.subr.bf16.mxu0 0
      %1277 = vmatpush2.bf16.msra.mxu0 0
      %1278 = vmatprep.subr.bf16.mxu0 0
      %1279 = vmatpush2.bf16.msra.mxu0 0
      %1280 = vmatprep.subr.bf16.mxu0 0
      %1281 = vmatpush2.bf16.msra.mxu0 0
      %1282 = vmatprep.mubr.bf16.mxu0 0
      %1283 = vmatmul.mubr.bf16.gmra.mxu0 %v1245
      %v1284 = vpop.f32.mrf.mxu0
      %v1285 = vadd.f32 %v1239, %v1284
      %v1286 = vpop.f32.mrf.mxu0
      %v1287 = vpop.f32.mrf.mxu0
      %v1288 = vpop.f32.mrf.mxu0
      %1289 = vdwg.mxu0
      %s1290 = scalar_lea.vmem %s3, 32
      %v1291 = vld [vmem:[%s1290] sm:$0xf]
      %v1292 = vld [vmem:[%s1290 + $0x4] sm:$0xf]
      %v1293 = vld [vmem:[%s1290 + $0x8] sm:$0xf]
      %v1294 = vld [vmem:[%s1290 + $0xc] sm:$0xf]
      %s1295 = scalar_lea.vmem %s6, 2
      %v1296 = vld [vmem:[%s1295] sm:$0x1]
      %v1298 = vlaneseq
      %v1299 = vshrl.u32 %v1298, 7
      %v1300 = vsub.s32 0, %v1299
      %v1301 = vrot.slane %v1296, %v1300
      %v1307 = vunpack.c.l.b16 %v1291
      %v1308 = vunpack.c.l.b16 %v1292
      %v1309 = vunpack.c.l.b16 %v1293
      %v1310 = vunpack.c.l.b16 %v1294
      %v1311 = vpack.c.b16 %v1308, %v1307
      %v1312 = vpack.c.b16 %v1310, %v1309
      %1315 = vmatprep.subr.bf16.mxu0 0
      %1316 = vmatpush1.bf16.msra.mxu0 0
      %1317 = vmatprep.subr.bf16.mxu0 0
      %1318 = vmatpush1.bf16.msra.mxu0 0
      %1319 = vmatprep.subr.bf16.mxu0 0
      %1320 = vmatpush1.bf16.msra.mxu0 0
      %1321 = vmatprep.subr.bf16.mxu0 0
      %1322 = vmatpush1.bf16.msra.mxu0 0
      %1323 = vmatprep.subr.bf16.mxu0 0
      %1324 = vmatpush1.bf16.msra.mxu0 0
      %1325 = vmatprep.subr.bf16.mxu0 0
      %1326 = vmatpush1.bf16.msra.mxu0 0
      %1327 = vmatprep.subr.bf16.mxu0 0
      %1328 = vmatpush1.bf16.msra.mxu0 %v1312
      %1329 = vmatprep.subr.bf16.mxu0 0
      %1330 = vmatpush1.bf16.msra.mxu0 %v1311
      %1331 = vmatprep.subr.bf16.mxu0 0
      %1332 = vmatpush2.bf16.msra.mxu0 0
      %1333 = vmatprep.subr.bf16.mxu0 0
      %1334 = vmatpush2.bf16.msra.mxu0 0
      %1335 = vmatprep.subr.bf16.mxu0 0
      %1336 = vmatpush2.bf16.msra.mxu0 0
      %1337 = vmatprep.subr.bf16.mxu0 0
      %1338 = vmatpush2.bf16.msra.mxu0 0
      %1339 = vmatprep.subr.bf16.mxu0 0
      %1340 = vmatpush2.bf16.msra.mxu0 0
      %1341 = vmatprep.subr.bf16.mxu0 0
      %1342 = vmatpush2.bf16.msra.mxu0 0
      %1343 = vmatprep.subr.bf16.mxu0 0
      %1344 = vmatpush2.bf16.msra.mxu0 0
      %1345 = vmatprep.subr.bf16.mxu0 0
      %1346 = vmatpush2.bf16.msra.mxu0 0
      %1347 = vmatprep.mubr.bf16.mxu0 0
      %1348 = vmatmul.mubr.bf16.gmra.mxu0 %v501
      %v1349 = vpop.f32.mrf.mxu0
      %v1350 = vadd.f32 %v1301, %v1349
      %v1351 = vpop.f32.mrf.mxu0
      %v1352 = vpop.f32.mrf.mxu0
      %v1353 = vpop.f32.mrf.mxu0
      %1354 = vdwg.mxu0
      %s1355 = scalar_lea.vmem %s4, 32
      %v1356 = vld [vmem:[%s1355] sm:$0xf]
      %v1357 = vld [vmem:[%s1355 + $0x4] sm:$0xf]
      %v1358 = vld [vmem:[%s1355 + $0x8] sm:$0xf]
      %v1359 = vld [vmem:[%s1355 + $0xc] sm:$0xf]
      %s1360 = scalar_lea.vmem %s7, 2
      %v1361 = vld [vmem:[%s1360] sm:$0x1]
      %v1363 = vlaneseq
      %v1364 = vshrl.u32 %v1363, 7
      %v1365 = vsub.s32 0, %v1364
      %v1366 = vrot.slane %v1361, %v1365
      %v1372 = vunpack.c.l.b16 %v1356
      %v1373 = vunpack.c.l.b16 %v1357
      %v1374 = vunpack.c.l.b16 %v1358
      %v1375 = vunpack.c.l.b16 %v1359
      %v1376 = vpack.c.b16 %v1373, %v1372
      %v1377 = vpack.c.b16 %v1375, %v1374
      %1380 = vmatprep.subr.bf16.mxu0 0
      %1381 = vmatpush1.bf16.msra.mxu0 0
      %1382 = vmatprep.subr.bf16.mxu0 0
      %1383 = vmatpush1.bf16.msra.mxu0 0
      %1384 = vmatprep.subr.bf16.mxu0 0
      %1385 = vmatpush1.bf16.msra.mxu0 0
      %1386 = vmatprep.subr.bf16.mxu0 0
      %1387 = vmatpush1.bf16.msra.mxu0 0
      %1388 = vmatprep.subr.bf16.mxu0 0
      %1389 = vmatpush1.bf16.msra.mxu0 0
      %1390 = vmatprep.subr.bf16.mxu0 0
      %1391 = vmatpush1.bf16.msra.mxu0 0
      %1392 = vmatprep.subr.bf16.mxu0 0
      %1393 = vmatpush1.bf16.msra.mxu0 %v1377
      %1394 = vmatprep.subr.bf16.mxu0 0
      %1395 = vmatpush1.bf16.msra.mxu0 %v1376
      %1396 = vmatprep.subr.bf16.mxu0 0
      %1397 = vmatpush2.bf16.msra.mxu0 0
      %1398 = vmatprep.subr.bf16.mxu0 0
      %1399 = vmatpush2.bf16.msra.mxu0 0
      %1400 = vmatprep.subr.bf16.mxu0 0
      %1401 = vmatpush2.bf16.msra.mxu0 0
      %1402 = vmatprep.subr.bf16.mxu0 0
      %1403 = vmatpush2.bf16.msra.mxu0 0
      %1404 = vmatprep.subr.bf16.mxu0 0
      %1405 = vmatpush2.bf16.msra.mxu0 0
      %1406 = vmatprep.subr.bf16.mxu0 0
      %1407 = vmatpush2.bf16.msra.mxu0 0
      %1408 = vmatprep.subr.bf16.mxu0 0
      %1409 = vmatpush2.bf16.msra.mxu0 0
      %1410 = vmatprep.subr.bf16.mxu0 0
      %1411 = vmatpush2.bf16.msra.mxu0 0
      %1412 = vmatprep.mubr.bf16.mxu0 0
      %1413 = vmatmul.mubr.bf16.gmra.mxu0 %v567
      %v1414 = vpop.f32.mrf.mxu0
      %v1415 = vadd.f32 %v1366, %v1414
      %v1416 = vpop.f32.mrf.mxu0
      %v1417 = vpop.f32.mrf.mxu0
      %v1418 = vpop.f32.mrf.mxu0
      %1419 = vdwg.mxu0
      %s1420 = scalar_lea.vmem %s5, 32
      %v1421 = vld [vmem:[%s1420] sm:$0xf]
      %v1422 = vld [vmem:[%s1420 + $0x4] sm:$0xf]
      %v1423 = vld [vmem:[%s1420 + $0x8] sm:$0xf]
      %v1424 = vld [vmem:[%s1420 + $0xc] sm:$0xf]
      %s1425 = scalar_lea.vmem %s8, 2
      %v1426 = vld [vmem:[%s1425] sm:$0x1]
      %v1428 = vlaneseq
      %v1429 = vshrl.u32 %v1428, 7
      %v1430 = vsub.s32 0, %v1429
      %v1431 = vrot.slane %v1426, %v1430
      %v1437 = vunpack.c.l.b16 %v1421
      %v1438 = vunpack.c.l.b16 %v1422
      %v1439 = vunpack.c.l.b16 %v1423
      %v1440 = vunpack.c.l.b16 %v1424
      %v1441 = vpack.c.b16 %v1438, %v1437
      %v1442 = vpack.c.b16 %v1440, %v1439
      %1445 = vmatprep.subr.bf16.mxu0 0
      %1446 = vmatpush1.bf16.msra.mxu0 0
      %1447 = vmatprep.subr.bf16.mxu0 0
      %1448 = vmatpush1.bf16.msra.mxu0 0
      %1449 = vmatprep.subr.bf16.mxu0 0
      %1450 = vmatpush1.bf16.msra.mxu0 0
      %1451 = vmatprep.subr.bf16.mxu0 0
      %1452 = vmatpush1.bf16.msra.mxu0 0
      %1453 = vmatprep.subr.bf16.mxu0 0
      %1454 = vmatpush1.bf16.msra.mxu0 0
      %1455 = vmatprep.subr.bf16.mxu0 0
      %1456 = vmatpush1.bf16.msra.mxu0 0
      %1457 = vmatprep.subr.bf16.mxu0 0
      %1458 = vmatpush1.bf16.msra.mxu0 %v1442
      %1459 = vmatprep.subr.bf16.mxu0 0
      %1460 = vmatpush1.bf16.msra.mxu0 %v1441
      %1461 = vmatprep.subr.bf16.mxu0 0
      %1462 = vmatpush2.bf16.msra.mxu0 0
      %1463 = vmatprep.subr.bf16.mxu0 0
      %1464 = vmatpush2.bf16.msra.mxu0 0
      %1465 = vmatprep.subr.bf16.mxu0 0
      %1466 = vmatpush2.bf16.msra.mxu0 0
      %1467 = vmatprep.subr.bf16.mxu0 0
      %1468 = vmatpush2.bf16.msra.mxu0 0
      %1469 = vmatprep.subr.bf16.mxu0 0
      %1470 = vmatpush2.bf16.msra.mxu0 0
      %1471 = vmatprep.subr.bf16.mxu0 0
      %1472 = vmatpush2.bf16.msra.mxu0 0
      %1473 = vmatprep.subr.bf16.mxu0 0
      %1474 = vmatpush2.bf16.msra.mxu0 0
      %1475 = vmatprep.subr.bf16.mxu0 0
      %1476 = vmatpush2.bf16.msra.mxu0 0
      %1477 = vmatprep.mubr.bf16.mxu0 0
      %1478 = vmatmul.mubr.bf16.gmra.mxu0 %v567
      %v1479 = vpop.f32.mrf.mxu0
      %v1480 = vadd.f32 %v1431, %v1479
      %v1481 = vpop.f32.mrf.mxu0
      %v1482 = vpop.f32.mrf.mxu0
      %v1483 = vpop.f32.mrf.mxu0
      %1484 = vdwg.mxu0
      %v1486 = vsel %vm672, %v1350, 0
      %v1489 = vsel %vm672, %v1415, 0
      %1491 = vmatprep.subr.mxu0 0.0
      %1492 = vmatpush1.xpose.msra.mxu0 0.0
      %1493 = vmatprep.subr.mxu0 0.0
      %1494 = vmatpush1.xpose.msra.mxu0 0.0
      %1495 = vmatprep.subr.mxu0 0.0
      %1496 = vmatpush1.xpose.msra.mxu0 0.0
      %1497 = vmatprep.subr.mxu0 0.0
      %1498 = vmatpush1.xpose.msra.mxu0 0.0
      %1499 = vmatprep.subr.mxu0 0.0
      %1500 = vmatpush1.xpose.msra.mxu0 0.0
      %1501 = vmatprep.subr.mxu0 0.0
      %1502 = vmatpush1.xpose.msra.mxu0 0.0
      %1503 = vmatprep.subr.mxu0 0.0
      %1504 = vmatpush1.xpose.msra.mxu0 0.0
      %1505 = vmatprep.subr.mxu0 0.0
      %1506 = vmatpush1.xpose.msra.mxu0 0.0
      %1507 = vmatprep.subr.mxu0 0.0
      %1508 = vmatpush1.xpose.msra.mxu0 0.0
      %1509 = vmatprep.subr.mxu0 0.0
      %1510 = vmatpush1.xpose.msra.mxu0 0.0
      %1511 = vmatprep.subr.mxu0 0.0
      %1512 = vmatpush1.xpose.msra.mxu0 0.0
      %1513 = vmatprep.subr.mxu0 0.0
      %1514 = vmatpush1.xpose.msra.mxu0 0.0
      %1515 = vmatprep.subr.mxu0 0.0
      %1516 = vmatpush1.xpose.msra.mxu0 0.0
      %1517 = vmatprep.subr.mxu0 0.0
      %1518 = vmatpush1.xpose.msra.mxu0 0.0
      %1519 = vmatprep.subr.mxu0 0.0
      %1520 = vmatpush1.xpose.msra.mxu0 0.0
      %1521 = vmatprep.subr.mxu0 0.0
      %1522 = vmatpush1.xpose.msra.mxu0 %v1489
      %1523 = vmatprep.subr.mxu0 0.0
      %1524 = vmatpush2.xpose.msra.mxu0 0.0
      %1525 = vmatprep.subr.mxu0 0.0
      %1526 = vmatpush2.xpose.msra.mxu0 0.0
      %1527 = vmatprep.subr.mxu0 0.0
      %1528 = vmatpush2.xpose.msra.mxu0 0.0
      %1529 = vmatprep.subr.mxu0 0.0
      %1530 = vmatpush2.xpose.msra.mxu0 0.0
      %1531 = vmatprep.subr.mxu0 0.0
      %1532 = vmatpush2.xpose.msra.mxu0 0.0
      %1533 = vmatprep.subr.mxu0 0.0
      %1534 = vmatpush2.xpose.msra.mxu0 0.0
      %1535 = vmatprep.subr.mxu0 0.0
      %1536 = vmatpush2.xpose.msra.mxu0 0.0
      %1537 = vmatprep.subr.mxu0 0.0
      %1538 = vmatpush2.xpose.msra.mxu0 0.0
      %1539 = vmatprep.subr.mxu0 0.0
      %1540 = vmatpush2.xpose.msra.mxu0 0.0
      %1541 = vmatprep.subr.mxu0 0.0
      %1542 = vmatpush2.xpose.msra.mxu0 0.0
      %1543 = vmatprep.subr.mxu0 0.0
      %1544 = vmatpush2.xpose.msra.mxu0 0.0
      %1545 = vmatprep.subr.mxu0 0.0
      %1546 = vmatpush2.xpose.msra.mxu0 0.0
      %1547 = vmatprep.subr.mxu0 0.0
      %1548 = vmatpush2.xpose.msra.mxu0 0.0
      %1549 = vmatprep.subr.mxu0 0.0
      %1550 = vmatpush2.xpose.msra.mxu0 0.0
      %1551 = vmatprep.subr.mxu0 0.0
      %1552 = vmatpush2.xpose.msra.mxu0 0.0
      %1553 = vmatprep.subr.mxu0 0.0
      %1554 = vmatpush2.xpose.msra.mxu0 0.0
      %1555 = vmatprep.mubr.f32.mxu0 0.0
      %1556 = vmatmul.mubr.f32.gmra.mxu0 %v1486
      %v1557 = vpop.f32.mrf.mxu0
      %v1558 = vadd.f32 0.0, %v1557
      %v1559 = vpop.f32.mrf.mxu0
      %1560 = vdwg.mxu0
      %v1561 = vmul.f32 %v1558, 0.35355338
      %v1562 = vadd.f32 %v1561, %v473
      %v1563 = vsel %vm672, %v1562, -inf
      %1564 = vmax.xlane.f32.xlu0 %v1563
      %v1565 = vpop.xlane.xlu0 %1564
      %v1566 = vsub.f32 %v1562, %v1565
      %v1567 = vmul.f32 %v1566, 1.442695
      %v1568 = vpow.pop %v1567
      %v1569 = vsel %vm672, %v1568, 0.0
      %1570 = vadd.xlane.f32.xlu0 %v1569
      %v1571 = vpop.xlane.xlu0 %1570
      %v1572 = vrcp.pop %v1571
      %v1573 = vmul.f32 %v1568, %v1572
      %v1575 = vsel %vm672, %v1573, 0
      %1577 = vmatprep.subr.mxu0 0.0
      %1578 = vmatpush1.msra.mxu0 0.0
      %1579 = vmatprep.subr.mxu0 0.0
      %1580 = vmatpush1.msra.mxu0 0.0
      %1581 = vmatprep.subr.mxu0 0.0
      %1582 = vmatpush1.msra.mxu0 0.0
      %1583 = vmatprep.subr.mxu0 0.0
      %1584 = vmatpush1.msra.mxu0 0.0
      %1585 = vmatprep.subr.mxu0 0.0
      %1586 = vmatpush1.msra.mxu0 0.0
      %1587 = vmatprep.subr.mxu0 0.0
      %1588 = vmatpush1.msra.mxu0 0.0
      %1589 = vmatprep.subr.mxu0 0.0
      %1590 = vmatpush1.msra.mxu0 0.0
      %1591 = vmatprep.subr.mxu0 0.0
      %1592 = vmatpush1.msra.mxu0 0.0
      %1593 = vmatprep.subr.mxu0 0.0
      %1594 = vmatpush1.msra.mxu0 0.0
      %1595 = vmatprep.subr.mxu0 0.0
      %1596 = vmatpush1.msra.mxu0 0.0
      %1597 = vmatprep.subr.mxu0 0.0
      %1598 = vmatpush1.msra.mxu0 0.0
      %1599 = vmatprep.subr.mxu0 0.0
      %1600 = vmatpush1.msra.mxu0 0.0
      %1601 = vmatprep.subr.mxu0 0.0
      %1602 = vmatpush1.msra.mxu0 0.0
      %1603 = vmatprep.subr.mxu0 0.0
      %1604 = vmatpush1.msra.mxu0 0.0
      %1605 = vmatprep.subr.mxu0 0.0
      %1606 = vmatpush1.msra.mxu0 0.0
      %1607 = vmatprep.subr.mxu0 0.0
      %1608 = vmatpush1.msra.mxu0 %v1480
      %1609 = vmatprep.subr.mxu0 0.0
      %1610 = vmatpush2.msra.mxu0 0.0
      %1611 = vmatprep.subr.mxu0 0.0
      %1612 = vmatpush2.msra.mxu0 0.0
      %1613 = vmatprep.subr.mxu0 0.0
      %1614 = vmatpush2.msra.mxu0 0.0
      %1615 = vmatprep.subr.mxu0 0.0
      %1616 = vmatpush2.msra.mxu0 0.0
      %1617 = vmatprep.subr.mxu0 0.0
      %1618 = vmatpush2.msra.mxu0 0.0
      %1619 = vmatprep.subr.mxu0 0.0
      %1620 = vmatpush2.msra.mxu0 0.0
      %1621 = vmatprep.subr.mxu0 0.0
      %1622 = vmatpush2.msra.mxu0 0.0
      %1623 = vmatprep.subr.mxu0 0.0
      %1624 = vmatpush2.msra.mxu0 0.0
      %1625 = vmatprep.subr.mxu0 0.0
      %1626 = vmatpush2.msra.mxu0 0.0
      %1627 = vmatprep.subr.mxu0 0.0
      %1628 = vmatpush2.msra.mxu0 0.0
      %1629 = vmatprep.subr.mxu0 0.0
      %1630 = vmatpush2.msra.mxu0 0.0
      %1631 = vmatprep.subr.mxu0 0.0
      %1632 = vmatpush2.msra.mxu0 0.0
      %1633 = vmatprep.subr.mxu0 0.0
      %1634 = vmatpush2.msra.mxu0 0.0
      %1635 = vmatprep.subr.mxu0 0.0
      %1636 = vmatpush2.msra.mxu0 0.0
      %1637 = vmatprep.subr.mxu0 0.0
      %1638 = vmatpush2.msra.mxu0 0.0
      %1639 = vmatprep.subr.mxu0 0.0
      %1640 = vmatpush2.msra.mxu0 0.0
      %1641 = vmatprep.mubr.f32.mxu0 0.0
      %1642 = vmatmul.mubr.f32.gmra.mxu0 %v1575
      %v1643 = vpop.f32.mrf.mxu0
      %v1644 = vadd.f32 0.0, %v1643
      %v1645 = vpop.f32.mrf.mxu0
      %1646 = vdwg.mxu0
      %v1647 = vpack.c.bf16 %v1644, %v1644
      %s1648 = scalar_lea.vmem %s9, 8
      %v1649 = vld [vmem:[%s1648] sm:$0xf]
      %v1651 = vsel %vm672, %v1647, 0
      %v1654 = vsel %vm1200, %v1649, 0
      %1656 = vmatprep.subr.bf16.mxu0 0
      %1657 = vmatpush1.bf16.msra.mxu0 0
      %1658 = vmatprep.subr.bf16.mxu0 0
      %1659 = vmatpush1.bf16.msra.mxu0 0
      %1660 = vmatprep.subr.bf16.mxu0 0
      %1661 = vmatpush1.bf16.msra.mxu0 0
      %1662 = vmatprep.subr.bf16.mxu0 0
      %1663 = vmatpush1.bf16.msra.mxu0 0
      %1664 = vmatprep.subr.bf16.mxu0 0
      %1665 = vmatpush1.bf16.msra.mxu0 0
      %1666 = vmatprep.subr.bf16.mxu0 0
      %1667 = vmatpush1.bf16.msra.mxu0 0
      %1668 = vmatprep.subr.bf16.mxu0 0
      %1669 = vmatpush1.bf16.msra.mxu0 0
      %1670 = vmatprep.subr.bf16.mxu0 0
      %1671 = vmatpush1.bf16.msra.mxu0 %v1654
      %1672 = vmatprep.subr.bf16.mxu0 0
      %1673 = vmatpush2.bf16.msra.mxu0 0
      %1674 = vmatprep.subr.bf16.mxu0 0
      %1675 = vmatpush2.bf16.msra.mxu0 0
      %1676 = vmatprep.subr.bf16.mxu0 0
      %1677 = vmatpush2.bf16.msra.mxu0 0
      %1678 = vmatprep.subr.bf16.mxu0 0
      %1679 = vmatpush2.bf16.msra.mxu0 0
      %1680 = vmatprep.subr.bf16.mxu0 0
      %1681 = vmatpush2.bf16.msra.mxu0 0
      %1682 = vmatprep.subr.bf16.mxu0 0
      %1683 = vmatpush2.bf16.msra.mxu0 0
      %1684 = vmatprep.subr.bf16.mxu0 0
      %1685 = vmatpush2.bf16.msra.mxu0 0
      %1686 = vmatprep.subr.bf16.mxu0 0
      %1687 = vmatpush2.bf16.msra.mxu0 0
      %1688 = vmatprep.mubr.bf16.mxu0 0
      %1689 = vmatmul.mubr.bf16.gmra.mxu0 %v1651
      %v1690 = vpop.f32.mrf.mxu0
      %v1691 = vadd.f32 0.0, %v1690
      %v1692 = vpop.f32.mrf.mxu0
      %v1693 = vpop.f32.mrf.mxu0
      %v1694 = vpop.f32.mrf.mxu0
      %1695 = vdwg.mxu0
      %v1696 = vadd.f32 %v1285, %v1691
      %s1697 = scalar_lea.vmem %s3, 48
      %v1698 = vld [vmem:[%s1697] sm:$0xf]
      %v1699 = vld [vmem:[%s1697 + $0x4] sm:$0xf]
      %v1700 = vld [vmem:[%s1697 + $0x8] sm:$0xf]
      %v1701 = vld [vmem:[%s1697 + $0xc] sm:$0xf]
      %s1702 = scalar_lea.vmem %s6, 3
      %v1703 = vld [vmem:[%s1702] sm:$0x1]
      %v1705 = vlaneseq
      %v1706 = vshrl.u32 %v1705, 7
      %v1707 = vsub.s32 0, %v1706
      %v1708 = vrot.slane %v1703, %v1707
      %v1714 = vunpack.c.l.b16 %v1698
      %v1715 = vunpack.c.l.b16 %v1699
      %v1716 = vunpack.c.l.b16 %v1700
      %v1717 = vunpack.c.l.b16 %v1701
      %v1718 = vpack.c.b16 %v1715, %v1714
      %v1719 = vpack.c.b16 %v1717, %v1716
      %1722 = vmatprep.subr.bf16.mxu0 0
      %1723 = vmatpush1.bf16.msra.mxu0 0
      %1724 = vmatprep.subr.bf16.mxu0 0
      %1725 = vmatpush1.bf16.msra.mxu0 0
      %1726 = vmatprep.subr.bf16.mxu0 0
      %1727 = vmatpush1.bf16.msra.mxu0 0
      %1728 = vmatprep.subr.bf16.mxu0 0
      %1729 = vmatpush1.bf16.msra.mxu0 0
      %1730 = vmatprep.subr.bf16.mxu0 0
      %1731 = vmatpush1.bf16.msra.mxu0 0
      %1732 = vmatprep.subr.bf16.mxu0 0
      %1733 = vmatpush1.bf16.msra.mxu0 0
      %1734 = vmatprep.subr.bf16.mxu0 0
      %1735 = vmatpush1.bf16.msra.mxu0 %v1719
      %1736 = vmatprep.subr.bf16.mxu0 0
      %1737 = vmatpush1.bf16.msra.mxu0 %v1718
      %1738 = vmatprep.subr.bf16.mxu0 0
      %1739 = vmatpush2.bf16.msra.mxu0 0
      %1740 = vmatprep.subr.bf16.mxu0 0
      %1741 = vmatpush2.bf16.msra.mxu0 0
      %1742 = vmatprep.subr.bf16.mxu0 0
      %1743 = vmatpush2.bf16.msra.mxu0 0
      %1744 = vmatprep.subr.bf16.mxu0 0
      %1745 = vmatpush2.bf16.msra.mxu0 0
      %1746 = vmatprep.subr.bf16.mxu0 0
      %1747 = vmatpush2.bf16.msra.mxu0 0
      %1748 = vmatprep.subr.bf16.mxu0 0
      %1749 = vmatpush2.bf16.msra.mxu0 0
      %1750 = vmatprep.subr.bf16.mxu0 0
      %1751 = vmatpush2.bf16.msra.mxu0 0
      %1752 = vmatprep.subr.bf16.mxu0 0
      %1753 = vmatpush2.bf16.msra.mxu0 0
      %1754 = vmatprep.mubr.bf16.mxu0 0
      %1755 = vmatmul.mubr.bf16.gmra.mxu0 %v501
      %v1756 = vpop.f32.mrf.mxu0
      %v1757 = vadd.f32 %v1708, %v1756
      %v1758 = vpop.f32.mrf.mxu0
      %v1759 = vpop.f32.mrf.mxu0
      %v1760 = vpop.f32.mrf.mxu0
      %1761 = vdwg.mxu0
      %s1762 = scalar_lea.vmem %s4, 48
      %v1763 = vld [vmem:[%s1762] sm:$0xf]
      %v1764 = vld [vmem:[%s1762 + $0x4] sm:$0xf]
      %v1765 = vld [vmem:[%s1762 + $0x8] sm:$0xf]
      %v1766 = vld [vmem:[%s1762 + $0xc] sm:$0xf]
      %s1767 = scalar_lea.vmem %s7, 3
      %v1768 = vld [vmem:[%s1767] sm:$0x1]
      %v1770 = vlaneseq
      %v1771 = vshrl.u32 %v1770, 7
      %v1772 = vsub.s32 0, %v1771
      %v1773 = vrot.slane %v1768, %v1772
      %v1779 = vunpack.c.l.b16 %v1763
      %v1780 = vunpack.c.l.b16 %v1764
      %v1781 = vunpack.c.l.b16 %v1765
      %v1782 = vunpack.c.l.b16 %v1766
      %v1783 = vpack.c.b16 %v1780, %v1779
      %v1784 = vpack.c.b16 %v1782, %v1781
      %1787 = vmatprep.subr.bf16.mxu0 0
      %1788 = vmatpush1.bf16.msra.mxu0 0
      %1789 = vmatprep.subr.bf16.mxu0 0
      %1790 = vmatpush1.bf16.msra.mxu0 0
      %1791 = vmatprep.subr.bf16.mxu0 0
      %1792 = vmatpush1.bf16.msra.mxu0 0
      %1793 = vmatprep.subr.bf16.mxu0 0
      %1794 = vmatpush1.bf16.msra.mxu0 0
      %1795 = vmatprep.subr.bf16.mxu0 0
      %1796 = vmatpush1.bf16.msra.mxu0 0
      %1797 = vmatprep.subr.bf16.mxu0 0
      %1798 = vmatpush1.bf16.msra.mxu0 0
      %1799 = vmatprep.subr.bf16.mxu0 0
      %1800 = vmatpush1.bf16.msra.mxu0 %v1784
      %1801 = vmatprep.subr.bf16.mxu0 0
      %1802 = vmatpush1.bf16.msra.mxu0 %v1783
      %1803 = vmatprep.subr.bf16.mxu0 0
      %1804 = vmatpush2.bf16.msra.mxu0 0
      %1805 = vmatprep.subr.bf16.mxu0 0
      %1806 = vmatpush2.bf16.msra.mxu0 0
      %1807 = vmatprep.subr.bf16.mxu0 0
      %1808 = vmatpush2.bf16.msra.mxu0 0
      %1809 = vmatprep.subr.bf16.mxu0 0
      %1810 = vmatpush2.bf16.msra.mxu0 0
      %1811 = vmatprep.subr.bf16.mxu0 0
      %1812 = vmatpush2.bf16.msra.mxu0 0
      %1813 = vmatprep.subr.bf16.mxu0 0
      %1814 = vmatpush2.bf16.msra.mxu0 0
      %1815 = vmatprep.subr.bf16.mxu0 0
      %1816 = vmatpush2.bf16.msra.mxu0 0
      %1817 = vmatprep.subr.bf16.mxu0 0
      %1818 = vmatpush2.bf16.msra.mxu0 0
      %1819 = vmatprep.mubr.bf16.mxu0 0
      %1820 = vmatmul.mubr.bf16.gmra.mxu0 %v567
      %v1821 = vpop.f32.mrf.mxu0
      %v1822 = vadd.f32 %v1773, %v1821
      %v1823 = vpop.f32.mrf.mxu0
      %v1824 = vpop.f32.mrf.mxu0
      %v1825 = vpop.f32.mrf.mxu0
      %1826 = vdwg.mxu0
      %s1827 = scalar_lea.vmem %s5, 48
      %v1828 = vld [vmem:[%s1827] sm:$0xf]
      %v1829 = vld [vmem:[%s1827 + $0x4] sm:$0xf]
      %v1830 = vld [vmem:[%s1827 + $0x8] sm:$0xf]
      %v1831 = vld [vmem:[%s1827 + $0xc] sm:$0xf]
      %s1832 = scalar_lea.vmem %s8, 3
      %v1833 = vld [vmem:[%s1832] sm:$0x1]
      %v1835 = vlaneseq
      %v1836 = vshrl.u32 %v1835, 7
      %v1837 = vsub.s32 0, %v1836
      %v1838 = vrot.slane %v1833, %v1837
      %v1844 = vunpack.c.l.b16 %v1828
      %v1845 = vunpack.c.l.b16 %v1829
      %v1846 = vunpack.c.l.b16 %v1830
      %v1847 = vunpack.c.l.b16 %v1831
      %v1848 = vpack.c.b16 %v1845, %v1844
      %v1849 = vpack.c.b16 %v1847, %v1846
      %1852 = vmatprep.subr.bf16.mxu0 0
      %1853 = vmatpush1.bf16.msra.mxu0 0
      %1854 = vmatprep.subr.bf16.mxu0 0
      %1855 = vmatpush1.bf16.msra.mxu0 0
      %1856 = vmatprep.subr.bf16.mxu0 0
      %1857 = vmatpush1.bf16.msra.mxu0 0
      %1858 = vmatprep.subr.bf16.mxu0 0
      %1859 = vmatpush1.bf16.msra.mxu0 0
      %1860 = vmatprep.subr.bf16.mxu0 0
      %1861 = vmatpush1.bf16.msra.mxu0 0
      %1862 = vmatprep.subr.bf16.mxu0 0
      %1863 = vmatpush1.bf16.msra.mxu0 0
      %1864 = vmatprep.subr.bf16.mxu0 0
      %1865 = vmatpush1.bf16.msra.mxu0 %v1849
      %1866 = vmatprep.subr.bf16.mxu0 0
      %1867 = vmatpush1.bf16.msra.mxu0 %v1848
      %1868 = vmatprep.subr.bf16.mxu0 0
      %1869 = vmatpush2.bf16.msra.mxu0 0
      %1870 = vmatprep.subr.bf16.mxu0 0
      %1871 = vmatpush2.bf16.msra.mxu0 0
      %1872 = vmatprep.subr.bf16.mxu0 0
      %1873 = vmatpush2.bf16.msra.mxu0 0
      %1874 = vmatprep.subr.bf16.mxu0 0
      %1875 = vmatpush2.bf16.msra.mxu0 0
      %1876 = vmatprep.subr.bf16.mxu0 0
      %1877 = vmatpush2.bf16.msra.mxu0 0
      %1878 = vmatprep.subr.bf16.mxu0 0
      %1879 = vmatpush2.bf16.msra.mxu0 0
      %1880 = vmatprep.subr.bf16.mxu0 0
      %1881 = vmatpush2.bf16.msra.mxu0 0
      %1882 = vmatprep.subr.bf16.mxu0 0
      %1883 = vmatpush2.bf16.msra.mxu0 0
      %1884 = vmatprep.mubr.bf16.mxu0 0
      %1885 = vmatmul.mubr.bf16.gmra.mxu0 %v567
      %v1886 = vpop.f32.mrf.mxu0
      %v1887 = vadd.f32 %v1838, %v1886
      %v1888 = vpop.f32.mrf.mxu0
      %v1889 = vpop.f32.mrf.mxu0
      %v1890 = vpop.f32.mrf.mxu0
      %1891 = vdwg.mxu0
      %v1893 = vsel %vm672, %v1757, 0
      %v1896 = vsel %vm672, %v1822, 0
      %1898 = vmatprep.subr.mxu0 0.0
      %1899 = vmatpush1.xpose.msra.mxu0 0.0
      %1900 = vmatprep.subr.mxu0 0.0
      %1901 = vmatpush1.xpose.msra.mxu0 0.0
      %1902 = vmatprep.subr.mxu0 0.0
      %1903 = vmatpush1.xpose.msra.mxu0 0.0
      %1904 = vmatprep.subr.mxu0 0.0
      %1905 = vmatpush1.xpose.msra.mxu0 0.0
      %1906 = vmatprep.subr.mxu0 0.0
      %1907 = vmatpush1.xpose.msra.mxu0 0.0
      %1908 = vmatprep.subr.mxu0 0.0
      %1909 = vmatpush1.xpose.msra.mxu0 0.0
      %1910 = vmatprep.subr.mxu0 0.0
      %1911 = vmatpush1.xpose.msra.mxu0 0.0
      %1912 = vmatprep.subr.mxu0 0.0
      %1913 = vmatpush1.xpose.msra.mxu0 0.0
      %1914 = vmatprep.subr.mxu0 0.0
      %1915 = vmatpush1.xpose.msra.mxu0 0.0
      %1916 = vmatprep.subr.mxu0 0.0
      %1917 = vmatpush1.xpose.msra.mxu0 0.0
      %1918 = vmatprep.subr.mxu0 0.0
      %1919 = vmatpush1.xpose.msra.mxu0 0.0
      %1920 = vmatprep.subr.mxu0 0.0
      %1921 = vmatpush1.xpose.msra.mxu0 0.0
      %1922 = vmatprep.subr.mxu0 0.0
      %1923 = vmatpush1.xpose.msra.mxu0 0.0
      %1924 = vmatprep.subr.mxu0 0.0
      %1925 = vmatpush1.xpose.msra.mxu0 0.0
      %1926 = vmatprep.subr.mxu0 0.0
      %1927 = vmatpush1.xpose.msra.mxu0 0.0
      %1928 = vmatprep.subr.mxu0 0.0
      %1929 = vmatpush1.xpose.msra.mxu0 %v1896
      %1930 = vmatprep.subr.mxu0 0.0
      %1931 = vmatpush2.xpose.msra.mxu0 0.0
      %1932 = vmatprep.subr.mxu0 0.0
      %1933 = vmatpush2.xpose.msra.mxu0 0.0
      %1934 = vmatprep.subr.mxu0 0.0
      %1935 = vmatpush2.xpose.msra.mxu0 0.0
      %1936 = vmatprep.subr.mxu0 0.0
      %1937 = vmatpush2.xpose.msra.mxu0 0.0
      %1938 = vmatprep.subr.mxu0 0.0
      %1939 = vmatpush2.xpose.msra.mxu0 0.0
      %1940 = vmatprep.subr.mxu0 0.0
      %1941 = vmatpush2.xpose.msra.mxu0 0.0
      %1942 = vmatprep.subr.mxu0 0.0
      %1943 = vmatpush2.xpose.msra.mxu0 0.0
      %1944 = vmatprep.subr.mxu0 0.0
      %1945 = vmatpush2.xpose.msra.mxu0 0.0
      %1946 = vmatprep.subr.mxu0 0.0
      %1947 = vmatpush2.xpose.msra.mxu0 0.0
      %1948 = vmatprep.subr.mxu0 0.0
      %1949 = vmatpush2.xpose.msra.mxu0 0.0
      %1950 = vmatprep.subr.mxu0 0.0
      %1951 = vmatpush2.xpose.msra.mxu0 0.0
      %1952 = vmatprep.subr.mxu0 0.0
      %1953 = vmatpush2.xpose.msra.mxu0 0.0
      %1954 = vmatprep.subr.mxu0 0.0
      %1955 = vmatpush2.xpose.msra.mxu0 0.0
      %1956 = vmatprep.subr.mxu0 0.0
      %1957 = vmatpush2.xpose.msra.mxu0 0.0
      %1958 = vmatprep.subr.mxu0 0.0
      %1959 = vmatpush2.xpose.msra.mxu0 0.0
      %1960 = vmatprep.subr.mxu0 0.0
      %1961 = vmatpush2.xpose.msra.mxu0 0.0
      %1962 = vmatprep.mubr.f32.mxu0 0.0
      %1963 = vmatmul.mubr.f32.gmra.mxu0 %v1893
      %v1964 = vpop.f32.mrf.mxu0
      %v1965 = vadd.f32 0.0, %v1964
      %v1966 = vpop.f32.mrf.mxu0
      %1967 = vdwg.mxu0
      %v1968 = vmul.f32 %v1965, 0.35355338
      %v1969 = vadd.f32 %v1968, %v473
      %v1970 = vsel %vm672, %v1969, -inf
      %1971 = vmax.xlane.f32.xlu0 %v1970
      %v1972 = vpop.xlane.xlu0 %1971
      %v1973 = vsub.f32 %v1969, %v1972
      %v1974 = vmul.f32 %v1973, 1.442695
      %v1975 = vpow.pop %v1974
      %v1976 = vsel %vm672, %v1975, 0.0
      %1977 = vadd.xlane.f32.xlu0 %v1976
      %v1978 = vpop.xlane.xlu0 %1977
      %v1979 = vrcp.pop %v1978
      %v1980 = vmul.f32 %v1975, %v1979
      %v1982 = vsel %vm672, %v1980, 0
      %1984 = vmatprep.subr.mxu0 0.0
      %1985 = vmatpush1.msra.mxu0 0.0
      %1986 = vmatprep.subr.mxu0 0.0
      %1987 = vmatpush1.msra.mxu0 0.0
      %1988 = vmatprep.subr.mxu0 0.0
      %1989 = vmatpush1.msra.mxu0 0.0
      %1990 = vmatprep.subr.mxu0 0.0
      %1991 = vmatpush1.msra.mxu0 0.0
      %1992 = vmatprep.subr.mxu0 0.0
      %1993 = vmatpush1.msra.mxu0 0.0
      %1994 = vmatprep.subr.mxu0 0.0
      %1995 = vmatpush1.msra.mxu0 0.0
      %1996 = vmatprep.subr.mxu0 0.0
      %1997 = vmatpush1.msra.mxu0 0.0
      %1998 = vmatprep.subr.mxu0 0.0
      %1999 = vmatpush1.msra.mxu0 0.0
      %2000 = vmatprep.subr.mxu0 0.0
      %2001 = vmatpush1.msra.mxu0 0.0
      %2002 = vmatprep.subr.mxu0 0.0
      %2003 = vmatpush1.msra.mxu0 0.0
      %2004 = vmatprep.subr.mxu0 0.0
      %2005 = vmatpush1.msra.mxu0 0.0
      %2006 = vmatprep.subr.mxu0 0.0
      %2007 = vmatpush1.msra.mxu0 0.0
      %2008 = vmatprep.subr.mxu0 0.0
      %2009 = vmatpush1.msra.mxu0 0.0
      %2010 = vmatprep.subr.mxu0 0.0
      %2011 = vmatpush1.msra.mxu0 0.0
      %2012 = vmatprep.subr.mxu0 0.0
      %2013 = vmatpush1.msra.mxu0 0.0
      %2014 = vmatprep.subr.mxu0 0.0
      %2015 = vmatpush1.msra.mxu0 %v1887
      %2016 = vmatprep.subr.mxu0 0.0
      %2017 = vmatpush2.msra.mxu0 0.0
      %2018 = vmatprep.subr.mxu0 0.0
      %2019 = vmatpush2.msra.mxu0 0.0
      %2020 = vmatprep.subr.mxu0 0.0
      %2021 = vmatpush2.msra.mxu0 0.0
      %2022 = vmatprep.subr.mxu0 0.0
      %2023 = vmatpush2.msra.mxu0 0.0
      %2024 = vmatprep.subr.mxu0 0.0
      %2025 = vmatpush2.msra.mxu0 0.0
      %2026 = vmatprep.subr.mxu0 0.0
      %2027 = vmatpush2.msra.mxu0 0.0
      %2028 = vmatprep.subr.mxu0 0.0
      %2029 = vmatpush2.msra.mxu0 0.0
      %2030 = vmatprep.subr.mxu0 0.0
      %2031 = vmatpush2.msra.mxu0 0.0
      %2032 = vmatprep.subr.mxu0 0.0
      %2033 = vmatpush2.msra.mxu0 0.0
      %2034 = vmatprep.subr.mxu0 0.0
      %2035 = vmatpush2.msra.mxu0 0.0
      %2036 = vmatprep.subr.mxu0 0.0
      %2037 = vmatpush2.msra.mxu0 0.0
      %2038 = vmatprep.subr.mxu0 0.0
      %2039 = vmatpush2.msra.mxu0 0.0
      %2040 = vmatprep.subr.mxu0 0.0
      %2041 = vmatpush2.msra.mxu0 0.0
      %2042 = vmatprep.subr.mxu0 0.0
      %2043 = vmatpush2.msra.mxu0 0.0
      %2044 = vmatprep.subr.mxu0 0.0
      %2045 = vmatpush2.msra.mxu0 0.0
      %2046 = vmatprep.subr.mxu0 0.0
      %2047 = vmatpush2.msra.mxu0 0.0
      %2048 = vmatprep.mubr.f32.mxu0 0.0
      %2049 = vmatmul.mubr.f32.gmra.mxu0 %v1982
      %v2050 = vpop.f32.mrf.mxu0
      %v2051 = vadd.f32 0.0, %v2050
      %v2052 = vpop.f32.mrf.mxu0
      %2053 = vdwg.mxu0
      %v2054 = vpack.c.bf16 %v2051, %v2051
      %s2055 = scalar_lea.vmem %s9, 12
      %v2056 = vld [vmem:[%s2055] sm:$0xf]
      %v2058 = vsel %vm672, %v2054, 0
      %v2061 = vsel %vm1200, %v2056, 0
      %2063 = vmatprep.subr.bf16.mxu0 0
      %2064 = vmatpush1.bf16.msra.mxu0 0
      %2065 = vmatprep.subr.bf16.mxu0 0
      %2066 = vmatpush1.bf16.msra.mxu0 0
      %2067 = vmatprep.subr.bf16.mxu0 0
      %2068 = vmatpush1.bf16.msra.mxu0 0
      %2069 = vmatprep.subr.bf16.mxu0 0
      %2070 = vmatpush1.bf16.msra.mxu0 0
      %2071 = vmatprep.subr.bf16.mxu0 0
      %2072 = vmatpush1.bf16.msra.mxu0 0
      %2073 = vmatprep.subr.bf16.mxu0 0
      %2074 = vmatpush1.bf16.msra.mxu0 0
      %2075 = vmatprep.subr.bf16.mxu0 0
      %2076 = vmatpush1.bf16.msra.mxu0 0
      %2077 = vmatprep.subr.bf16.mxu0 0
      %2078 = vmatpush1.bf16.msra.mxu0 %v2061
      %2079 = vmatprep.subr.bf16.mxu0 0
      %2080 = vmatpush2.bf16.msra.mxu0 0
      %2081 = vmatprep.subr.bf16.mxu0 0
      %2082 = vmatpush2.bf16.msra.mxu0 0
      %2083 = vmatprep.subr.bf16.mxu0 0
      %2084 = vmatpush2.bf16.msra.mxu0 0
      %2085 = vmatprep.subr.bf16.mxu0 0
      %2086 = vmatpush2.bf16.msra.mxu0 0
      %2087 = vmatprep.subr.bf16.mxu0 0
      %2088 = vmatpush2.bf16.msra.mxu0 0
      %2089 = vmatprep.subr.bf16.mxu0 0
      %2090 = vmatpush2.bf16.msra.mxu0 0
      %2091 = vmatprep.subr.bf16.mxu0 0
      %2092 = vmatpush2.bf16.msra.mxu0 0
      %2093 = vmatprep.subr.bf16.mxu0 0
      %2094 = vmatpush2.bf16.msra.mxu0 0
      %2095 = vmatprep.mubr.bf16.mxu0 0
      %2096 = vmatmul.mubr.bf16.gmra.mxu0 %v2058
      %v2097 = vpop.f32.mrf.mxu0
      %v2098 = vadd.f32 0.0, %v2097
      %v2099 = vpop.f32.mrf.mxu0
      %v2100 = vpop.f32.mrf.mxu0
      %v2101 = vpop.f32.mrf.mxu0
      %2102 = vdwg.mxu0
      %v2103 = vadd.f32 %v1696, %v2098
      %v2104 = vld [vmem:[%s10] sm:$0x1]
      %v2106 = vlaneseq
      %v2107 = vshrl.u32 %v2106, 7
      %v2108 = vsub.s32 0, %v2107
      %v2109 = vrot.slane %v2104, %v2108
      %v2111 = vadd.f32 %v2103, %v2109
      %v2112 = vadd.f32 %v471, %v2111
      %v2113 = vld [vmem:[%s11] sm:$0x1]
      %v2114 = vld [vmem:[%s12] sm:$0x1]
      %v2115 = vsel %vm499, %v2112, 0.0
      %2116 = vadd.xlane.f32.xlu0 %v2115
      %v2117 = vpop.xlane.xlu0 %2116
      %v2118 = vrcp.pop 32.0
      %v2119 = vmul.f32 %v2117, %v2118
      %v2120 = vsub.f32 %v2112, %v2119
      %v2121 = vmul.f32 %v2120, %v2120
      %v2122 = vsel %vm499, %v2121, 0.0
      %2123 = vadd.xlane.f32.xlu0 %v2122
      %v2124 = vpop.xlane.xlu0 %2123
      %v2125 = vmul.f32 %v2124, %v2118
      %v2126 = vadd.f32 %v2125, 1e-05
      %v2127 = vrsqrt.pop %v2126
      %v2128 = vmul.f32 %v2120, %v2127
      %v2130 = vlaneseq
      %v2131 = vshrl.u32 %v2130, 7
      %v2132 = vsub.s32 0, %v2131
      %v2133 = vrot.slane %v2113, %v2132
      %v2135 = vmul.f32 %v2128, %v2133
      %v2137 = vlaneseq
      %v2138 = vshrl.u32 %v2137, 7
      %v2139 = vsub.s32 0, %v2138
      %v2140 = vrot.slane %v2114, %v2139
      %v2142 = vadd.f32 %v2135, %v2140
      %2143 = vst.msk [vmem:[%s469] sm:$0xff] %vm499, %v2142
      %p2144 = scmp.lt.s32.totalorder %s24, 1
      %s2145 = scalar_select %p2144, %s24, 1
      %s2146 = smul.addr %s2145, 8
      %s2147 = scalar_lea.vmem %s13, %s2146
      // Predicated region
      $region73: #{forward.13} parent=71 // pred_check
        %p2148 = pneg %p330
      $region74: #{forward.13} parent=71 // pred_check_branch
        %2150 = sbr.rel (%p2148) target = $region76
      $region75: #{forward.13} parent=71 // pred_region
        _
      $region76: #{forward.13} parent=71 // pred_fallthru
        _
    $region72: #{forward.13} parent=5 // pred_fallthru
      _
    %p2151 = scmp.le.s32.totalorder 2, %s19
    // Predicated region
    $region77: #{forward.13} parent=5 // pred_check
      %p2152 = pneg %p2151
    $region78: #{forward.13} parent=5 // pred_check_branch
      %2154 = sbr.rel (%p2152) target = $region80
    $region79: #{forward.13} parent=5 // pred_region
      %s2155 = ssub.s32 %s19, 2
      // Predicated region
      $region81: #{forward.13} parent=79 // pred_check
        %p2156 = pneg %p336
      $region82: #{forward.13} parent=79 // pred_check_branch
        %2158 = sbr.rel (%p2156) target = $region84
      $region83: #{forward.13} parent=79 // pred_region
        %p2159 = scmp.lt.s32.totalorder %s25, 1
        %s2160 = scalar_select %p2159, %s25, 1
        %s2161 = smul.addr %s2160, 8
        %s2162 = scalar_lea.vmem %s13, %s2161
      $region84: #{forward.13} parent=79 // pred_fallthru
        _
    $region80: #{forward.13} parent=5 // pred_fallthru
      _
  $region6: #{forward.13} parent=0 // loop_footer
    %s23 = sadd.s32 1, %s19
  $region7: #{forward.13} parent=0 // loop_footer_branch
    %18 = sbr.rel target = $region3
  $region8: #{forward.13} parent=0 // loop_exit
    _

</llo_original>
